<compile_context>
chip_gen: v7x
topology: tpu7x:2x2x1
jax: 0.10.0
libtpu: 0.0.40
codegen_flags: <defaults>
</compile_context>

<pallas_src>
import functools

import jax
import jax.numpy as jnp
from jax.experimental import pallas as pl
from jax.experimental.pallas import tpu as pltpu

# Small, TPU-tile-friendly problem sizes.
DEPTH = 2
SRC_LEN = 4
TRG_LEN = 4
BATCH = 8        # one (8,128) vreg per [BATCH, HIDDEN] value
HIDDEN = 128     # == lane width

# MXU operand dtype (accumulation is always f32; elementwise math stays f32).
MATMUL_DTYPE = jnp.bfloat16


def _diagonals(src_len, trg_len):
    """Anti-diagonal decomposition: cells with equal i+j, i ascending."""
    diags = []
    for t in range(src_len + trg_len - 1):
        a = max(0, t - (trg_len - 1))
        b = min(src_len - 1, t)
        diags.append([(i, t - i) for i in range(a, b + 1)])
    return diags


def _grid_rnn_kernel(src_ref, trg_ref, w_ref, u_ref, b_ref, out_ref, proj_ref, *,
                     depth, src_len, trg_len, batch, hidden, matmul_dtype):
    """Whole stacked 2-D grid recurrence in one kernel invocation.

    The recurrence along i, j and depth is inherently sequential, so it is unrolled
    statically.  Per layer: one slab projection matmul (bias folded in) written to a
    VMEM scratch, then a S+T-1 step wavefront where each step is one split state
    matmul + one add + one tanh on the critical path, with results streamed straight
    to out_ref.
    """
    f32 = jnp.float32
    B, H, S, T = batch, hidden, src_len, trg_len

    def mxu(a, w):
        # Cast activations at the MXU boundary only; accumulate in f32.
        return jnp.dot(a.astype(matmul_dtype), w, preferred_element_type=f32)

    zeros = jnp.zeros((B, H), f32)
    diags = _diagonals(S, T)
    n_cells = S * T

    # Row offset (in cells) of each diagonal inside the anti-diagonal-major slab.
    diag_off = []
    off = 0
    for cells in diags:
        diag_off.append(off)
        off += len(cells)

    for d in range(depth):
        # Weights arrive already in the MXU dtype (cast once at the wrapper).
        W = w_ref[d]                      # [H, H]
        U_full = u_ref[d]                 # [2H, H]
        U_top = U_full[:H]                # state_x weights
        U_bot = U_full[H:]                # state_y weights
        b = b_ref[d]                      # [1, H] f32

        # ------------------------------------------------------------------
        # Hoisted, bias-folded input projections -> VMEM scratch slab.
        # ------------------------------------------------------------------
        if d == 0:
            # Depth 0: x_t depends only on i, y_t only on j -> S+T rows.
            inp = jnp.concatenate([src_ref[i] for i in range(S)]
                                  + [trg_ref[j] for j in range(T)], axis=0)
            proj_ref[:(S + T) * B, :] = mxu(inp, W) + b
        else:
            # Depth > 0: reload layer d-1 activations from out_ref (off the critical
            # path), anti-diagonal-major so per-diagonal slices are contiguous.
            x_rows = [out_ref[d - 1, i, j, 0] for cells in diags for (i, j) in cells]
            y_rows = [out_ref[d - 1, i, j, 1] for cells in diags for (i, j) in cells]
            inp = jnp.concatenate(x_rows + y_rows, axis=0)       # [2*S*T*B, H]
            proj_ref[...] = mxu(inp, W) + b

        # ------------------------------------------------------------------
        # Wavefront recurrence: one split state matmul + add + tanh per diagonal.
        # Only the previous diagonal's hx block stays live.
        # ------------------------------------------------------------------
        hx_prev = None   # [n_prev*B, H], i ascending
        a_prev = 0
        for t, cells in enumerate(diags):
            a_t = cells[0][0]
            b_t = cells[-1][0]
            n = len(cells)

            # Bias-folded input projections for this diagonal (contiguous slices).
            if d == 0:
                xw = proj_ref[a_t * B:(b_t + 1) * B, :]
                yw = jnp.concatenate(
                    [proj_ref[(S + j) * B:(S + j + 1) * B, :] for (_, j) in cells],
                    axis=0)
            else:
                o = diag_off[t]
                xw = proj_ref[o * B:(o + n) * B, :]
                yw = proj_ref[(n_cells + o) * B:(n_cells + o + n) * B, :]

            if t == 0:
                # Both neighbour states are zero -> state matmul contributes nothing.
                px, py = xw, yw
            else:
                # NB: per the torch code, BOTH neighbour states read slot 0 (hx).
                # sx: neighbour (i-1, j); zeros only for the i==0 cell (front).
                x_lo = max(a_t, 1) - 1
                x_hi = b_t - 1
                pieces = []
                if a_t == 0:
                    pieces.append(zeros)
                if x_hi >= x_lo:
                    pieces.append(hx_prev[(x_lo - a_prev) * B:(x_hi - a_prev + 1) * B])
                sx = pieces[0] if len(pieces) == 1 else jnp.concatenate(pieces, axis=0)

                # sy: neighbour (i, j-1); zeros only for the j==0 cell (back).
                y_lo = a_t
                y_hi = min(b_t, t - 1)
                pieces = []
                if y_hi >= y_lo:
                    pieces.append(hx_prev[(y_lo - a_prev) * B:(y_hi - a_prev + 1) * B])
                if b_t == t:
                    pieces.append(zeros)
                sy = pieces[0] if len(pieces) == 1 else jnp.concatenate(pieces, axis=0)

                # Split-U state matmul (no 2H lane concat); bias already in xw/yw.
                # TODO(synk): drive U weight-stationary via pltpu.matmul_push_rhs on
                # v6e/v7x if the bundle dump shows a per-diagonal RHS re-push.
                su = mxu(sx, U_top) + mxu(sy, U_bot)
                px = xw + su
                py = yw + su

            hx = jnp.tanh(px)   # feeds the next diagonal (critical path)
            hy = jnp.tanh(py)   # off the critical path

            # Stream results out: one full-vreg store per (cell, slot).
            for k, (i, j) in enumerate(cells):
                out_ref[d, i, j, 0] = hx[k * B:(k + 1) * B]
                out_ref[d, i, j, 1] = hy[k * B:(k + 1) * B]

            hx_prev = hx
            a_prev = a_t


def stacked_grid_model(src, trg, W, U, b, matmul_dtype=MATMUL_DTYPE):
    depth, hidden, _ = W.shape
    src_len, batch, _ = src.shape
    trg_len = trg.shape[0]

    # Cast weights to the MXU operand dtype once at the call boundary
    # (halves weight bytes, removes all in-kernel weight casts).
    Wq = W.astype(matmul_dtype)
    Uq = U.astype(matmul_dtype)

    kernel = functools.partial(
        _grid_rnn_kernel,
        depth=depth, src_len=src_len, trg_len=trg_len,
        batch=batch, hidden=hidden, matmul_dtype=matmul_dtype)

    out_shape = jax.ShapeDtypeStruct(
        (depth, src_len, trg_len, 2, batch, hidden), jnp.float32)

    vmem_spec = pl.BlockSpec(memory_space=pltpu.MemorySpace.VMEM)

    return pl.pallas_call(
        kernel,
        out_shape=out_shape,
        in_specs=[vmem_spec] * 5,
        out_specs=vmem_spec,
        scratch_shapes=[
            # Projection slab: deliberate VMEM residence instead of compiler spills.
            pltpu.VMEM((2 * src_len * trg_len * batch, hidden), jnp.float32),
        ],
        compiler_params=pltpu.CompilerParams(vmem_limit_bytes=32 * 1024 * 1024),
    )(src, trg, Wq, Uq, b)


def stacked_grid_model_ref(src, trg, W, U, b, matmul_dtype=jnp.float32):
    """Pure-JAX reference mirroring the torch loop, with a configurable MXU
    operand dtype (f32 => faithful to the torch float32 module)."""
    depth, hidden, _ = W.shape
    src_len, batch, _ = src.shape
    trg_len = trg.shape[0]

    def mm(a, w):
        return jnp.dot(a.astype(matmul_dtype), w.astype(matmul_dtype),
                       preferred_element_type=jnp.float32,
                       precision=jax.lax.Precision.HIGHEST)

    h_out = jnp.zeros((depth, src_len, trg_len, 2, batch, hidden), jnp.float32)
    zeros = jnp.zeros((batch, hidden), jnp.float32)
    for d in range(depth):
        Wd, Ud, bd = W[d], U[d], b[d]
        for i in range(src_len):
            for j in range(trg_len):
                x_t = src[i] if d == 0 else h_out[d - 1, i, j, 0]
                y_t = trg[j] if d == 0 else h_out[d - 1, i, j, 1]
                sx = zeros if i == 0 else h_out[d, i - 1, j, 0]
                sy = zeros if j == 0 else h_out[d, i, j - 1, 0]
                su = mm(jnp.concatenate([sx, sy], axis=1), Ud) + bd
                h_x = jnp.tanh(mm(x_t, Wd) + su)
                h_y = jnp.tanh(mm(y_t, Wd) + su)
                h_out = h_out.at[d, i, j, 0].set(h_x)
                h_out = h_out.at[d, i, j, 1].set(h_y)
    return h_out


def make_params(key, depth, hidden):
    """Deterministic xavier-normal-style init (matches torch shapes)."""
    kW, kU = jax.random.split(key)
    std_w = (2.0 / (hidden + hidden)) ** 0.5
    std_u = (2.0 / (2 * hidden + hidden)) ** 0.5
    W = std_w * jax.random.normal(kW, (depth, hidden, hidden), jnp.float32)
    U = std_u * jax.random.normal(kU, (depth, 2 * hidden, hidden), jnp.float32)
    b = jnp.zeros((depth, 1, hidden), jnp.float32)
    return W, U, b


if __name__ == "__main__":
    key = jax.random.PRNGKey(0)
    k_src, k_trg, k_par = jax.random.split(key, 3)

    src = jax.random.normal(k_src, (SRC_LEN, BATCH, HIDDEN), jnp.float32)
    trg = jax.random.normal(k_trg, (TRG_LEN, BATCH, HIDDEN), jnp.float32)
    W, U, b = make_params(k_par, DEPTH, HIDDEN)

    out = jax.block_until_ready(stacked_grid_model(src, trg, W, U, b))
    assert out.shape == (DEPTH, SRC_LEN, TRG_LEN, 2, BATCH, HIDDEN)

    # (a) Tight structural check: reference computed with the SAME MXU operand
    #     precision (bf16 operands, f32 accumulation) as the kernel.
    ref_same = stacked_grid_model_ref(src, trg, W, U, b, matmul_dtype=MATMUL_DTYPE)
    assert jnp.allclose(out, ref_same, rtol=5e-3, atol=5e-3), \
        "kernel mismatch vs same-precision reference"

    # (b) Semantics check vs the faithful float32 (torch-equivalent) reference.
    #     The only difference is bf16 rounding of MXU operands; for these
    #     tanh-bounded outputs that is well below the 1e-1 bound.
    ref_f32 = stacked_grid_model_ref(src, trg, W, U, b, matmul_dtype=jnp.float32)
    assert jnp.allclose(out, ref_f32, rtol=0.0, atol=1e-1), \
        "kernel deviates from float32 reference"

    print("KERNEL_OK")
</pallas_src>

<mosaic_0001>
module attributes {stable_mosaic.version = 11 : i64} {
  func.func @_grid_rnn_kernel(%arg0: memref<4x8x128xf32, #tpu.memory_space<vmem>>, %arg1: memref<4x8x128xf32, #tpu.memory_space<vmem>>, %arg2: memref<2x128x128xbf16, #tpu.memory_space<vmem>>, %arg3: memref<2x256x128xbf16, #tpu.memory_space<vmem>>, %arg4: memref<2x1x128xf32, #tpu.memory_space<vmem>>, %arg5: memref<2x4x4x2x8x128xf32, #tpu.memory_space<vmem>>, %arg6: memref<256x128xf32, #tpu.memory_space<vmem>>) attributes {dimension_semantics = [], scalar_prefetch = 0 : i64, scratch_operands = 1 : i64, tpu.core_type = #tpu.core_type<tc>} {
    %cst = arith.constant 0.000000e+00 : f32
    %0 = vector.broadcast %cst : f32 to vector<8x128xf32>
    %c0 = arith.constant 0 : index
    %c0_0 = arith.constant 0 : index
    %c0_1 = arith.constant 0 : index
    %1 = vector.load %arg2[%c0, %c0_0, %c0_1] : memref<2x128x128xbf16, #tpu.memory_space<vmem>>, vector<1x128x128xbf16>
    %2 = vector.shape_cast %1 : vector<1x128x128xbf16> to vector<128x128xbf16>
    %c0_2 = arith.constant 0 : index
    %c0_3 = arith.constant 0 : index
    %c0_4 = arith.constant 0 : index
    %3 = vector.load %arg3[%c0_2, %c0_3, %c0_4] : memref<2x256x128xbf16, #tpu.memory_space<vmem>>, vector<1x256x128xbf16>
    %4 = vector.shape_cast %3 : vector<1x256x128xbf16> to vector<256x128xbf16>
    %5 = vector.extract_strided_slice %4 {offsets = [0, 0], sizes = [128, 128], strides = [1, 1]} : vector<256x128xbf16> to vector<128x128xbf16>
    %6 = vector.extract_strided_slice %4 {offsets = [128, 0], sizes = [128, 128], strides = [1, 1]} : vector<256x128xbf16> to vector<128x128xbf16>
    %c0_5 = arith.constant 0 : index
    %c0_6 = arith.constant 0 : index
    %c0_7 = arith.constant 0 : index
    %7 = vector.load %arg4[%c0_5, %c0_6, %c0_7] : memref<2x1x128xf32, #tpu.memory_space<vmem>>, vector<1x1x128xf32>
    %8 = vector.shape_cast %7 : vector<1x1x128xf32> to vector<1x128xf32>
    %c0_8 = arith.constant 0 : index
    %c0_9 = arith.constant 0 : index
    %c0_10 = arith.constant 0 : index
    %9 = vector.load %arg0[%c0_8, %c0_9, %c0_10] : memref<4x8x128xf32, #tpu.memory_space<vmem>>, vector<1x8x128xf32>
    %10 = vector.shape_cast %9 : vector<1x8x128xf32> to vector<8x128xf32>
    %c1 = arith.constant 1 : index
    %c0_11 = arith.constant 0 : index
    %c0_12 = arith.constant 0 : index
    %11 = vector.load %arg0[%c1, %c0_11, %c0_12] : memref<4x8x128xf32, #tpu.memory_space<vmem>>, vector<1x8x128xf32>
    %12 = vector.shape_cast %11 : vector<1x8x128xf32> to vector<8x128xf32>
    %c2 = arith.constant 2 : index
    %c0_13 = arith.constant 0 : index
    %c0_14 = arith.constant 0 : index
    %13 = vector.load %arg0[%c2, %c0_13, %c0_14] : memref<4x8x128xf32, #tpu.memory_space<vmem>>, vector<1x8x128xf32>
    %14 = vector.shape_cast %13 : vector<1x8x128xf32> to vector<8x128xf32>
    %c3 = arith.constant 3 : index
    %c0_15 = arith.constant 0 : index
    %c0_16 = arith.constant 0 : index
    %15 = vector.load %arg0[%c3, %c0_15, %c0_16] : memref<4x8x128xf32, #tpu.memory_space<vmem>>, vector<1x8x128xf32>
    %16 = vector.shape_cast %15 : vector<1x8x128xf32> to vector<8x128xf32>
    %c0_17 = arith.constant 0 : index
    %c0_18 = arith.constant 0 : index
    %c0_19 = arith.constant 0 : index
    %17 = vector.load %arg1[%c0_17, %c0_18, %c0_19] : memref<4x8x128xf32, #tpu.memory_space<vmem>>, vector<1x8x128xf32>
    %18 = vector.shape_cast %17 : vector<1x8x128xf32> to vector<8x128xf32>
    %c1_20 = arith.constant 1 : index
    %c0_21 = arith.constant 0 : index
    %c0_22 = arith.constant 0 : index
    %19 = vector.load %arg1[%c1_20, %c0_21, %c0_22] : memref<4x8x128xf32, #tpu.memory_space<vmem>>, vector<1x8x128xf32>
    %20 = vector.shape_cast %19 : vector<1x8x128xf32> to vector<8x128xf32>
    %c2_23 = arith.constant 2 : index
    %c0_24 = arith.constant 0 : index
    %c0_25 = arith.constant 0 : index
    %21 = vector.load %arg1[%c2_23, %c0_24, %c0_25] : memref<4x8x128xf32, #tpu.memory_space<vmem>>, vector<1x8x128xf32>
    %22 = vector.shape_cast %21 : vector<1x8x128xf32> to vector<8x128xf32>
    %c3_26 = arith.constant 3 : index
    %c0_27 = arith.constant 0 : index
    %c0_28 = arith.constant 0 : index
    %23 = vector.load %arg1[%c3_26, %c0_27, %c0_28] : memref<4x8x128xf32, #tpu.memory_space<vmem>>, vector<1x8x128xf32>
    %24 = vector.shape_cast %23 : vector<1x8x128xf32> to vector<8x128xf32>
    %25 = tpu.concatenate %10, %12, %14, %16, %18, %20, %22, %24 in 0 : vector<8x128xf32>, vector<8x128xf32>, vector<8x128xf32>, vector<8x128xf32>, vector<8x128xf32>, vector<8x128xf32>, vector<8x128xf32>, vector<8x128xf32> -> vector<64x128xf32>
    %26 = arith.truncf %25 : vector<64x128xf32> to vector<64x128xbf16>
    %cst_29 = arith.constant dense<0.000000e+00> : vector<64x128xf32>
    %27 = tpu.matmul %26, %2, %cst_29 {dimension_numbers = #tpu.dot_dimension_numbers<[1], [0], [0], [1], [0, 0, 1, 1], [], []>} : vector<64x128xbf16>, vector<128x128xbf16>, vector<64x128xf32> -> vector<64x128xf32>
    %28 = vector.broadcast %8 : vector<1x128xf32> to vector<64x128xf32>
    %29 = arith.addf %27, %28 : vector<64x128xf32>
    %c0_30 = arith.constant 0 : index
    %c0_31 = arith.constant 0 : index
    %30 = vector.load %arg6[%c0_30, %c0_31] : memref<256x128xf32, #tpu.memory_space<vmem>>, vector<64x128xf32>
    tpu.vector_store %arg6[%c0_30, %c0_31], %29 {strides = array<i32>} : memref<256x128xf32, #tpu.memory_space<vmem>>, vector<64x128xf32>,
    %c0_32 = arith.constant 0 : index
    %c0_33 = arith.constant 0 : index
    %31 = vector.load %arg6[%c0_32, %c0_33] : memref<256x128xf32, #tpu.memory_space<vmem>>, vector<8x128xf32>
    %c32 = arith.constant 32 : index
    %c0_34 = arith.constant 0 : index
    %32 = vector.load %arg6[%c32, %c0_34] : memref<256x128xf32, #tpu.memory_space<vmem>>, vector<8x128xf32>
    %33 = math.tanh %31 : vector<8x128xf32>
    %34 = math.tanh %32 : vector<8x128xf32>
    %c0_35 = arith.constant 0 : index
    %c0_36 = arith.constant 0 : index
    %c0_37 = arith.constant 0 : index
    %c0_38 = arith.constant 0 : index
    %c0_39 = arith.constant 0 : index
    %c0_40 = arith.constant 0 : index
    %35 = vector.load %arg5[%c0_35, %c0_36, %c0_37, %c0_38, %c0_39, %c0_40] : memref<2x4x4x2x8x128xf32, #tpu.memory_space<vmem>>, vector<1x1x1x1x8x128xf32>
    %36 = vector.shape_cast %35 : vector<1x1x1x1x8x128xf32> to vector<8x128xf32>
    %37 = vector.shape_cast %33 : vector<8x128xf32> to vector<1x1x1x1x8x128xf32>
    tpu.vector_store %arg5[%c0_35, %c0_36, %c0_37, %c0_38, %c0_39, %c0_40], %37 {strides = array<i32>} : memref<2x4x4x2x8x128xf32, #tpu.memory_space<vmem>>, vector<1x1x1x1x8x128xf32>,
    %c0_41 = arith.constant 0 : index
    %c0_42 = arith.constant 0 : index
    %c0_43 = arith.constant 0 : index
    %c1_44 = arith.constant 1 : index
    %c0_45 = arith.constant 0 : index
    %c0_46 = arith.constant 0 : index
    %38 = vector.load %arg5[%c0_41, %c0_42, %c0_43, %c1_44, %c0_45, %c0_46] : memref<2x4x4x2x8x128xf32, #tpu.memory_space<vmem>>, vector<1x1x1x1x8x128xf32>
    %39 = vector.shape_cast %38 : vector<1x1x1x1x8x128xf32> to vector<8x128xf32>
    %40 = vector.shape_cast %34 : vector<8x128xf32> to vector<1x1x1x1x8x128xf32>
    tpu.vector_store %arg5[%c0_41, %c0_42, %c0_43, %c1_44, %c0_45, %c0_46], %40 {strides = array<i32>} : memref<2x4x4x2x8x128xf32, #tpu.memory_space<vmem>>, vector<1x1x1x1x8x128xf32>,
    %c0_47 = arith.constant 0 : index
    %c0_48 = arith.constant 0 : index
    %41 = vector.load %arg6[%c0_47, %c0_48] : memref<256x128xf32, #tpu.memory_space<vmem>>, vector<16x128xf32>
    %c40 = arith.constant 40 : index
    %c0_49 = arith.constant 0 : index
    %42 = vector.load %arg6[%c40, %c0_49] : memref<256x128xf32, #tpu.memory_space<vmem>>, vector<8x128xf32>
    %c32_50 = arith.constant 32 : index
    %c0_51 = arith.constant 0 : index
    %43 = vector.load %arg6[%c32_50, %c0_51] : memref<256x128xf32, #tpu.memory_space<vmem>>, vector<8x128xf32>
    %44 = tpu.concatenate %42, %43 in 0 : vector<8x128xf32>, vector<8x128xf32> -> vector<16x128xf32>
    %45 = tpu.concatenate %0, %33 in 0 : vector<8x128xf32>, vector<8x128xf32> -> vector<16x128xf32>
    %46 = tpu.concatenate %33, %0 in 0 : vector<8x128xf32>, vector<8x128xf32> -> vector<16x128xf32>
    %47 = arith.truncf %45 : vector<16x128xf32> to vector<16x128xbf16>
    %cst_52 = arith.constant dense<0.000000e+00> : vector<16x128xf32>
    %48 = tpu.matmul %47, %5, %cst_52 {dimension_numbers = #tpu.dot_dimension_numbers<[1], [0], [0], [1], [0, 0, 1, 1], [], []>} : vector<16x128xbf16>, vector<128x128xbf16>, vector<16x128xf32> -> vector<16x128xf32>
    %49 = arith.truncf %46 : vector<16x128xf32> to vector<16x128xbf16>
    %cst_53 = arith.constant dense<0.000000e+00> : vector<16x128xf32>
    %50 = tpu.matmul %49, %6, %cst_53 {dimension_numbers = #tpu.dot_dimension_numbers<[1], [0], [0], [1], [0, 0, 1, 1], [], []>} : vector<16x128xbf16>, vector<128x128xbf16>, vector<16x128xf32> -> vector<16x128xf32>
    %51 = arith.addf %48, %50 : vector<16x128xf32>
    %52 = arith.addf %41, %51 : vector<16x128xf32>
    %53 = arith.addf %44, %51 : vector<16x128xf32>
    %54 = math.tanh %52 : vector<16x128xf32>
    %55 = math.tanh %53 : vector<16x128xf32>
    %56 = vector.extract_strided_slice %54 {offsets = [0, 0], sizes = [8, 128], strides = [1, 1]} : vector<16x128xf32> to vector<8x128xf32>
    %c0_54 = arith.constant 0 : index
    %c0_55 = arith.constant 0 : index
    %c1_56 = arith.constant 1 : index
    %c0_57 = arith.constant 0 : index
    %c0_58 = arith.constant 0 : index
    %c0_59 = arith.constant 0 : index
    %57 = vector.load %arg5[%c0_54, %c0_55, %c1_56, %c0_57, %c0_58, %c0_59] : memref<2x4x4x2x8x128xf32, #tpu.memory_space<vmem>>, vector<1x1x1x1x8x128xf32>
    %58 = vector.shape_cast %57 : vector<1x1x1x1x8x128xf32> to vector<8x128xf32>
    %59 = vector.shape_cast %56 : vector<8x128xf32> to vector<1x1x1x1x8x128xf32>
    tpu.vector_store %arg5[%c0_54, %c0_55, %c1_56, %c0_57, %c0_58, %c0_59], %59 {strides = array<i32>} : memref<2x4x4x2x8x128xf32, #tpu.memory_space<vmem>>, vector<1x1x1x1x8x128xf32>,
    %60 = vector.extract_strided_slice %55 {offsets = [0, 0], sizes = [8, 128], strides = [1, 1]} : vector<16x128xf32> to vector<8x128xf32>
    %c0_60 = arith.constant 0 : index
    %c0_61 = arith.constant 0 : index
    %c1_62 = arith.constant 1 : index
    %c1_63 = arith.constant 1 : index
    %c0_64 = arith.constant 0 : index
    %c0_65 = arith.constant 0 : index
    %61 = vector.load %arg5[%c0_60, %c0_61, %c1_62, %c1_63, %c0_64, %c0_65] : memref<2x4x4x2x8x128xf32, #tpu.memory_space<vmem>>, vector<1x1x1x1x8x128xf32>
    %62 = vector.shape_cast %61 : vector<1x1x1x1x8x128xf32> to vector<8x128xf32>
    %63 = vector.shape_cast %60 : vector<8x128xf32> to vector<1x1x1x1x8x128xf32>
    tpu.vector_store %arg5[%c0_60, %c0_61, %c1_62, %c1_63, %c0_64, %c0_65], %63 {strides = array<i32>} : memref<2x4x4x2x8x128xf32, #tpu.memory_space<vmem>>, vector<1x1x1x1x8x128xf32>,
    %64 = vector.extract_strided_slice %54 {offsets = [8, 0], sizes = [8, 128], strides = [1, 1]} : vector<16x128xf32> to vector<8x128xf32>
    %c0_66 = arith.constant 0 : index
    %c1_67 = arith.constant 1 : index
    %c0_68 = arith.constant 0 : index
    %c0_69 = arith.constant 0 : index
    %c0_70 = arith.constant 0 : index
    %c0_71 = arith.constant 0 : index
    %65 = vector.load %arg5[%c0_66, %c1_67, %c0_68, %c0_69, %c0_70, %c0_71] : memref<2x4x4x2x8x128xf32, #tpu.memory_space<vmem>>, vector<1x1x1x1x8x128xf32>
    %66 = vector.shape_cast %65 : vector<1x1x1x1x8x128xf32> to vector<8x128xf32>
    %67 = vector.shape_cast %64 : vector<8x128xf32> to vector<1x1x1x1x8x128xf32>
    tpu.vector_store %arg5[%c0_66, %c1_67, %c0_68, %c0_69, %c0_70, %c0_71], %67 {strides = array<i32>} : memref<2x4x4x2x8x128xf32, #tpu.memory_space<vmem>>, vector<1x1x1x1x8x128xf32>,
    %68 = vector.extract_strided_slice %55 {offsets = [8, 0], sizes = [8, 128], strides = [1, 1]} : vector<16x128xf32> to vector<8x128xf32>
    %c0_72 = arith.constant 0 : index
    %c1_73 = arith.constant 1 : index
    %c0_74 = arith.constant 0 : index
    %c1_75 = arith.constant 1 : index
    %c0_76 = arith.constant 0 : index
    %c0_77 = arith.constant 0 : index
    %69 = vector.load %arg5[%c0_72, %c1_73, %c0_74, %c1_75, %c0_76, %c0_77] : memref<2x4x4x2x8x128xf32, #tpu.memory_space<vmem>>, vector<1x1x1x1x8x128xf32>
    %70 = vector.shape_cast %69 : vector<1x1x1x1x8x128xf32> to vector<8x128xf32>
    %71 = vector.shape_cast %68 : vector<8x128xf32> to vector<1x1x1x1x8x128xf32>
    tpu.vector_store %arg5[%c0_72, %c1_73, %c0_74, %c1_75, %c0_76, %c0_77], %71 {strides = array<i32>} : memref<2x4x4x2x8x128xf32, #tpu.memory_space<vmem>>, vector<1x1x1x1x8x128xf32>,
    %c0_78 = arith.constant 0 : index
    %c0_79 = arith.constant 0 : index
    %72 = vector.load %arg6[%c0_78, %c0_79] : memref<256x128xf32, #tpu.memory_space<vmem>>, vector<24x128xf32>
    %c48 = arith.constant 48 : index
    %c0_80 = arith.constant 0 : index
    %73 = vector.load %arg6[%c48, %c0_80] : memref<256x128xf32, #tpu.memory_space<vmem>>, vector<8x128xf32>
    %c40_81 = arith.constant 40 : index
    %c0_82 = arith.constant 0 : index
    %74 = vector.load %arg6[%c40_81, %c0_82] : memref<256x128xf32, #tpu.memory_space<vmem>>, vector<8x128xf32>
    %c32_83 = arith.constant 32 : index
    %c0_84 = arith.constant 0 : index
    %75 = vector.load %arg6[%c32_83, %c0_84] : memref<256x128xf32, #tpu.memory_space<vmem>>, vector<8x128xf32>
    %76 = tpu.concatenate %73, %74, %75 in 0 : vector<8x128xf32>, vector<8x128xf32>, vector<8x128xf32> -> vector<24x128xf32>
    %77 = tpu.concatenate %0, %54 in 0 : vector<8x128xf32>, vector<16x128xf32> -> vector<24x128xf32>
    %78 = tpu.concatenate %54, %0 in 0 : vector<16x128xf32>, vector<8x128xf32> -> vector<24x128xf32>
    %79 = arith.truncf %77 : vector<24x128xf32> to vector<24x128xbf16>
    %cst_85 = arith.constant dense<0.000000e+00> : vector<24x128xf32>
    %80 = tpu.matmul %79, %5, %cst_85 {dimension_numbers = #tpu.dot_dimension_numbers<[1], [0], [0], [1], [0, 0, 1, 1], [], []>} : vector<24x128xbf16>, vector<128x128xbf16>, vector<24x128xf32> -> vector<24x128xf32>
    %81 = arith.truncf %78 : vector<24x128xf32> to vector<24x128xbf16>
    %cst_86 = arith.constant dense<0.000000e+00> : vector<24x128xf32>
    %82 = tpu.matmul %81, %6, %cst_86 {dimension_numbers = #tpu.dot_dimension_numbers<[1], [0], [0], [1], [0, 0, 1, 1], [], []>} : vector<24x128xbf16>, vector<128x128xbf16>, vector<24x128xf32> -> vector<24x128xf32>
    %83 = arith.addf %80, %82 : vector<24x128xf32>
    %84 = arith.addf %72, %83 : vector<24x128xf32>
    %85 = arith.addf %76, %83 : vector<24x128xf32>
    %86 = math.tanh %84 : vector<24x128xf32>
    %87 = math.tanh %85 : vector<24x128xf32>
    %88 = vector.extract_strided_slice %86 {offsets = [0, 0], sizes = [8, 128], strides = [1, 1]} : vector<24x128xf32> to vector<8x128xf32>
    %c0_87 = arith.constant 0 : index
    %c0_88 = arith.constant 0 : index
    %c2_89 = arith.constant 2 : index
    %c0_90 = arith.constant 0 : index
    %c0_91 = arith.constant 0 : index
    %c0_92 = arith.constant 0 : index
    %89 = vector.load %arg5[%c0_87, %c0_88, %c2_89, %c0_90, %c0_91, %c0_92] : memref<2x4x4x2x8x128xf32, #tpu.memory_space<vmem>>, vector<1x1x1x1x8x128xf32>
    %90 = vector.shape_cast %89 : vector<1x1x1x1x8x128xf32> to vector<8x128xf32>
    %91 = vector.shape_cast %88 : vector<8x128xf32> to vector<1x1x1x1x8x128xf32>
    tpu.vector_store %arg5[%c0_87, %c0_88, %c2_89, %c0_90, %c0_91, %c0_92], %91 {strides = array<i32>} : memref<2x4x4x2x8x128xf32, #tpu.memory_space<vmem>>, vector<1x1x1x1x8x128xf32>,
    %92 = vector.extract_strided_slice %87 {offsets = [0, 0], sizes = [8, 128], strides = [1, 1]} : vector<24x128xf32> to vector<8x128xf32>
    %c0_93 = arith.constant 0 : index
    %c0_94 = arith.constant 0 : index
    %c2_95 = arith.constant 2 : index
    %c1_96 = arith.constant 1 : index
    %c0_97 = arith.constant 0 : index
    %c0_98 = arith.constant 0 : index
    %93 = vector.load %arg5[%c0_93, %c0_94, %c2_95, %c1_96, %c0_97, %c0_98] : memref<2x4x4x2x8x128xf32, #tpu.memory_space<vmem>>, vector<1x1x1x1x8x128xf32>
    %94 = vector.shape_cast %93 : vector<1x1x1x1x8x128xf32> to vector<8x128xf32>
    %95 = vector.shape_cast %92 : vector<8x128xf32> to vector<1x1x1x1x8x128xf32>
    tpu.vector_store %arg5[%c0_93, %c0_94, %c2_95, %c1_96, %c0_97, %c0_98], %95 {strides = array<i32>} : memref<2x4x4x2x8x128xf32, #tpu.memory_space<vmem>>, vector<1x1x1x1x8x128xf32>,
    %96 = vector.extract_strided_slice %86 {offsets = [8, 0], sizes = [8, 128], strides = [1, 1]} : vector<24x128xf32> to vector<8x128xf32>
    %c0_99 = arith.constant 0 : index
    %c1_100 = arith.constant 1 : index
    %c1_101 = arith.constant 1 : index
    %c0_102 = arith.constant 0 : index
    %c0_103 = arith.constant 0 : index
    %c0_104 = arith.constant 0 : index
    %97 = vector.load %arg5[%c0_99, %c1_100, %c1_101, %c0_102, %c0_103, %c0_104] : memref<2x4x4x2x8x128xf32, #tpu.memory_space<vmem>>, vector<1x1x1x1x8x128xf32>
    %98 = vector.shape_cast %97 : vector<1x1x1x1x8x128xf32> to vector<8x128xf32>
    %99 = vector.shape_cast %96 : vector<8x128xf32> to vector<1x1x1x1x8x128xf32>
    tpu.vector_store %arg5[%c0_99, %c1_100, %c1_101, %c0_102, %c0_103, %c0_104], %99 {strides = array<i32>} : memref<2x4x4x2x8x128xf32, #tpu.memory_space<vmem>>, vector<1x1x1x1x8x128xf32>,
    %100 = vector.extract_strided_slice %87 {offsets = [8, 0], sizes = [8, 128], strides = [1, 1]} : vector<24x128xf32> to vector<8x128xf32>
    %c0_105 = arith.constant 0 : index
    %c1_106 = arith.constant 1 : index
    %c1_107 = arith.constant 1 : index
    %c1_108 = arith.constant 1 : index
    %c0_109 = arith.constant 0 : index
    %c0_110 = arith.constant 0 : index
    %101 = vector.load %arg5[%c0_105, %c1_106, %c1_107, %c1_108, %c0_109, %c0_110] : memref<2x4x4x2x8x128xf32, #tpu.memory_space<vmem>>, vector<1x1x1x1x8x128xf32>
    %102 = vector.shape_cast %101 : vector<1x1x1x1x8x128xf32> to vector<8x128xf32>
    %103 = vector.shape_cast %100 : vector<8x128xf32> to vector<1x1x1x1x8x128xf32>
    tpu.vector_store %arg5[%c0_105, %c1_106, %c1_107, %c1_108, %c0_109, %c0_110], %103 {strides = array<i32>} : memref<2x4x4x2x8x128xf32, #tpu.memory_space<vmem>>, vector<1x1x1x1x8x128xf32>,
    %104 = vector.extract_strided_slice %86 {offsets = [16, 0], sizes = [8, 128], strides = [1, 1]} : vector<24x128xf32> to vector<8x128xf32>
    %c0_111 = arith.constant 0 : index
    %c2_112 = arith.constant 2 : index
    %c0_113 = arith.constant 0 : index
    %c0_114 = arith.constant 0 : index
    %c0_115 = arith.constant 0 : index
    %c0_116 = arith.constant 0 : index
    %105 = vector.load %arg5[%c0_111, %c2_112, %c0_113, %c0_114, %c0_115, %c0_116] : memref<2x4x4x2x8x128xf32, #tpu.memory_space<vmem>>, vector<1x1x1x1x8x128xf32>
    %106 = vector.shape_cast %105 : vector<1x1x1x1x8x128xf32> to vector<8x128xf32>
    %107 = vector.shape_cast %104 : vector<8x128xf32> to vector<1x1x1x1x8x128xf32>
    tpu.vector_store %arg5[%c0_111, %c2_112, %c0_113, %c0_114, %c0_115, %c0_116], %107 {strides = array<i32>} : memref<2x4x4x2x8x128xf32, #tpu.memory_space<vmem>>, vector<1x1x1x1x8x128xf32>,
    %108 = vector.extract_strided_slice %87 {offsets = [16, 0], sizes = [8, 128], strides = [1, 1]} : vector<24x128xf32> to vector<8x128xf32>
    %c0_117 = arith.constant 0 : index
    %c2_118 = arith.constant 2 : index
    %c0_119 = arith.constant 0 : index
    %c1_120 = arith.constant 1 : index
    %c0_121 = arith.constant 0 : index
    %c0_122 = arith.constant 0 : index
    %109 = vector.load %arg5[%c0_117, %c2_118, %c0_119, %c1_120, %c0_121, %c0_122] : memref<2x4x4x2x8x128xf32, #tpu.memory_space<vmem>>, vector<1x1x1x1x8x128xf32>
    %110 = vector.shape_cast %109 : vector<1x1x1x1x8x128xf32> to vector<8x128xf32>
    %111 = vector.shape_cast %108 : vector<8x128xf32> to vector<1x1x1x1x8x128xf32>
    tpu.vector_store %arg5[%c0_117, %c2_118, %c0_119, %c1_120, %c0_121, %c0_122], %111 {strides = array<i32>} : memref<2x4x4x2x8x128xf32, #tpu.memory_space<vmem>>, vector<1x1x1x1x8x128xf32>,
    %c0_123 = arith.constant 0 : index
    %c0_124 = arith.constant 0 : index
    %112 = vector.load %arg6[%c0_123, %c0_124] : memref<256x128xf32, #tpu.memory_space<vmem>>, vector<32x128xf32>
    %c56 = arith.constant 56 : index
    %c0_125 = arith.constant 0 : index
    %113 = vector.load %arg6[%c56, %c0_125] : memref<256x128xf32, #tpu.memory_space<vmem>>, vector<8x128xf32>
    %c48_126 = arith.constant 48 : index
    %c0_127 = arith.constant 0 : index
    %114 = vector.load %arg6[%c48_126, %c0_127] : memref<256x128xf32, #tpu.memory_space<vmem>>, vector<8x128xf32>
    %c40_128 = arith.constant 40 : index
    %c0_129 = arith.constant 0 : index
    %115 = vector.load %arg6[%c40_128, %c0_129] : memref<256x128xf32, #tpu.memory_space<vmem>>, vector<8x128xf32>
    %c32_130 = arith.constant 32 : index
    %c0_131 = arith.constant 0 : index
    %116 = vector.load %arg6[%c32_130, %c0_131] : memref<256x128xf32, #tpu.memory_space<vmem>>, vector<8x128xf32>
    %117 = tpu.concatenate %113, %114, %115, %116 in 0 : vector<8x128xf32>, vector<8x128xf32>, vector<8x128xf32>, vector<8x128xf32> -> vector<32x128xf32>
    %118 = tpu.concatenate %0, %86 in 0 : vector<8x128xf32>, vector<24x128xf32> -> vector<32x128xf32>
    %119 = tpu.concatenate %86, %0 in 0 : vector<24x128xf32>, vector<8x128xf32> -> vector<32x128xf32>
    %120 = arith.truncf %118 : vector<32x128xf32> to vector<32x128xbf16>
    %cst_132 = arith.constant dense<0.000000e+00> : vector<32x128xf32>
    %121 = tpu.matmul %120, %5, %cst_132 {dimension_numbers = #tpu.dot_dimension_numbers<[1], [0], [0], [1], [0, 0, 1, 1], [], []>} : vector<32x128xbf16>, vector<128x128xbf16>, vector<32x128xf32> -> vector<32x128xf32>
    %122 = arith.truncf %119 : vector<32x128xf32> to vector<32x128xbf16>
    %cst_133 = arith.constant dense<0.000000e+00> : vector<32x128xf32>
    %123 = tpu.matmul %122, %6, %cst_133 {dimension_numbers = #tpu.dot_dimension_numbers<[1], [0], [0], [1], [0, 0, 1, 1], [], []>} : vector<32x128xbf16>, vector<128x128xbf16>, vector<32x128xf32> -> vector<32x128xf32>
    %124 = arith.addf %121, %123 : vector<32x128xf32>
    %125 = arith.addf %112, %124 : vector<32x128xf32>
    %126 = arith.addf %117, %124 : vector<32x128xf32>
    %127 = math.tanh %125 : vector<32x128xf32>
    %128 = math.tanh %126 : vector<32x128xf32>
    %129 = vector.extract_strided_slice %127 {offsets = [0, 0], sizes = [8, 128], strides = [1, 1]} : vector<32x128xf32> to vector<8x128xf32>
    %c0_134 = arith.constant 0 : index
    %c0_135 = arith.constant 0 : index
    %c3_136 = arith.constant 3 : index
    %c0_137 = arith.constant 0 : index
    %c0_138 = arith.constant 0 : index
    %c0_139 = arith.constant 0 : index
    %130 = vector.load %arg5[%c0_134, %c0_135, %c3_136, %c0_137, %c0_138, %c0_139] : memref<2x4x4x2x8x128xf32, #tpu.memory_space<vmem>>, vector<1x1x1x1x8x128xf32>
    %131 = vector.shape_cast %130 : vector<1x1x1x1x8x128xf32> to vector<8x128xf32>
    %132 = vector.shape_cast %129 : vector<8x128xf32> to vector<1x1x1x1x8x128xf32>
    tpu.vector_store %arg5[%c0_134, %c0_135, %c3_136, %c0_137, %c0_138, %c0_139], %132 {strides = array<i32>} : memref<2x4x4x2x8x128xf32, #tpu.memory_space<vmem>>, vector<1x1x1x1x8x128xf32>,
    %133 = vector.extract_strided_slice %128 {offsets = [0, 0], sizes = [8, 128], strides = [1, 1]} : vector<32x128xf32> to vector<8x128xf32>
    %c0_140 = arith.constant 0 : index
    %c0_141 = arith.constant 0 : index
    %c3_142 = arith.constant 3 : index
    %c1_143 = arith.constant 1 : index
    %c0_144 = arith.constant 0 : index
    %c0_145 = arith.constant 0 : index
    %134 = vector.load %arg5[%c0_140, %c0_141, %c3_142, %c1_143, %c0_144, %c0_145] : memref<2x4x4x2x8x128xf32, #tpu.memory_space<vmem>>, vector<1x1x1x1x8x128xf32>
    %135 = vector.shape_cast %134 : vector<1x1x1x1x8x128xf32> to vector<8x128xf32>
    %136 = vector.shape_cast %133 : vector<8x128xf32> to vector<1x1x1x1x8x128xf32>
    tpu.vector_store %arg5[%c0_140, %c0_141, %c3_142, %c1_143, %c0_144, %c0_145], %136 {strides = array<i32>} : memref<2x4x4x2x8x128xf32, #tpu.memory_space<vmem>>, vector<1x1x1x1x8x128xf32>,
    %137 = vector.extract_strided_slice %127 {offsets = [8, 0], sizes = [8, 128], strides = [1, 1]} : vector<32x128xf32> to vector<8x128xf32>
    %c0_146 = arith.constant 0 : index
    %c1_147 = arith.constant 1 : index
    %c2_148 = arith.constant 2 : index
    %c0_149 = arith.constant 0 : index
    %c0_150 = arith.constant 0 : index
    %c0_151 = arith.constant 0 : index
    %138 = vector.load %arg5[%c0_146, %c1_147, %c2_148, %c0_149, %c0_150, %c0_151] : memref<2x4x4x2x8x128xf32, #tpu.memory_space<vmem>>, vector<1x1x1x1x8x128xf32>
    %139 = vector.shape_cast %138 : vector<1x1x1x1x8x128xf32> to vector<8x128xf32>
    %140 = vector.shape_cast %137 : vector<8x128xf32> to vector<1x1x1x1x8x128xf32>
    tpu.vector_store %arg5[%c0_146, %c1_147, %c2_148, %c0_149, %c0_150, %c0_151], %140 {strides = array<i32>} : memref<2x4x4x2x8x128xf32, #tpu.memory_space<vmem>>, vector<1x1x1x1x8x128xf32>,
    %141 = vector.extract_strided_slice %128 {offsets = [8, 0], sizes = [8, 128], strides = [1, 1]} : vector<32x128xf32> to vector<8x128xf32>
    %c0_152 = arith.constant 0 : index
    %c1_153 = arith.constant 1 : index
    %c2_154 = arith.constant 2 : index
    %c1_155 = arith.constant 1 : index
    %c0_156 = arith.constant 0 : index
    %c0_157 = arith.constant 0 : index
    %142 = vector.load %arg5[%c0_152, %c1_153, %c2_154, %c1_155, %c0_156, %c0_157] : memref<2x4x4x2x8x128xf32, #tpu.memory_space<vmem>>, vector<1x1x1x1x8x128xf32>
    %143 = vector.shape_cast %142 : vector<1x1x1x1x8x128xf32> to vector<8x128xf32>
    %144 = vector.shape_cast %141 : vector<8x128xf32> to vector<1x1x1x1x8x128xf32>
    tpu.vector_store %arg5[%c0_152, %c1_153, %c2_154, %c1_155, %c0_156, %c0_157], %144 {strides = array<i32>} : memref<2x4x4x2x8x128xf32, #tpu.memory_space<vmem>>, vector<1x1x1x1x8x128xf32>,
    %145 = vector.extract_strided_slice %127 {offsets = [16, 0], sizes = [8, 128], strides = [1, 1]} : vector<32x128xf32> to vector<8x128xf32>
    %c0_158 = arith.constant 0 : index
    %c2_159 = arith.constant 2 : index
    %c1_160 = arith.constant 1 : index
    %c0_161 = arith.constant 0 : index
    %c0_162 = arith.constant 0 : index
    %c0_163 = arith.constant 0 : index
    %146 = vector.load %arg5[%c0_158, %c2_159, %c1_160, %c0_161, %c0_162, %c0_163] : memref<2x4x4x2x8x128xf32, #tpu.memory_space<vmem>>, vector<1x1x1x1x8x128xf32>
    %147 = vector.shape_cast %146 : vector<1x1x1x1x8x128xf32> to vector<8x128xf32>
    %148 = vector.shape_cast %145 : vector<8x128xf32> to vector<1x1x1x1x8x128xf32>
    tpu.vector_store %arg5[%c0_158, %c2_159, %c1_160, %c0_161, %c0_162, %c0_163], %148 {strides = array<i32>} : memref<2x4x4x2x8x128xf32, #tpu.memory_space<vmem>>, vector<1x1x1x1x8x128xf32>,
    %149 = vector.extract_strided_slice %128 {offsets = [16, 0], sizes = [8, 128], strides = [1, 1]} : vector<32x128xf32> to vector<8x128xf32>
    %c0_164 = arith.constant 0 : index
    %c2_165 = arith.constant 2 : index
    %c1_166 = arith.constant 1 : index
    %c1_167 = arith.constant 1 : index
    %c0_168 = arith.constant 0 : index
    %c0_169 = arith.constant 0 : index
    %150 = vector.load %arg5[%c0_164, %c2_165, %c1_166, %c1_167, %c0_168, %c0_169] : memref<2x4x4x2x8x128xf32, #tpu.memory_space<vmem>>, vector<1x1x1x1x8x128xf32>
    %151 = vector.shape_cast %150 : vector<1x1x1x1x8x128xf32> to vector<8x128xf32>
    %152 = vector.shape_cast %149 : vector<8x128xf32> to vector<1x1x1x1x8x128xf32>
    tpu.vector_store %arg5[%c0_164, %c2_165, %c1_166, %c1_167, %c0_168, %c0_169], %152 {strides = array<i32>} : memref<2x4x4x2x8x128xf32, #tpu.memory_space<vmem>>, vector<1x1x1x1x8x128xf32>,
    %153 = vector.extract_strided_slice %127 {offsets = [24, 0], sizes = [8, 128], strides = [1, 1]} : vector<32x128xf32> to vector<8x128xf32>
    %c0_170 = arith.constant 0 : index
    %c3_171 = arith.constant 3 : index
    %c0_172 = arith.constant 0 : index
    %c0_173 = arith.constant 0 : index
    %c0_174 = arith.constant 0 : index
    %c0_175 = arith.constant 0 : index
    %154 = vector.load %arg5[%c0_170, %c3_171, %c0_172, %c0_173, %c0_174, %c0_175] : memref<2x4x4x2x8x128xf32, #tpu.memory_space<vmem>>, vector<1x1x1x1x8x128xf32>
    %155 = vector.shape_cast %154 : vector<1x1x1x1x8x128xf32> to vector<8x128xf32>
    %156 = vector.shape_cast %153 : vector<8x128xf32> to vector<1x1x1x1x8x128xf32>
    tpu.vector_store %arg5[%c0_170, %c3_171, %c0_172, %c0_173, %c0_174, %c0_175], %156 {strides = array<i32>} : memref<2x4x4x2x8x128xf32, #tpu.memory_space<vmem>>, vector<1x1x1x1x8x128xf32>,
    %157 = vector.extract_strided_slice %128 {offsets = [24, 0], sizes = [8, 128], strides = [1, 1]} : vector<32x128xf32> to vector<8x128xf32>
    %c0_176 = arith.constant 0 : index
    %c3_177 = arith.constant 3 : index
    %c0_178 = arith.constant 0 : index
    %c1_179 = arith.constant 1 : index
    %c0_180 = arith.constant 0 : index
    %c0_181 = arith.constant 0 : index
    %158 = vector.load %arg5[%c0_176, %c3_177, %c0_178, %c1_179, %c0_180, %c0_181] : memref<2x4x4x2x8x128xf32, #tpu.memory_space<vmem>>, vector<1x1x1x1x8x128xf32>
    %159 = vector.shape_cast %158 : vector<1x1x1x1x8x128xf32> to vector<8x128xf32>
    %160 = vector.shape_cast %157 : vector<8x128xf32> to vector<1x1x1x1x8x128xf32>
    tpu.vector_store %arg5[%c0_176, %c3_177, %c0_178, %c1_179, %c0_180, %c0_181], %160 {strides = array<i32>} : memref<2x4x4x2x8x128xf32, #tpu.memory_space<vmem>>, vector<1x1x1x1x8x128xf32>,
    %c8 = arith.constant 8 : index
    %c0_182 = arith.constant 0 : index
    %161 = vector.load %arg6[%c8, %c0_182] : memref<256x128xf32, #tpu.memory_space<vmem>>, vector<24x128xf32>
    %c56_183 = arith.constant 56 : index
    %c0_184 = arith.constant 0 : index
    %162 = vector.load %arg6[%c56_183, %c0_184] : memref<256x128xf32, #tpu.memory_space<vmem>>, vector<8x128xf32>
    %c48_185 = arith.constant 48 : index
    %c0_186 = arith.constant 0 : index
    %163 = vector.load %arg6[%c48_185, %c0_186] : memref<256x128xf32, #tpu.memory_space<vmem>>, vector<8x128xf32>
    %c40_187 = arith.constant 40 : index
    %c0_188 = arith.constant 0 : index
    %164 = vector.load %arg6[%c40_187, %c0_188] : memref<256x128xf32, #tpu.memory_space<vmem>>, vector<8x128xf32>
    %165 = tpu.concatenate %162, %163, %164 in 0 : vector<8x128xf32>, vector<8x128xf32>, vector<8x128xf32> -> vector<24x128xf32>
    %166 = vector.extract_strided_slice %127 {offsets = [0, 0], sizes = [24, 128], strides = [1, 1]} : vector<32x128xf32> to vector<24x128xf32>
    %167 = vector.extract_strided_slice %127 {offsets = [8, 0], sizes = [24, 128], strides = [1, 1]} : vector<32x128xf32> to vector<24x128xf32>
    %168 = arith.truncf %166 : vector<24x128xf32> to vector<24x128xbf16>
    %cst_189 = arith.constant dense<0.000000e+00> : vector<24x128xf32>
    %169 = tpu.matmul %168, %5, %cst_189 {dimension_numbers = #tpu.dot_dimension_numbers<[1], [0], [0], [1], [0, 0, 1, 1], [], []>} : vector<24x128xbf16>, vector<128x128xbf16>, vector<24x128xf32> -> vector<24x128xf32>
    %170 = arith.truncf %167 : vector<24x128xf32> to vector<24x128xbf16>
    %cst_190 = arith.constant dense<0.000000e+00> : vector<24x128xf32>
    %171 = tpu.matmul %170, %6, %cst_190 {dimension_numbers = #tpu.dot_dimension_numbers<[1], [0], [0], [1], [0, 0, 1, 1], [], []>} : vector<24x128xbf16>, vector<128x128xbf16>, vector<24x128xf32> -> vector<24x128xf32>
    %172 = arith.addf %169, %171 : vector<24x128xf32>
    %173 = arith.addf %161, %172 : vector<24x128xf32>
    %174 = arith.addf %165, %172 : vector<24x128xf32>
    %175 = math.tanh %173 : vector<24x128xf32>
    %176 = math.tanh %174 : vector<24x128xf32>
    %177 = vector.extract_strided_slice %175 {offsets = [0, 0], sizes = [8, 128], strides = [1, 1]} : vector<24x128xf32> to vector<8x128xf32>
    %c0_191 = arith.constant 0 : index
    %c1_192 = arith.constant 1 : index
    %c3_193 = arith.constant 3 : index
    %c0_194 = arith.constant 0 : index
    %c0_195 = arith.constant 0 : index
    %c0_196 = arith.constant 0 : index
    %178 = vector.load %arg5[%c0_191, %c1_192, %c3_193, %c0_194, %c0_195, %c0_196] : memref<2x4x4x2x8x128xf32, #tpu.memory_space<vmem>>, vector<1x1x1x1x8x128xf32>
    %179 = vector.shape_cast %178 : vector<1x1x1x1x8x128xf32> to vector<8x128xf32>
    %180 = vector.shape_cast %177 : vector<8x128xf32> to vector<1x1x1x1x8x128xf32>
    tpu.vector_store %arg5[%c0_191, %c1_192, %c3_193, %c0_194, %c0_195, %c0_196], %180 {strides = array<i32>} : memref<2x4x4x2x8x128xf32, #tpu.memory_space<vmem>>, vector<1x1x1x1x8x128xf32>,
    %181 = vector.extract_strided_slice %176 {offsets = [0, 0], sizes = [8, 128], strides = [1, 1]} : vector<24x128xf32> to vector<8x128xf32>
    %c0_197 = arith.constant 0 : index
    %c1_198 = arith.constant 1 : index
    %c3_199 = arith.constant 3 : index
    %c1_200 = arith.constant 1 : index
    %c0_201 = arith.constant 0 : index
    %c0_202 = arith.constant 0 : index
    %182 = vector.load %arg5[%c0_197, %c1_198, %c3_199, %c1_200, %c0_201, %c0_202] : memref<2x4x4x2x8x128xf32, #tpu.memory_space<vmem>>, vector<1x1x1x1x8x128xf32>
    %183 = vector.shape_cast %182 : vector<1x1x1x1x8x128xf32> to vector<8x128xf32>
    %184 = vector.shape_cast %181 : vector<8x128xf32> to vector<1x1x1x1x8x128xf32>
    tpu.vector_store %arg5[%c0_197, %c1_198, %c3_199, %c1_200, %c0_201, %c0_202], %184 {strides = array<i32>} : memref<2x4x4x2x8x128xf32, #tpu.memory_space<vmem>>, vector<1x1x1x1x8x128xf32>,
    %185 = vector.extract_strided_slice %175 {offsets = [8, 0], sizes = [8, 128], strides = [1, 1]} : vector<24x128xf32> to vector<8x128xf32>
    %c0_203 = arith.constant 0 : index
    %c2_204 = arith.constant 2 : index
    %c2_205 = arith.constant 2 : index
    %c0_206 = arith.constant 0 : index
    %c0_207 = arith.constant 0 : index
    %c0_208 = arith.constant 0 : index
    %186 = vector.load %arg5[%c0_203, %c2_204, %c2_205, %c0_206, %c0_207, %c0_208] : memref<2x4x4x2x8x128xf32, #tpu.memory_space<vmem>>, vector<1x1x1x1x8x128xf32>
    %187 = vector.shape_cast %186 : vector<1x1x1x1x8x128xf32> to vector<8x128xf32>
    %188 = vector.shape_cast %185 : vector<8x128xf32> to vector<1x1x1x1x8x128xf32>
    tpu.vector_store %arg5[%c0_203, %c2_204, %c2_205, %c0_206, %c0_207, %c0_208], %188 {strides = array<i32>} : memref<2x4x4x2x8x128xf32, #tpu.memory_space<vmem>>, vector<1x1x1x1x8x128xf32>,
    %189 = vector.extract_strided_slice %176 {offsets = [8, 0], sizes = [8, 128], strides = [1, 1]} : vector<24x128xf32> to vector<8x128xf32>
    %c0_209 = arith.constant 0 : index
    %c2_210 = arith.constant 2 : index
    %c2_211 = arith.constant 2 : index
    %c1_212 = arith.constant 1 : index
    %c0_213 = arith.constant 0 : index
    %c0_214 = arith.constant 0 : index
    %190 = vector.load %arg5[%c0_209, %c2_210, %c2_211, %c1_212, %c0_213, %c0_214] : memref<2x4x4x2x8x128xf32, #tpu.memory_space<vmem>>, vector<1x1x1x1x8x128xf32>
    %191 = vector.shape_cast %190 : vector<1x1x1x1x8x128xf32> to vector<8x128xf32>
    %192 = vector.shape_cast %189 : vector<8x128xf32> to vector<1x1x1x1x8x128xf32>
    tpu.vector_store %arg5[%c0_209, %c2_210, %c2_211, %c1_212, %c0_213, %c0_214], %192 {strides = array<i32>} : memref<2x4x4x2x8x128xf32, #tpu.memory_space<vmem>>, vector<1x1x1x1x8x128xf32>,
    %193 = vector.extract_strided_slice %175 {offsets = [16, 0], sizes = [8, 128], strides = [1, 1]} : vector<24x128xf32> to vector<8x128xf32>
    %c0_215 = arith.constant 0 : index
    %c3_216 = arith.constant 3 : index
    %c1_217 = arith.constant 1 : index
    %c0_218 = arith.constant 0 : index
    %c0_219 = arith.constant 0 : index
    %c0_220 = arith.constant 0 : index
    %194 = vector.load %arg5[%c0_215, %c3_216, %c1_217, %c0_218, %c0_219, %c0_220] : memref<2x4x4x2x8x128xf32, #tpu.memory_space<vmem>>, vector<1x1x1x1x8x128xf32>
    %195 = vector.shape_cast %194 : vector<1x1x1x1x8x128xf32> to vector<8x128xf32>
    %196 = vector.shape_cast %193 : vector<8x128xf32> to vector<1x1x1x1x8x128xf32>
    tpu.vector_store %arg5[%c0_215, %c3_216, %c1_217, %c0_218, %c0_219, %c0_220], %196 {strides = array<i32>} : memref<2x4x4x2x8x128xf32, #tpu.memory_space<vmem>>, vector<1x1x1x1x8x128xf32>,
    %197 = vector.extract_strided_slice %176 {offsets = [16, 0], sizes = [8, 128], strides = [1, 1]} : vector<24x128xf32> to vector<8x128xf32>
    %c0_221 = arith.constant 0 : index
    %c3_222 = arith.constant 3 : index
    %c1_223 = arith.constant 1 : index
    %c1_224 = arith.constant 1 : index
    %c0_225 = arith.constant 0 : index
    %c0_226 = arith.constant 0 : index
    %198 = vector.load %arg5[%c0_221, %c3_222, %c1_223, %c1_224, %c0_225, %c0_226] : memref<2x4x4x2x8x128xf32, #tpu.memory_space<vmem>>, vector<1x1x1x1x8x128xf32>
    %199 = vector.shape_cast %198 : vector<1x1x1x1x8x128xf32> to vector<8x128xf32>
    %200 = vector.shape_cast %197 : vector<8x128xf32> to vector<1x1x1x1x8x128xf32>
    tpu.vector_store %arg5[%c0_221, %c3_222, %c1_223, %c1_224, %c0_225, %c0_226], %200 {strides = array<i32>} : memref<2x4x4x2x8x128xf32, #tpu.memory_space<vmem>>, vector<1x1x1x1x8x128xf32>,
    %c16 = arith.constant 16 : index
    %c0_227 = arith.constant 0 : index
    %201 = vector.load %arg6[%c16, %c0_227] : memref<256x128xf32, #tpu.memory_space<vmem>>, vector<16x128xf32>
    %c56_228 = arith.constant 56 : index
    %c0_229 = arith.constant 0 : index
    %202 = vector.load %arg6[%c56_228, %c0_229] : memref<256x128xf32, #tpu.memory_space<vmem>>, vector<8x128xf32>
    %c48_230 = arith.constant 48 : index
    %c0_231 = arith.constant 0 : index
    %203 = vector.load %arg6[%c48_230, %c0_231] : memref<256x128xf32, #tpu.memory_space<vmem>>, vector<8x128xf32>
    %204 = tpu.concatenate %202, %203 in 0 : vector<8x128xf32>, vector<8x128xf32> -> vector<16x128xf32>
    %205 = vector.extract_strided_slice %175 {offsets = [0, 0], sizes = [16, 128], strides = [1, 1]} : vector<24x128xf32> to vector<16x128xf32>
    %206 = vector.extract_strided_slice %175 {offsets = [8, 0], sizes = [16, 128], strides = [1, 1]} : vector<24x128xf32> to vector<16x128xf32>
    %207 = arith.truncf %205 : vector<16x128xf32> to vector<16x128xbf16>
    %cst_232 = arith.constant dense<0.000000e+00> : vector<16x128xf32>
    %208 = tpu.matmul %207, %5, %cst_232 {dimension_numbers = #tpu.dot_dimension_numbers<[1], [0], [0], [1], [0, 0, 1, 1], [], []>} : vector<16x128xbf16>, vector<128x128xbf16>, vector<16x128xf32> -> vector<16x128xf32>
    %209 = arith.truncf %206 : vector<16x128xf32> to vector<16x128xbf16>
    %cst_233 = arith.constant dense<0.000000e+00> : vector<16x128xf32>
    %210 = tpu.matmul %209, %6, %cst_233 {dimension_numbers = #tpu.dot_dimension_numbers<[1], [0], [0], [1], [0, 0, 1, 1], [], []>} : vector<16x128xbf16>, vector<128x128xbf16>, vector<16x128xf32> -> vector<16x128xf32>
    %211 = arith.addf %208, %210 : vector<16x128xf32>
    %212 = arith.addf %201, %211 : vector<16x128xf32>
    %213 = arith.addf %204, %211 : vector<16x128xf32>
    %214 = math.tanh %212 : vector<16x128xf32>
    %215 = math.tanh %213 : vector<16x128xf32>
    %216 = vector.extract_strided_slice %214 {offsets = [0, 0], sizes = [8, 128], strides = [1, 1]} : vector<16x128xf32> to vector<8x128xf32>
    %c0_234 = arith.constant 0 : index
    %c2_235 = arith.constant 2 : index
    %c3_236 = arith.constant 3 : index
    %c0_237 = arith.constant 0 : index
    %c0_238 = arith.constant 0 : index
    %c0_239 = arith.constant 0 : index
    %217 = vector.load %arg5[%c0_234, %c2_235, %c3_236, %c0_237, %c0_238, %c0_239] : memref<2x4x4x2x8x128xf32, #tpu.memory_space<vmem>>, vector<1x1x1x1x8x128xf32>
    %218 = vector.shape_cast %217 : vector<1x1x1x1x8x128xf32> to vector<8x128xf32>
    %219 = vector.shape_cast %216 : vector<8x128xf32> to vector<1x1x1x1x8x128xf32>
    tpu.vector_store %arg5[%c0_234, %c2_235, %c3_236, %c0_237, %c0_238, %c0_239], %219 {strides = array<i32>} : memref<2x4x4x2x8x128xf32, #tpu.memory_space<vmem>>, vector<1x1x1x1x8x128xf32>,
    %220 = vector.extract_strided_slice %215 {offsets = [0, 0], sizes = [8, 128], strides = [1, 1]} : vector<16x128xf32> to vector<8x128xf32>
    %c0_240 = arith.constant 0 : index
    %c2_241 = arith.constant 2 : index
    %c3_242 = arith.constant 3 : index
    %c1_243 = arith.constant 1 : index
    %c0_244 = arith.constant 0 : index
    %c0_245 = arith.constant 0 : index
    %221 = vector.load %arg5[%c0_240, %c2_241, %c3_242, %c1_243, %c0_244, %c0_245] : memref<2x4x4x2x8x128xf32, #tpu.memory_space<vmem>>, vector<1x1x1x1x8x128xf32>
    %222 = vector.shape_cast %221 : vector<1x1x1x1x8x128xf32> to vector<8x128xf32>
    %223 = vector.shape_cast %220 : vector<8x128xf32> to vector<1x1x1x1x8x128xf32>
    tpu.vector_store %arg5[%c0_240, %c2_241, %c3_242, %c1_243, %c0_244, %c0_245], %223 {strides = array<i32>} : memref<2x4x4x2x8x128xf32, #tpu.memory_space<vmem>>, vector<1x1x1x1x8x128xf32>,
    %224 = vector.extract_strided_slice %214 {offsets = [8, 0], sizes = [8, 128], strides = [1, 1]} : vector<16x128xf32> to vector<8x128xf32>
    %c0_246 = arith.constant 0 : index
    %c3_247 = arith.constant 3 : index
    %c2_248 = arith.constant 2 : index
    %c0_249 = arith.constant 0 : index
    %c0_250 = arith.constant 0 : index
    %c0_251 = arith.constant 0 : index
    %225 = vector.load %arg5[%c0_246, %c3_247, %c2_248, %c0_249, %c0_250, %c0_251] : memref<2x4x4x2x8x128xf32, #tpu.memory_space<vmem>>, vector<1x1x1x1x8x128xf32>
    %226 = vector.shape_cast %225 : vector<1x1x1x1x8x128xf32> to vector<8x128xf32>
    %227 = vector.shape_cast %224 : vector<8x128xf32> to vector<1x1x1x1x8x128xf32>
    tpu.vector_store %arg5[%c0_246, %c3_247, %c2_248, %c0_249, %c0_250, %c0_251], %227 {strides = array<i32>} : memref<2x4x4x2x8x128xf32, #tpu.memory_space<vmem>>, vector<1x1x1x1x8x128xf32>,
    %228 = vector.extract_strided_slice %215 {offsets = [8, 0], sizes = [8, 128], strides = [1, 1]} : vector<16x128xf32> to vector<8x128xf32>
    %c0_252 = arith.constant 0 : index
    %c3_253 = arith.constant 3 : index
    %c2_254 = arith.constant 2 : index
    %c1_255 = arith.constant 1 : index
    %c0_256 = arith.constant 0 : index
    %c0_257 = arith.constant 0 : index
    %229 = vector.load %arg5[%c0_252, %c3_253, %c2_254, %c1_255, %c0_256, %c0_257] : memref<2x4x4x2x8x128xf32, #tpu.memory_space<vmem>>, vector<1x1x1x1x8x128xf32>
    %230 = vector.shape_cast %229 : vector<1x1x1x1x8x128xf32> to vector<8x128xf32>
    %231 = vector.shape_cast %228 : vector<8x128xf32> to vector<1x1x1x1x8x128xf32>
    tpu.vector_store %arg5[%c0_252, %c3_253, %c2_254, %c1_255, %c0_256, %c0_257], %231 {strides = array<i32>} : memref<2x4x4x2x8x128xf32, #tpu.memory_space<vmem>>, vector<1x1x1x1x8x128xf32>,
    %c24 = arith.constant 24 : index
    %c0_258 = arith.constant 0 : index
    %232 = vector.load %arg6[%c24, %c0_258] : memref<256x128xf32, #tpu.memory_space<vmem>>, vector<8x128xf32>
    %c56_259 = arith.constant 56 : index
    %c0_260 = arith.constant 0 : index
    %233 = vector.load %arg6[%c56_259, %c0_260] : memref<256x128xf32, #tpu.memory_space<vmem>>, vector<8x128xf32>
    %234 = vector.extract_strided_slice %214 {offsets = [0, 0], sizes = [8, 128], strides = [1, 1]} : vector<16x128xf32> to vector<8x128xf32>
    %235 = vector.extract_strided_slice %214 {offsets = [8, 0], sizes = [8, 128], strides = [1, 1]} : vector<16x128xf32> to vector<8x128xf32>
    %236 = arith.truncf %234 : vector<8x128xf32> to vector<8x128xbf16>
    %cst_261 = arith.constant dense<0.000000e+00> : vector<8x128xf32>
    %237 = tpu.matmul %236, %5, %cst_261 {dimension_numbers = #tpu.dot_dimension_numbers<[1], [0], [0], [1], [0, 0, 1, 1], [], []>} : vector<8x128xbf16>, vector<128x128xbf16>, vector<8x128xf32> -> vector<8x128xf32>
    %238 = arith.truncf %235 : vector<8x128xf32> to vector<8x128xbf16>
    %cst_262 = arith.constant dense<0.000000e+00> : vector<8x128xf32>
    %239 = tpu.matmul %238, %6, %cst_262 {dimension_numbers = #tpu.dot_dimension_numbers<[1], [0], [0], [1], [0, 0, 1, 1], [], []>} : vector<8x128xbf16>, vector<128x128xbf16>, vector<8x128xf32> -> vector<8x128xf32>
    %240 = arith.addf %237, %239 : vector<8x128xf32>
    %241 = arith.addf %232, %240 : vector<8x128xf32>
    %242 = arith.addf %233, %240 : vector<8x128xf32>
    %243 = math.tanh %241 : vector<8x128xf32>
    %244 = math.tanh %242 : vector<8x128xf32>
    %c0_263 = arith.constant 0 : index
    %c3_264 = arith.constant 3 : index
    %c3_265 = arith.constant 3 : index
    %c0_266 = arith.constant 0 : index
    %c0_267 = arith.constant 0 : index
    %c0_268 = arith.constant 0 : index
    %245 = vector.load %arg5[%c0_263, %c3_264, %c3_265, %c0_266, %c0_267, %c0_268] : memref<2x4x4x2x8x128xf32, #tpu.memory_space<vmem>>, vector<1x1x1x1x8x128xf32>
    %246 = vector.shape_cast %245 : vector<1x1x1x1x8x128xf32> to vector<8x128xf32>
    %247 = vector.shape_cast %243 : vector<8x128xf32> to vector<1x1x1x1x8x128xf32>
    tpu.vector_store %arg5[%c0_263, %c3_264, %c3_265, %c0_266, %c0_267, %c0_268], %247 {strides = array<i32>} : memref<2x4x4x2x8x128xf32, #tpu.memory_space<vmem>>, vector<1x1x1x1x8x128xf32>,
    %c0_269 = arith.constant 0 : index
    %c3_270 = arith.constant 3 : index
    %c3_271 = arith.constant 3 : index
    %c1_272 = arith.constant 1 : index
    %c0_273 = arith.constant 0 : index
    %c0_274 = arith.constant 0 : index
    %248 = vector.load %arg5[%c0_269, %c3_270, %c3_271, %c1_272, %c0_273, %c0_274] : memref<2x4x4x2x8x128xf32, #tpu.memory_space<vmem>>, vector<1x1x1x1x8x128xf32>
    %249 = vector.shape_cast %248 : vector<1x1x1x1x8x128xf32> to vector<8x128xf32>
    %250 = vector.shape_cast %244 : vector<8x128xf32> to vector<1x1x1x1x8x128xf32>
    tpu.vector_store %arg5[%c0_269, %c3_270, %c3_271, %c1_272, %c0_273, %c0_274], %250 {strides = array<i32>} : memref<2x4x4x2x8x128xf32, #tpu.memory_space<vmem>>, vector<1x1x1x1x8x128xf32>,
    %c1_275 = arith.constant 1 : index
    %c0_276 = arith.constant 0 : index
    %c0_277 = arith.constant 0 : index
    %251 = vector.load %arg2[%c1_275, %c0_276, %c0_277] : memref<2x128x128xbf16, #tpu.memory_space<vmem>>, vector<1x128x128xbf16>
    %252 = vector.shape_cast %251 : vector<1x128x128xbf16> to vector<128x128xbf16>
    %c1_278 = arith.constant 1 : index
    %c0_279 = arith.constant 0 : index
    %c0_280 = arith.constant 0 : index
    %253 = vector.load %arg3[%c1_278, %c0_279, %c0_280] : memref<2x256x128xbf16, #tpu.memory_space<vmem>>, vector<1x256x128xbf16>
    %254 = vector.shape_cast %253 : vector<1x256x128xbf16> to vector<256x128xbf16>
    %255 = vector.extract_strided_slice %254 {offsets = [0, 0], sizes = [128, 128], strides = [1, 1]} : vector<256x128xbf16> to vector<128x128xbf16>
    %256 = vector.extract_strided_slice %254 {offsets = [128, 0], sizes = [128, 128], strides = [1, 1]} : vector<256x128xbf16> to vector<128x128xbf16>
    %c1_281 = arith.constant 1 : index
    %c0_282 = arith.constant 0 : index
    %c0_283 = arith.constant 0 : index
    %257 = vector.load %arg4[%c1_281, %c0_282, %c0_283] : memref<2x1x128xf32, #tpu.memory_space<vmem>>, vector<1x1x128xf32>
    %258 = vector.shape_cast %257 : vector<1x1x128xf32> to vector<1x128xf32>
    %c0_284 = arith.constant 0 : index
    %c0_285 = arith.constant 0 : index
    %c0_286 = arith.constant 0 : index
    %c0_287 = arith.constant 0 : index
    %c0_288 = arith.constant 0 : index
    %c0_289 = arith.constant 0 : index
    %259 = vector.load %arg5[%c0_284, %c0_285, %c0_286, %c0_287, %c0_288, %c0_289] : memref<2x4x4x2x8x128xf32, #tpu.memory_space<vmem>>, vector<1x1x1x1x8x128xf32>
    %260 = vector.shape_cast %259 : vector<1x1x1x1x8x128xf32> to vector<8x128xf32>
    %c0_290 = arith.constant 0 : index
    %c0_291 = arith.constant 0 : index
    %c1_292 = arith.constant 1 : index
    %c0_293 = arith.constant 0 : index
    %c0_294 = arith.constant 0 : index
    %c0_295 = arith.constant 0 : index
    %261 = vector.load %arg5[%c0_290, %c0_291, %c1_292, %c0_293, %c0_294, %c0_295] : memref<2x4x4x2x8x128xf32, #tpu.memory_space<vmem>>, vector<1x1x1x1x8x128xf32>
    %262 = vector.shape_cast %261 : vector<1x1x1x1x8x128xf32> to vector<8x128xf32>
    %c0_296 = arith.constant 0 : index
    %c1_297 = arith.constant 1 : index
    %c0_298 = arith.constant 0 : index
    %c0_299 = arith.constant 0 : index
    %c0_300 = arith.constant 0 : index
    %c0_301 = arith.constant 0 : index
    %263 = vector.load %arg5[%c0_296, %c1_297, %c0_298, %c0_299, %c0_300, %c0_301] : memref<2x4x4x2x8x128xf32, #tpu.memory_space<vmem>>, vector<1x1x1x1x8x128xf32>
    %264 = vector.shape_cast %263 : vector<1x1x1x1x8x128xf32> to vector<8x128xf32>
    %c0_302 = arith.constant 0 : index
    %c0_303 = arith.constant 0 : index
    %c2_304 = arith.constant 2 : index
    %c0_305 = arith.constant 0 : index
    %c0_306 = arith.constant 0 : index
    %c0_307 = arith.constant 0 : index
    %265 = vector.load %arg5[%c0_302, %c0_303, %c2_304, %c0_305, %c0_306, %c0_307] : memref<2x4x4x2x8x128xf32, #tpu.memory_space<vmem>>, vector<1x1x1x1x8x128xf32>
    %266 = vector.shape_cast %265 : vector<1x1x1x1x8x128xf32> to vector<8x128xf32>
    %c0_308 = arith.constant 0 : index
    %c1_309 = arith.constant 1 : index
    %c1_310 = arith.constant 1 : index
    %c0_311 = arith.constant 0 : index
    %c0_312 = arith.constant 0 : index
    %c0_313 = arith.constant 0 : index
    %267 = vector.load %arg5[%c0_308, %c1_309, %c1_310, %c0_311, %c0_312, %c0_313] : memref<2x4x4x2x8x128xf32, #tpu.memory_space<vmem>>, vector<1x1x1x1x8x128xf32>
    %268 = vector.shape_cast %267 : vector<1x1x1x1x8x128xf32> to vector<8x128xf32>
    %c0_314 = arith.constant 0 : index
    %c2_315 = arith.constant 2 : index
    %c0_316 = arith.constant 0 : index
    %c0_317 = arith.constant 0 : index
    %c0_318 = arith.constant 0 : index
    %c0_319 = arith.constant 0 : index
    %269 = vector.load %arg5[%c0_314, %c2_315, %c0_316, %c0_317, %c0_318, %c0_319] : memref<2x4x4x2x8x128xf32, #tpu.memory_space<vmem>>, vector<1x1x1x1x8x128xf32>
    %270 = vector.shape_cast %269 : vector<1x1x1x1x8x128xf32> to vector<8x128xf32>
    %c0_320 = arith.constant 0 : index
    %c0_321 = arith.constant 0 : index
    %c3_322 = arith.constant 3 : index
    %c0_323 = arith.constant 0 : index
    %c0_324 = arith.constant 0 : index
    %c0_325 = arith.constant 0 : index
    %271 = vector.load %arg5[%c0_320, %c0_321, %c3_322, %c0_323, %c0_324, %c0_325] : memref<2x4x4x2x8x128xf32, #tpu.memory_space<vmem>>, vector<1x1x1x1x8x128xf32>
    %272 = vector.shape_cast %271 : vector<1x1x1x1x8x128xf32> to vector<8x128xf32>
    %c0_326 = arith.constant 0 : index
    %c1_327 = arith.constant 1 : index
    %c2_328 = arith.constant 2 : index
    %c0_329 = arith.constant 0 : index
    %c0_330 = arith.constant 0 : index
    %c0_331 = arith.constant 0 : index
    %273 = vector.load %arg5[%c0_326, %c1_327, %c2_328, %c0_329, %c0_330, %c0_331] : memref<2x4x4x2x8x128xf32, #tpu.memory_space<vmem>>, vector<1x1x1x1x8x128xf32>
    %274 = vector.shape_cast %273 : vector<1x1x1x1x8x128xf32> to vector<8x128xf32>
    %c0_332 = arith.constant 0 : index
    %c2_333 = arith.constant 2 : index
    %c1_334 = arith.constant 1 : index
    %c0_335 = arith.constant 0 : index
    %c0_336 = arith.constant 0 : index
    %c0_337 = arith.constant 0 : index
    %275 = vector.load %arg5[%c0_332, %c2_333, %c1_334, %c0_335, %c0_336, %c0_337] : memref<2x4x4x2x8x128xf32, #tpu.memory_space<vmem>>, vector<1x1x1x1x8x128xf32>
    %276 = vector.shape_cast %275 : vector<1x1x1x1x8x128xf32> to vector<8x128xf32>
    %c0_338 = arith.constant 0 : index
    %c3_339 = arith.constant 3 : index
    %c0_340 = arith.constant 0 : index
    %c0_341 = arith.constant 0 : index
    %c0_342 = arith.constant 0 : index
    %c0_343 = arith.constant 0 : index
    %277 = vector.load %arg5[%c0_338, %c3_339, %c0_340, %c0_341, %c0_342, %c0_343] : memref<2x4x4x2x8x128xf32, #tpu.memory_space<vmem>>, vector<1x1x1x1x8x128xf32>
    %278 = vector.shape_cast %277 : vector<1x1x1x1x8x128xf32> to vector<8x128xf32>
    %c0_344 = arith.constant 0 : index
    %c1_345 = arith.constant 1 : index
    %c3_346 = arith.constant 3 : index
    %c0_347 = arith.constant 0 : index
    %c0_348 = arith.constant 0 : index
    %c0_349 = arith.constant 0 : index
    %279 = vector.load %arg5[%c0_344, %c1_345, %c3_346, %c0_347, %c0_348, %c0_349] : memref<2x4x4x2x8x128xf32, #tpu.memory_space<vmem>>, vector<1x1x1x1x8x128xf32>
    %280 = vector.shape_cast %279 : vector<1x1x1x1x8x128xf32> to vector<8x128xf32>
    %c0_350 = arith.constant 0 : index
    %c2_351 = arith.constant 2 : index
    %c2_352 = arith.constant 2 : index
    %c0_353 = arith.constant 0 : index
    %c0_354 = arith.constant 0 : index
    %c0_355 = arith.constant 0 : index
    %281 = vector.load %arg5[%c0_350, %c2_351, %c2_352, %c0_353, %c0_354, %c0_355] : memref<2x4x4x2x8x128xf32, #tpu.memory_space<vmem>>, vector<1x1x1x1x8x128xf32>
    %282 = vector.shape_cast %281 : vector<1x1x1x1x8x128xf32> to vector<8x128xf32>
    %c0_356 = arith.constant 0 : index
    %c3_357 = arith.constant 3 : index
    %c1_358 = arith.constant 1 : index
    %c0_359 = arith.constant 0 : index
    %c0_360 = arith.constant 0 : index
    %c0_361 = arith.constant 0 : index
    %283 = vector.load %arg5[%c0_356, %c3_357, %c1_358, %c0_359, %c0_360, %c0_361] : memref<2x4x4x2x8x128xf32, #tpu.memory_space<vmem>>, vector<1x1x1x1x8x128xf32>
    %284 = vector.shape_cast %283 : vector<1x1x1x1x8x128xf32> to vector<8x128xf32>
    %c0_362 = arith.constant 0 : index
    %c2_363 = arith.constant 2 : index
    %c3_364 = arith.constant 3 : index
    %c0_365 = arith.constant 0 : index
    %c0_366 = arith.constant 0 : index
    %c0_367 = arith.constant 0 : index
    %285 = vector.load %arg5[%c0_362, %c2_363, %c3_364, %c0_365, %c0_366, %c0_367] : memref<2x4x4x2x8x128xf32, #tpu.memory_space<vmem>>, vector<1x1x1x1x8x128xf32>
    %286 = vector.shape_cast %285 : vector<1x1x1x1x8x128xf32> to vector<8x128xf32>
    %c0_368 = arith.constant 0 : index
    %c3_369 = arith.constant 3 : index
    %c2_370 = arith.constant 2 : index
    %c0_371 = arith.constant 0 : index
    %c0_372 = arith.constant 0 : index
    %c0_373 = arith.constant 0 : index
    %287 = vector.load %arg5[%c0_368, %c3_369, %c2_370, %c0_371, %c0_372, %c0_373] : memref<2x4x4x2x8x128xf32, #tpu.memory_space<vmem>>, vector<1x1x1x1x8x128xf32>
    %288 = vector.shape_cast %287 : vector<1x1x1x1x8x128xf32> to vector<8x128xf32>
    %c0_374 = arith.constant 0 : index
    %c3_375 = arith.constant 3 : index
    %c3_376 = arith.constant 3 : index
    %c0_377 = arith.constant 0 : index
    %c0_378 = arith.constant 0 : index
    %c0_379 = arith.constant 0 : index
    %289 = vector.load %arg5[%c0_374, %c3_375, %c3_376, %c0_377, %c0_378, %c0_379] : memref<2x4x4x2x8x128xf32, #tpu.memory_space<vmem>>, vector<1x1x1x1x8x128xf32>
    %290 = vector.shape_cast %289 : vector<1x1x1x1x8x128xf32> to vector<8x128xf32>
    %c0_380 = arith.constant 0 : index
    %c0_381 = arith.constant 0 : index
    %c0_382 = arith.constant 0 : index
    %c1_383 = arith.constant 1 : index
    %c0_384 = arith.constant 0 : index
    %c0_385 = arith.constant 0 : index
    %291 = vector.load %arg5[%c0_380, %c0_381, %c0_382, %c1_383, %c0_384, %c0_385] : memref<2x4x4x2x8x128xf32, #tpu.memory_space<vmem>>, vector<1x1x1x1x8x128xf32>
    %292 = vector.shape_cast %291 : vector<1x1x1x1x8x128xf32> to vector<8x128xf32>
    %c0_386 = arith.constant 0 : index
    %c0_387 = arith.constant 0 : index
    %c1_388 = arith.constant 1 : index
    %c1_389 = arith.constant 1 : index
    %c0_390 = arith.constant 0 : index
    %c0_391 = arith.constant 0 : index
    %293 = vector.load %arg5[%c0_386, %c0_387, %c1_388, %c1_389, %c0_390, %c0_391] : memref<2x4x4x2x8x128xf32, #tpu.memory_space<vmem>>, vector<1x1x1x1x8x128xf32>
    %294 = vector.shape_cast %293 : vector<1x1x1x1x8x128xf32> to vector<8x128xf32>
    %c0_392 = arith.constant 0 : index
    %c1_393 = arith.constant 1 : index
    %c0_394 = arith.constant 0 : index
    %c1_395 = arith.constant 1 : index
    %c0_396 = arith.constant 0 : index
    %c0_397 = arith.constant 0 : index
    %295 = vector.load %arg5[%c0_392, %c1_393, %c0_394, %c1_395, %c0_396, %c0_397] : memref<2x4x4x2x8x128xf32, #tpu.memory_space<vmem>>, vector<1x1x1x1x8x128xf32>
    %296 = vector.shape_cast %295 : vector<1x1x1x1x8x128xf32> to vector<8x128xf32>
    %c0_398 = arith.constant 0 : index
    %c0_399 = arith.constant 0 : index
    %c2_400 = arith.constant 2 : index
    %c1_401 = arith.constant 1 : index
    %c0_402 = arith.constant 0 : index
    %c0_403 = arith.constant 0 : index
    %297 = vector.load %arg5[%c0_398, %c0_399, %c2_400, %c1_401, %c0_402, %c0_403] : memref<2x4x4x2x8x128xf32, #tpu.memory_space<vmem>>, vector<1x1x1x1x8x128xf32>
    %298 = vector.shape_cast %297 : vector<1x1x1x1x8x128xf32> to vector<8x128xf32>
    %c0_404 = arith.constant 0 : index
    %c1_405 = arith.constant 1 : index
    %c1_406 = arith.constant 1 : index
    %c1_407 = arith.constant 1 : index
    %c0_408 = arith.constant 0 : index
    %c0_409 = arith.constant 0 : index
    %299 = vector.load %arg5[%c0_404, %c1_405, %c1_406, %c1_407, %c0_408, %c0_409] : memref<2x4x4x2x8x128xf32, #tpu.memory_space<vmem>>, vector<1x1x1x1x8x128xf32>
    %300 = vector.shape_cast %299 : vector<1x1x1x1x8x128xf32> to vector<8x128xf32>
    %c0_410 = arith.constant 0 : index
    %c2_411 = arith.constant 2 : index
    %c0_412 = arith.constant 0 : index
    %c1_413 = arith.constant 1 : index
    %c0_414 = arith.constant 0 : index
    %c0_415 = arith.constant 0 : index
    %301 = vector.load %arg5[%c0_410, %c2_411, %c0_412, %c1_413, %c0_414, %c0_415] : memref<2x4x4x2x8x128xf32, #tpu.memory_space<vmem>>, vector<1x1x1x1x8x128xf32>
    %302 = vector.shape_cast %301 : vector<1x1x1x1x8x128xf32> to vector<8x128xf32>
    %c0_416 = arith.constant 0 : index
    %c0_417 = arith.constant 0 : index
    %c3_418 = arith.constant 3 : index
    %c1_419 = arith.constant 1 : index
    %c0_420 = arith.constant 0 : index
    %c0_421 = arith.constant 0 : index
    %303 = vector.load %arg5[%c0_416, %c0_417, %c3_418, %c1_419, %c0_420, %c0_421] : memref<2x4x4x2x8x128xf32, #tpu.memory_space<vmem>>, vector<1x1x1x1x8x128xf32>
    %304 = vector.shape_cast %303 : vector<1x1x1x1x8x128xf32> to vector<8x128xf32>
    %c0_422 = arith.constant 0 : index
    %c1_423 = arith.constant 1 : index
    %c2_424 = arith.constant 2 : index
    %c1_425 = arith.constant 1 : index
    %c0_426 = arith.constant 0 : index
    %c0_427 = arith.constant 0 : index
    %305 = vector.load %arg5[%c0_422, %c1_423, %c2_424, %c1_425, %c0_426, %c0_427] : memref<2x4x4x2x8x128xf32, #tpu.memory_space<vmem>>, vector<1x1x1x1x8x128xf32>
    %306 = vector.shape_cast %305 : vector<1x1x1x1x8x128xf32> to vector<8x128xf32>
    %c0_428 = arith.constant 0 : index
    %c2_429 = arith.constant 2 : index
    %c1_430 = arith.constant 1 : index
    %c1_431 = arith.constant 1 : index
    %c0_432 = arith.constant 0 : index
    %c0_433 = arith.constant 0 : index
    %307 = vector.load %arg5[%c0_428, %c2_429, %c1_430, %c1_431, %c0_432, %c0_433] : memref<2x4x4x2x8x128xf32, #tpu.memory_space<vmem>>, vector<1x1x1x1x8x128xf32>
    %308 = vector.shape_cast %307 : vector<1x1x1x1x8x128xf32> to vector<8x128xf32>
    %c0_434 = arith.constant 0 : index
    %c3_435 = arith.constant 3 : index
    %c0_436 = arith.constant 0 : index
    %c1_437 = arith.constant 1 : index
    %c0_438 = arith.constant 0 : index
    %c0_439 = arith.constant 0 : index
    %309 = vector.load %arg5[%c0_434, %c3_435, %c0_436, %c1_437, %c0_438, %c0_439] : memref<2x4x4x2x8x128xf32, #tpu.memory_space<vmem>>, vector<1x1x1x1x8x128xf32>
    %310 = vector.shape_cast %309 : vector<1x1x1x1x8x128xf32> to vector<8x128xf32>
    %c0_440 = arith.constant 0 : index
    %c1_441 = arith.constant 1 : index
    %c3_442 = arith.constant 3 : index
    %c1_443 = arith.constant 1 : index
    %c0_444 = arith.constant 0 : index
    %c0_445 = arith.constant 0 : index
    %311 = vector.load %arg5[%c0_440, %c1_441, %c3_442, %c1_443, %c0_444, %c0_445] : memref<2x4x4x2x8x128xf32, #tpu.memory_space<vmem>>, vector<1x1x1x1x8x128xf32>
    %312 = vector.shape_cast %311 : vector<1x1x1x1x8x128xf32> to vector<8x128xf32>
    %c0_446 = arith.constant 0 : index
    %c2_447 = arith.constant 2 : index
    %c2_448 = arith.constant 2 : index
    %c1_449 = arith.constant 1 : index
    %c0_450 = arith.constant 0 : index
    %c0_451 = arith.constant 0 : index
    %313 = vector.load %arg5[%c0_446, %c2_447, %c2_448, %c1_449, %c0_450, %c0_451] : memref<2x4x4x2x8x128xf32, #tpu.memory_space<vmem>>, vector<1x1x1x1x8x128xf32>
    %314 = vector.shape_cast %313 : vector<1x1x1x1x8x128xf32> to vector<8x128xf32>
    %c0_452 = arith.constant 0 : index
    %c3_453 = arith.constant 3 : index
    %c1_454 = arith.constant 1 : index
    %c1_455 = arith.constant 1 : index
    %c0_456 = arith.constant 0 : index
    %c0_457 = arith.constant 0 : index
    %315 = vector.load %arg5[%c0_452, %c3_453, %c1_454, %c1_455, %c0_456, %c0_457] : memref<2x4x4x2x8x128xf32, #tpu.memory_space<vmem>>, vector<1x1x1x1x8x128xf32>
    %316 = vector.shape_cast %315 : vector<1x1x1x1x8x128xf32> to vector<8x128xf32>
    %c0_458 = arith.constant 0 : index
    %c2_459 = arith.constant 2 : index
    %c3_460 = arith.constant 3 : index
    %c1_461 = arith.constant 1 : index
    %c0_462 = arith.constant 0 : index
    %c0_463 = arith.constant 0 : index
    %317 = vector.load %arg5[%c0_458, %c2_459, %c3_460, %c1_461, %c0_462, %c0_463] : memref<2x4x4x2x8x128xf32, #tpu.memory_space<vmem>>, vector<1x1x1x1x8x128xf32>
    %318 = vector.shape_cast %317 : vector<1x1x1x1x8x128xf32> to vector<8x128xf32>
    %c0_464 = arith.constant 0 : index
    %c3_465 = arith.constant 3 : index
    %c2_466 = arith.constant 2 : index
    %c1_467 = arith.constant 1 : index
    %c0_468 = arith.constant 0 : index
    %c0_469 = arith.constant 0 : index
    %319 = vector.load %arg5[%c0_464, %c3_465, %c2_466, %c1_467, %c0_468, %c0_469] : memref<2x4x4x2x8x128xf32, #tpu.memory_space<vmem>>, vector<1x1x1x1x8x128xf32>
    %320 = vector.shape_cast %319 : vector<1x1x1x1x8x128xf32> to vector<8x128xf32>
    %c0_470 = arith.constant 0 : index
    %c3_471 = arith.constant 3 : index
    %c3_472 = arith.constant 3 : index
    %c1_473 = arith.constant 1 : index
    %c0_474 = arith.constant 0 : index
    %c0_475 = arith.constant 0 : index
    %321 = vector.load %arg5[%c0_470, %c3_471, %c3_472, %c1_473, %c0_474, %c0_475] : memref<2x4x4x2x8x128xf32, #tpu.memory_space<vmem>>, vector<1x1x1x1x8x128xf32>
    %322 = vector.shape_cast %321 : vector<1x1x1x1x8x128xf32> to vector<8x128xf32>
    %323 = tpu.concatenate %260, %262, %264, %266, %268, %270, %272, %274, %276, %278, %280, %282, %284, %286, %288, %290 in 0 : vector<8x128xf32>, vector<8x128xf32>, vector<8x128xf32>, vector<8x128xf32>, vector<8x128xf32>, vector<8x128xf32>, vector<8x128xf32>, vector<8x128xf32>, vector<8x128xf32>, vector<8x128xf32>, vector<8x128xf32>, vector<8x128xf32>, vector<8x128xf32>, vector<8x128xf32>, vector<8x128xf32>, vector<8x128xf32> -> vector<128x128xf32>
    %324 = tpu.concatenate %292, %294, %296, %298, %300, %302, %304, %306, %308, %310, %312, %314, %316, %318, %320, %322 in 0 : vector<8x128xf32>, vector<8x128xf32>, vector<8x128xf32>, vector<8x128xf32>, vector<8x128xf32>, vector<8x128xf32>, vector<8x128xf32>, vector<8x128xf32>, vector<8x128xf32>, vector<8x128xf32>, vector<8x128xf32>, vector<8x128xf32>, vector<8x128xf32>, vector<8x128xf32>, vector<8x128xf32>, vector<8x128xf32> -> vector<128x128xf32>
    %325 = tpu.concatenate %323, %324 in 0 : vector<128x128xf32>, vector<128x128xf32> -> vector<256x128xf32>
    %326 = arith.truncf %325 : vector<256x128xf32> to vector<256x128xbf16>
    %cst_476 = arith.constant dense<0.000000e+00> : vector<256x128xf32>
    %327 = tpu.matmul %326, %252, %cst_476 {dimension_numbers = #tpu.dot_dimension_numbers<[1], [0], [0], [1], [0, 0, 1, 1], [], []>} : vector<256x128xbf16>, vector<128x128xbf16>, vector<256x128xf32> -> vector<256x128xf32>
    %328 = vector.broadcast %258 : vector<1x128xf32> to vector<256x128xf32>
    %329 = arith.addf %327, %328 : vector<256x128xf32>
    %c0_477 = arith.constant 0 : index
    %c0_478 = arith.constant 0 : index
    %330 = vector.load %arg6[%c0_477, %c0_478] : memref<256x128xf32, #tpu.memory_space<vmem>>, vector<256x128xf32>
    tpu.vector_store %arg6[%c0_477, %c0_478], %329 {strides = array<i32>} : memref<256x128xf32, #tpu.memory_space<vmem>>, vector<256x128xf32>,
    %c0_479 = arith.constant 0 : index
    %c0_480 = arith.constant 0 : index
    %331 = vector.load %arg6[%c0_479, %c0_480] : memref<256x128xf32, #tpu.memory_space<vmem>>, vector<8x128xf32>
    %c128 = arith.constant 128 : index
    %c0_481 = arith.constant 0 : index
    %332 = vector.load %arg6[%c128, %c0_481] : memref<256x128xf32, #tpu.memory_space<vmem>>, vector<8x128xf32>
    %333 = math.tanh %331 : vector<8x128xf32>
    %334 = math.tanh %332 : vector<8x128xf32>
    %c1_482 = arith.constant 1 : index
    %c0_483 = arith.constant 0 : index
    %c0_484 = arith.constant 0 : index
    %c0_485 = arith.constant 0 : index
    %c0_486 = arith.constant 0 : index
    %c0_487 = arith.constant 0 : index
    %335 = vector.load %arg5[%c1_482, %c0_483, %c0_484, %c0_485, %c0_486, %c0_487] : memref<2x4x4x2x8x128xf32, #tpu.memory_space<vmem>>, vector<1x1x1x1x8x128xf32>
    %336 = vector.shape_cast %335 : vector<1x1x1x1x8x128xf32> to vector<8x128xf32>
    %337 = vector.shape_cast %333 : vector<8x128xf32> to vector<1x1x1x1x8x128xf32>
    tpu.vector_store %arg5[%c1_482, %c0_483, %c0_484, %c0_485, %c0_486, %c0_487], %337 {strides = array<i32>} : memref<2x4x4x2x8x128xf32, #tpu.memory_space<vmem>>, vector<1x1x1x1x8x128xf32>,
    %c1_488 = arith.constant 1 : index
    %c0_489 = arith.constant 0 : index
    %c0_490 = arith.constant 0 : index
    %c1_491 = arith.constant 1 : index
    %c0_492 = arith.constant 0 : index
    %c0_493 = arith.constant 0 : index
    %338 = vector.load %arg5[%c1_488, %c0_489, %c0_490, %c1_491, %c0_492, %c0_493] : memref<2x4x4x2x8x128xf32, #tpu.memory_space<vmem>>, vector<1x1x1x1x8x128xf32>
    %339 = vector.shape_cast %338 : vector<1x1x1x1x8x128xf32> to vector<8x128xf32>
    %340 = vector.shape_cast %334 : vector<8x128xf32> to vector<1x1x1x1x8x128xf32>
    tpu.vector_store %arg5[%c1_488, %c0_489, %c0_490, %c1_491, %c0_492, %c0_493], %340 {strides = array<i32>} : memref<2x4x4x2x8x128xf32, #tpu.memory_space<vmem>>, vector<1x1x1x1x8x128xf32>,
    %c8_494 = arith.constant 8 : index
    %c0_495 = arith.constant 0 : index
    %341 = vector.load %arg6[%c8_494, %c0_495] : memref<256x128xf32, #tpu.memory_space<vmem>>, vector<16x128xf32>
    %c136 = arith.constant 136 : index
    %c0_496 = arith.constant 0 : index
    %342 = vector.load %arg6[%c136, %c0_496] : memref<256x128xf32, #tpu.memory_space<vmem>>, vector<16x128xf32>
    %343 = tpu.concatenate %0, %333 in 0 : vector<8x128xf32>, vector<8x128xf32> -> vector<16x128xf32>
    %344 = tpu.concatenate %333, %0 in 0 : vector<8x128xf32>, vector<8x128xf32> -> vector<16x128xf32>
    %345 = arith.truncf %343 : vector<16x128xf32> to vector<16x128xbf16>
    %cst_497 = arith.constant dense<0.000000e+00> : vector<16x128xf32>
    %346 = tpu.matmul %345, %255, %cst_497 {dimension_numbers = #tpu.dot_dimension_numbers<[1], [0], [0], [1], [0, 0, 1, 1], [], []>} : vector<16x128xbf16>, vector<128x128xbf16>, vector<16x128xf32> -> vector<16x128xf32>
    %347 = arith.truncf %344 : vector<16x128xf32> to vector<16x128xbf16>
    %cst_498 = arith.constant dense<0.000000e+00> : vector<16x128xf32>
    %348 = tpu.matmul %347, %256, %cst_498 {dimension_numbers = #tpu.dot_dimension_numbers<[1], [0], [0], [1], [0, 0, 1, 1], [], []>} : vector<16x128xbf16>, vector<128x128xbf16>, vector<16x128xf32> -> vector<16x128xf32>
    %349 = arith.addf %346, %348 : vector<16x128xf32>
    %350 = arith.addf %341, %349 : vector<16x128xf32>
    %351 = arith.addf %342, %349 : vector<16x128xf32>
    %352 = math.tanh %350 : vector<16x128xf32>
    %353 = math.tanh %351 : vector<16x128xf32>
    %354 = vector.extract_strided_slice %352 {offsets = [0, 0], sizes = [8, 128], strides = [1, 1]} : vector<16x128xf32> to vector<8x128xf32>
    %c1_499 = arith.constant 1 : index
    %c0_500 = arith.constant 0 : index
    %c1_501 = arith.constant 1 : index
    %c0_502 = arith.constant 0 : index
    %c0_503 = arith.constant 0 : index
    %c0_504 = arith.constant 0 : index
    %355 = vector.load %arg5[%c1_499, %c0_500, %c1_501, %c0_502, %c0_503, %c0_504] : memref<2x4x4x2x8x128xf32, #tpu.memory_space<vmem>>, vector<1x1x1x1x8x128xf32>
    %356 = vector.shape_cast %355 : vector<1x1x1x1x8x128xf32> to vector<8x128xf32>
    %357 = vector.shape_cast %354 : vector<8x128xf32> to vector<1x1x1x1x8x128xf32>
    tpu.vector_store %arg5[%c1_499, %c0_500, %c1_501, %c0_502, %c0_503, %c0_504], %357 {strides = array<i32>} : memref<2x4x4x2x8x128xf32, #tpu.memory_space<vmem>>, vector<1x1x1x1x8x128xf32>,
    %358 = vector.extract_strided_slice %353 {offsets = [0, 0], sizes = [8, 128], strides = [1, 1]} : vector<16x128xf32> to vector<8x128xf32>
    %c1_505 = arith.constant 1 : index
    %c0_506 = arith.constant 0 : index
    %c1_507 = arith.constant 1 : index
    %c1_508 = arith.constant 1 : index
    %c0_509 = arith.constant 0 : index
    %c0_510 = arith.constant 0 : index
    %359 = vector.load %arg5[%c1_505, %c0_506, %c1_507, %c1_508, %c0_509, %c0_510] : memref<2x4x4x2x8x128xf32, #tpu.memory_space<vmem>>, vector<1x1x1x1x8x128xf32>
    %360 = vector.shape_cast %359 : vector<1x1x1x1x8x128xf32> to vector<8x128xf32>
    %361 = vector.shape_cast %358 : vector<8x128xf32> to vector<1x1x1x1x8x128xf32>
    tpu.vector_store %arg5[%c1_505, %c0_506, %c1_507, %c1_508, %c0_509, %c0_510], %361 {strides = array<i32>} : memref<2x4x4x2x8x128xf32, #tpu.memory_space<vmem>>, vector<1x1x1x1x8x128xf32>,
    %362 = vector.extract_strided_slice %352 {offsets = [8, 0], sizes = [8, 128], strides = [1, 1]} : vector<16x128xf32> to vector<8x128xf32>
    %c1_511 = arith.constant 1 : index
    %c1_512 = arith.constant 1 : index
    %c0_513 = arith.constant 0 : index
    %c0_514 = arith.constant 0 : index
    %c0_515 = arith.constant 0 : index
    %c0_516 = arith.constant 0 : index
    %363 = vector.load %arg5[%c1_511, %c1_512, %c0_513, %c0_514, %c0_515, %c0_516] : memref<2x4x4x2x8x128xf32, #tpu.memory_space<vmem>>, vector<1x1x1x1x8x128xf32>
    %364 = vector.shape_cast %363 : vector<1x1x1x1x8x128xf32> to vector<8x128xf32>
    %365 = vector.shape_cast %362 : vector<8x128xf32> to vector<1x1x1x1x8x128xf32>
    tpu.vector_store %arg5[%c1_511, %c1_512, %c0_513, %c0_514, %c0_515, %c0_516], %365 {strides = array<i32>} : memref<2x4x4x2x8x128xf32, #tpu.memory_space<vmem>>, vector<1x1x1x1x8x128xf32>,
    %366 = vector.extract_strided_slice %353 {offsets = [8, 0], sizes = [8, 128], strides = [1, 1]} : vector<16x128xf32> to vector<8x128xf32>
    %c1_517 = arith.constant 1 : index
    %c1_518 = arith.constant 1 : index
    %c0_519 = arith.constant 0 : index
    %c1_520 = arith.constant 1 : index
    %c0_521 = arith.constant 0 : index
    %c0_522 = arith.constant 0 : index
    %367 = vector.load %arg5[%c1_517, %c1_518, %c0_519, %c1_520, %c0_521, %c0_522] : memref<2x4x4x2x8x128xf32, #tpu.memory_space<vmem>>, vector<1x1x1x1x8x128xf32>
    %368 = vector.shape_cast %367 : vector<1x1x1x1x8x128xf32> to vector<8x128xf32>
    %369 = vector.shape_cast %366 : vector<8x128xf32> to vector<1x1x1x1x8x128xf32>
    tpu.vector_store %arg5[%c1_517, %c1_518, %c0_519, %c1_520, %c0_521, %c0_522], %369 {strides = array<i32>} : memref<2x4x4x2x8x128xf32, #tpu.memory_space<vmem>>, vector<1x1x1x1x8x128xf32>,
    %c24_523 = arith.constant 24 : index
    %c0_524 = arith.constant 0 : index
    %370 = vector.load %arg6[%c24_523, %c0_524] : memref<256x128xf32, #tpu.memory_space<vmem>>, vector<24x128xf32>
    %c152 = arith.constant 152 : index
    %c0_525 = arith.constant 0 : index
    %371 = vector.load %arg6[%c152, %c0_525] : memref<256x128xf32, #tpu.memory_space<vmem>>, vector<24x128xf32>
    %372 = tpu.concatenate %0, %352 in 0 : vector<8x128xf32>, vector<16x128xf32> -> vector<24x128xf32>
    %373 = tpu.concatenate %352, %0 in 0 : vector<16x128xf32>, vector<8x128xf32> -> vector<24x128xf32>
    %374 = arith.truncf %372 : vector<24x128xf32> to vector<24x128xbf16>
    %cst_526 = arith.constant dense<0.000000e+00> : vector<24x128xf32>
    %375 = tpu.matmul %374, %255, %cst_526 {dimension_numbers = #tpu.dot_dimension_numbers<[1], [0], [0], [1], [0, 0, 1, 1], [], []>} : vector<24x128xbf16>, vector<128x128xbf16>, vector<24x128xf32> -> vector<24x128xf32>
    %376 = arith.truncf %373 : vector<24x128xf32> to vector<24x128xbf16>
    %cst_527 = arith.constant dense<0.000000e+00> : vector<24x128xf32>
    %377 = tpu.matmul %376, %256, %cst_527 {dimension_numbers = #tpu.dot_dimension_numbers<[1], [0], [0], [1], [0, 0, 1, 1], [], []>} : vector<24x128xbf16>, vector<128x128xbf16>, vector<24x128xf32> -> vector<24x128xf32>
    %378 = arith.addf %375, %377 : vector<24x128xf32>
    %379 = arith.addf %370, %378 : vector<24x128xf32>
    %380 = arith.addf %371, %378 : vector<24x128xf32>
    %381 = math.tanh %379 : vector<24x128xf32>
    %382 = math.tanh %380 : vector<24x128xf32>
    %383 = vector.extract_strided_slice %381 {offsets = [0, 0], sizes = [8, 128], strides = [1, 1]} : vector<24x128xf32> to vector<8x128xf32>
    %c1_528 = arith.constant 1 : index
    %c0_529 = arith.constant 0 : index
    %c2_530 = arith.constant 2 : index
    %c0_531 = arith.constant 0 : index
    %c0_532 = arith.constant 0 : index
    %c0_533 = arith.constant 0 : index
    %384 = vector.load %arg5[%c1_528, %c0_529, %c2_530, %c0_531, %c0_532, %c0_533] : memref<2x4x4x2x8x128xf32, #tpu.memory_space<vmem>>, vector<1x1x1x1x8x128xf32>
    %385 = vector.shape_cast %384 : vector<1x1x1x1x8x128xf32> to vector<8x128xf32>
    %386 = vector.shape_cast %383 : vector<8x128xf32> to vector<1x1x1x1x8x128xf32>
    tpu.vector_store %arg5[%c1_528, %c0_529, %c2_530, %c0_531, %c0_532, %c0_533], %386 {strides = array<i32>} : memref<2x4x4x2x8x128xf32, #tpu.memory_space<vmem>>, vector<1x1x1x1x8x128xf32>,
    %387 = vector.extract_strided_slice %382 {offsets = [0, 0], sizes = [8, 128], strides = [1, 1]} : vector<24x128xf32> to vector<8x128xf32>
    %c1_534 = arith.constant 1 : index
    %c0_535 = arith.constant 0 : index
    %c2_536 = arith.constant 2 : index
    %c1_537 = arith.constant 1 : index
    %c0_538 = arith.constant 0 : index
    %c0_539 = arith.constant 0 : index
    %388 = vector.load %arg5[%c1_534, %c0_535, %c2_536, %c1_537, %c0_538, %c0_539] : memref<2x4x4x2x8x128xf32, #tpu.memory_space<vmem>>, vector<1x1x1x1x8x128xf32>
    %389 = vector.shape_cast %388 : vector<1x1x1x1x8x128xf32> to vector<8x128xf32>
    %390 = vector.shape_cast %387 : vector<8x128xf32> to vector<1x1x1x1x8x128xf32>
    tpu.vector_store %arg5[%c1_534, %c0_535, %c2_536, %c1_537, %c0_538, %c0_539], %390 {strides = array<i32>} : memref<2x4x4x2x8x128xf32, #tpu.memory_space<vmem>>, vector<1x1x1x1x8x128xf32>,
    %391 = vector.extract_strided_slice %381 {offsets = [8, 0], sizes = [8, 128], strides = [1, 1]} : vector<24x128xf32> to vector<8x128xf32>
    %c1_540 = arith.constant 1 : index
    %c1_541 = arith.constant 1 : index
    %c1_542 = arith.constant 1 : index
    %c0_543 = arith.constant 0 : index
    %c0_544 = arith.constant 0 : index
    %c0_545 = arith.constant 0 : index
    %392 = vector.load %arg5[%c1_540, %c1_541, %c1_542, %c0_543, %c0_544, %c0_545] : memref<2x4x4x2x8x128xf32, #tpu.memory_space<vmem>>, vector<1x1x1x1x8x128xf32>
    %393 = vector.shape_cast %392 : vector<1x1x1x1x8x128xf32> to vector<8x128xf32>
    %394 = vector.shape_cast %391 : vector<8x128xf32> to vector<1x1x1x1x8x128xf32>
    tpu.vector_store %arg5[%c1_540, %c1_541, %c1_542, %c0_543, %c0_544, %c0_545], %394 {strides = array<i32>} : memref<2x4x4x2x8x128xf32, #tpu.memory_space<vmem>>, vector<1x1x1x1x8x128xf32>,
    %395 = vector.extract_strided_slice %382 {offsets = [8, 0], sizes = [8, 128], strides = [1, 1]} : vector<24x128xf32> to vector<8x128xf32>
    %c1_546 = arith.constant 1 : index
    %c1_547 = arith.constant 1 : index
    %c1_548 = arith.constant 1 : index
    %c1_549 = arith.constant 1 : index
    %c0_550 = arith.constant 0 : index
    %c0_551 = arith.constant 0 : index
    %396 = vector.load %arg5[%c1_546, %c1_547, %c1_548, %c1_549, %c0_550, %c0_551] : memref<2x4x4x2x8x128xf32, #tpu.memory_space<vmem>>, vector<1x1x1x1x8x128xf32>
    %397 = vector.shape_cast %396 : vector<1x1x1x1x8x128xf32> to vector<8x128xf32>
    %398 = vector.shape_cast %395 : vector<8x128xf32> to vector<1x1x1x1x8x128xf32>
    tpu.vector_store %arg5[%c1_546, %c1_547, %c1_548, %c1_549, %c0_550, %c0_551], %398 {strides = array<i32>} : memref<2x4x4x2x8x128xf32, #tpu.memory_space<vmem>>, vector<1x1x1x1x8x128xf32>,
    %399 = vector.extract_strided_slice %381 {offsets = [16, 0], sizes = [8, 128], strides = [1, 1]} : vector<24x128xf32> to vector<8x128xf32>
    %c1_552 = arith.constant 1 : index
    %c2_553 = arith.constant 2 : index
    %c0_554 = arith.constant 0 : index
    %c0_555 = arith.constant 0 : index
    %c0_556 = arith.constant 0 : index
    %c0_557 = arith.constant 0 : index
    %400 = vector.load %arg5[%c1_552, %c2_553, %c0_554, %c0_555, %c0_556, %c0_557] : memref<2x4x4x2x8x128xf32, #tpu.memory_space<vmem>>, vector<1x1x1x1x8x128xf32>
    %401 = vector.shape_cast %400 : vector<1x1x1x1x8x128xf32> to vector<8x128xf32>
    %402 = vector.shape_cast %399 : vector<8x128xf32> to vector<1x1x1x1x8x128xf32>
    tpu.vector_store %arg5[%c1_552, %c2_553, %c0_554, %c0_555, %c0_556, %c0_557], %402 {strides = array<i32>} : memref<2x4x4x2x8x128xf32, #tpu.memory_space<vmem>>, vector<1x1x1x1x8x128xf32>,
    %403 = vector.extract_strided_slice %382 {offsets = [16, 0], sizes = [8, 128], strides = [1, 1]} : vector<24x128xf32> to vector<8x128xf32>
    %c1_558 = arith.constant 1 : index
    %c2_559 = arith.constant 2 : index
    %c0_560 = arith.constant 0 : index
    %c1_561 = arith.constant 1 : index
    %c0_562 = arith.constant 0 : index
    %c0_563 = arith.constant 0 : index
    %404 = vector.load %arg5[%c1_558, %c2_559, %c0_560, %c1_561, %c0_562, %c0_563] : memref<2x4x4x2x8x128xf32, #tpu.memory_space<vmem>>, vector<1x1x1x1x8x128xf32>
    %405 = vector.shape_cast %404 : vector<1x1x1x1x8x128xf32> to vector<8x128xf32>
    %406 = vector.shape_cast %403 : vector<8x128xf32> to vector<1x1x1x1x8x128xf32>
    tpu.vector_store %arg5[%c1_558, %c2_559, %c0_560, %c1_561, %c0_562, %c0_563], %406 {strides = array<i32>} : memref<2x4x4x2x8x128xf32, #tpu.memory_space<vmem>>, vector<1x1x1x1x8x128xf32>,
    %c48_564 = arith.constant 48 : index
    %c0_565 = arith.constant 0 : index
    %407 = vector.load %arg6[%c48_564, %c0_565] : memref<256x128xf32, #tpu.memory_space<vmem>>, vector<32x128xf32>
    %c176 = arith.constant 176 : index
    %c0_566 = arith.constant 0 : index
    %408 = vector.load %arg6[%c176, %c0_566] : memref<256x128xf32, #tpu.memory_space<vmem>>, vector<32x128xf32>
    %409 = tpu.concatenate %0, %381 in 0 : vector<8x128xf32>, vector<24x128xf32> -> vector<32x128xf32>
    %410 = tpu.concatenate %381, %0 in 0 : vector<24x128xf32>, vector<8x128xf32> -> vector<32x128xf32>
    %411 = arith.truncf %409 : vector<32x128xf32> to vector<32x128xbf16>
    %cst_567 = arith.constant dense<0.000000e+00> : vector<32x128xf32>
    %412 = tpu.matmul %411, %255, %cst_567 {dimension_numbers = #tpu.dot_dimension_numbers<[1], [0], [0], [1], [0, 0, 1, 1], [], []>} : vector<32x128xbf16>, vector<128x128xbf16>, vector<32x128xf32> -> vector<32x128xf32>
    %413 = arith.truncf %410 : vector<32x128xf32> to vector<32x128xbf16>
    %cst_568 = arith.constant dense<0.000000e+00> : vector<32x128xf32>
    %414 = tpu.matmul %413, %256, %cst_568 {dimension_numbers = #tpu.dot_dimension_numbers<[1], [0], [0], [1], [0, 0, 1, 1], [], []>} : vector<32x128xbf16>, vector<128x128xbf16>, vector<32x128xf32> -> vector<32x128xf32>
    %415 = arith.addf %412, %414 : vector<32x128xf32>
    %416 = arith.addf %407, %415 : vector<32x128xf32>
    %417 = arith.addf %408, %415 : vector<32x128xf32>
    %418 = math.tanh %416 : vector<32x128xf32>
    %419 = math.tanh %417 : vector<32x128xf32>
    %420 = vector.extract_strided_slice %418 {offsets = [0, 0], sizes = [8, 128], strides = [1, 1]} : vector<32x128xf32> to vector<8x128xf32>
    %c1_569 = arith.constant 1 : index
    %c0_570 = arith.constant 0 : index
    %c3_571 = arith.constant 3 : index
    %c0_572 = arith.constant 0 : index
    %c0_573 = arith.constant 0 : index
    %c0_574 = arith.constant 0 : index
    %421 = vector.load %arg5[%c1_569, %c0_570, %c3_571, %c0_572, %c0_573, %c0_574] : memref<2x4x4x2x8x128xf32, #tpu.memory_space<vmem>>, vector<1x1x1x1x8x128xf32>
    %422 = vector.shape_cast %421 : vector<1x1x1x1x8x128xf32> to vector<8x128xf32>
    %423 = vector.shape_cast %420 : vector<8x128xf32> to vector<1x1x1x1x8x128xf32>
    tpu.vector_store %arg5[%c1_569, %c0_570, %c3_571, %c0_572, %c0_573, %c0_574], %423 {strides = array<i32>} : memref<2x4x4x2x8x128xf32, #tpu.memory_space<vmem>>, vector<1x1x1x1x8x128xf32>,
    %424 = vector.extract_strided_slice %419 {offsets = [0, 0], sizes = [8, 128], strides = [1, 1]} : vector<32x128xf32> to vector<8x128xf32>
    %c1_575 = arith.constant 1 : index
    %c0_576 = arith.constant 0 : index
    %c3_577 = arith.constant 3 : index
    %c1_578 = arith.constant 1 : index
    %c0_579 = arith.constant 0 : index
    %c0_580 = arith.constant 0 : index
    %425 = vector.load %arg5[%c1_575, %c0_576, %c3_577, %c1_578, %c0_579, %c0_580] : memref<2x4x4x2x8x128xf32, #tpu.memory_space<vmem>>, vector<1x1x1x1x8x128xf32>
    %426 = vector.shape_cast %425 : vector<1x1x1x1x8x128xf32> to vector<8x128xf32>
    %427 = vector.shape_cast %424 : vector<8x128xf32> to vector<1x1x1x1x8x128xf32>
    tpu.vector_store %arg5[%c1_575, %c0_576, %c3_577, %c1_578, %c0_579, %c0_580], %427 {strides = array<i32>} : memref<2x4x4x2x8x128xf32, #tpu.memory_space<vmem>>, vector<1x1x1x1x8x128xf32>,
    %428 = vector.extract_strided_slice %418 {offsets = [8, 0], sizes = [8, 128], strides = [1, 1]} : vector<32x128xf32> to vector<8x128xf32>
    %c1_581 = arith.constant 1 : index
    %c1_582 = arith.constant 1 : index
    %c2_583 = arith.constant 2 : index
    %c0_584 = arith.constant 0 : index
    %c0_585 = arith.constant 0 : index
    %c0_586 = arith.constant 0 : index
    %429 = vector.load %arg5[%c1_581, %c1_582, %c2_583, %c0_584, %c0_585, %c0_586] : memref<2x4x4x2x8x128xf32, #tpu.memory_space<vmem>>, vector<1x1x1x1x8x128xf32>
    %430 = vector.shape_cast %429 : vector<1x1x1x1x8x128xf32> to vector<8x128xf32>
    %431 = vector.shape_cast %428 : vector<8x128xf32> to vector<1x1x1x1x8x128xf32>
    tpu.vector_store %arg5[%c1_581, %c1_582, %c2_583, %c0_584, %c0_585, %c0_586], %431 {strides = array<i32>} : memref<2x4x4x2x8x128xf32, #tpu.memory_space<vmem>>, vector<1x1x1x1x8x128xf32>,
    %432 = vector.extract_strided_slice %419 {offsets = [8, 0], sizes = [8, 128], strides = [1, 1]} : vector<32x128xf32> to vector<8x128xf32>
    %c1_587 = arith.constant 1 : index
    %c1_588 = arith.constant 1 : index
    %c2_589 = arith.constant 2 : index
    %c1_590 = arith.constant 1 : index
    %c0_591 = arith.constant 0 : index
    %c0_592 = arith.constant 0 : index
    %433 = vector.load %arg5[%c1_587, %c1_588, %c2_589, %c1_590, %c0_591, %c0_592] : memref<2x4x4x2x8x128xf32, #tpu.memory_space<vmem>>, vector<1x1x1x1x8x128xf32>
    %434 = vector.shape_cast %433 : vector<1x1x1x1x8x128xf32> to vector<8x128xf32>
    %435 = vector.shape_cast %432 : vector<8x128xf32> to vector<1x1x1x1x8x128xf32>
    tpu.vector_store %arg5[%c1_587, %c1_588, %c2_589, %c1_590, %c0_591, %c0_592], %435 {strides = array<i32>} : memref<2x4x4x2x8x128xf32, #tpu.memory_space<vmem>>, vector<1x1x1x1x8x128xf32>,
    %436 = vector.extract_strided_slice %418 {offsets = [16, 0], sizes = [8, 128], strides = [1, 1]} : vector<32x128xf32> to vector<8x128xf32>
    %c1_593 = arith.constant 1 : index
    %c2_594 = arith.constant 2 : index
    %c1_595 = arith.constant 1 : index
    %c0_596 = arith.constant 0 : index
    %c0_597 = arith.constant 0 : index
    %c0_598 = arith.constant 0 : index
    %437 = vector.load %arg5[%c1_593, %c2_594, %c1_595, %c0_596, %c0_597, %c0_598] : memref<2x4x4x2x8x128xf32, #tpu.memory_space<vmem>>, vector<1x1x1x1x8x128xf32>
    %438 = vector.shape_cast %437 : vector<1x1x1x1x8x128xf32> to vector<8x128xf32>
    %439 = vector.shape_cast %436 : vector<8x128xf32> to vector<1x1x1x1x8x128xf32>
    tpu.vector_store %arg5[%c1_593, %c2_594, %c1_595, %c0_596, %c0_597, %c0_598], %439 {strides = array<i32>} : memref<2x4x4x2x8x128xf32, #tpu.memory_space<vmem>>, vector<1x1x1x1x8x128xf32>,
    %440 = vector.extract_strided_slice %419 {offsets = [16, 0], sizes = [8, 128], strides = [1, 1]} : vector<32x128xf32> to vector<8x128xf32>
    %c1_599 = arith.constant 1 : index
    %c2_600 = arith.constant 2 : index
    %c1_601 = arith.constant 1 : index
    %c1_602 = arith.constant 1 : index
    %c0_603 = arith.constant 0 : index
    %c0_604 = arith.constant 0 : index
    %441 = vector.load %arg5[%c1_599, %c2_600, %c1_601, %c1_602, %c0_603, %c0_604] : memref<2x4x4x2x8x128xf32, #tpu.memory_space<vmem>>, vector<1x1x1x1x8x128xf32>
    %442 = vector.shape_cast %441 : vector<1x1x1x1x8x128xf32> to vector<8x128xf32>
    %443 = vector.shape_cast %440 : vector<8x128xf32> to vector<1x1x1x1x8x128xf32>
    tpu.vector_store %arg5[%c1_599, %c2_600, %c1_601, %c1_602, %c0_603, %c0_604], %443 {strides = array<i32>} : memref<2x4x4x2x8x128xf32, #tpu.memory_space<vmem>>, vector<1x1x1x1x8x128xf32>,
    %444 = vector.extract_strided_slice %418 {offsets = [24, 0], sizes = [8, 128], strides = [1, 1]} : vector<32x128xf32> to vector<8x128xf32>
    %c1_605 = arith.constant 1 : index
    %c3_606 = arith.constant 3 : index
    %c0_607 = arith.constant 0 : index
    %c0_608 = arith.constant 0 : index
    %c0_609 = arith.constant 0 : index
    %c0_610 = arith.constant 0 : index
    %445 = vector.load %arg5[%c1_605, %c3_606, %c0_607, %c0_608, %c0_609, %c0_610] : memref<2x4x4x2x8x128xf32, #tpu.memory_space<vmem>>, vector<1x1x1x1x8x128xf32>
    %446 = vector.shape_cast %445 : vector<1x1x1x1x8x128xf32> to vector<8x128xf32>
    %447 = vector.shape_cast %444 : vector<8x128xf32> to vector<1x1x1x1x8x128xf32>
    tpu.vector_store %arg5[%c1_605, %c3_606, %c0_607, %c0_608, %c0_609, %c0_610], %447 {strides = array<i32>} : memref<2x4x4x2x8x128xf32, #tpu.memory_space<vmem>>, vector<1x1x1x1x8x128xf32>,
    %448 = vector.extract_strided_slice %419 {offsets = [24, 0], sizes = [8, 128], strides = [1, 1]} : vector<32x128xf32> to vector<8x128xf32>
    %c1_611 = arith.constant 1 : index
    %c3_612 = arith.constant 3 : index
    %c0_613 = arith.constant 0 : index
    %c1_614 = arith.constant 1 : index
    %c0_615 = arith.constant 0 : index
    %c0_616 = arith.constant 0 : index
    %449 = vector.load %arg5[%c1_611, %c3_612, %c0_613, %c1_614, %c0_615, %c0_616] : memref<2x4x4x2x8x128xf32, #tpu.memory_space<vmem>>, vector<1x1x1x1x8x128xf32>
    %450 = vector.shape_cast %449 : vector<1x1x1x1x8x128xf32> to vector<8x128xf32>
    %451 = vector.shape_cast %448 : vector<8x128xf32> to vector<1x1x1x1x8x128xf32>
    tpu.vector_store %arg5[%c1_611, %c3_612, %c0_613, %c1_614, %c0_615, %c0_616], %451 {strides = array<i32>} : memref<2x4x4x2x8x128xf32, #tpu.memory_space<vmem>>, vector<1x1x1x1x8x128xf32>,
    %c80 = arith.constant 80 : index
    %c0_617 = arith.constant 0 : index
    %452 = vector.load %arg6[%c80, %c0_617] : memref<256x128xf32, #tpu.memory_space<vmem>>, vector<24x128xf32>
    %c208 = arith.constant 208 : index
    %c0_618 = arith.constant 0 : index
    %453 = vector.load %arg6[%c208, %c0_618] : memref<256x128xf32, #tpu.memory_space<vmem>>, vector<24x128xf32>
    %454 = vector.extract_strided_slice %418 {offsets = [0, 0], sizes = [24, 128], strides = [1, 1]} : vector<32x128xf32> to vector<24x128xf32>
    %455 = vector.extract_strided_slice %418 {offsets = [8, 0], sizes = [24, 128], strides = [1, 1]} : vector<32x128xf32> to vector<24x128xf32>
    %456 = arith.truncf %454 : vector<24x128xf32> to vector<24x128xbf16>
    %cst_619 = arith.constant dense<0.000000e+00> : vector<24x128xf32>
    %457 = tpu.matmul %456, %255, %cst_619 {dimension_numbers = #tpu.dot_dimension_numbers<[1], [0], [0], [1], [0, 0, 1, 1], [], []>} : vector<24x128xbf16>, vector<128x128xbf16>, vector<24x128xf32> -> vector<24x128xf32>
    %458 = arith.truncf %455 : vector<24x128xf32> to vector<24x128xbf16>
    %cst_620 = arith.constant dense<0.000000e+00> : vector<24x128xf32>
    %459 = tpu.matmul %458, %256, %cst_620 {dimension_numbers = #tpu.dot_dimension_numbers<[1], [0], [0], [1], [0, 0, 1, 1], [], []>} : vector<24x128xbf16>, vector<128x128xbf16>, vector<24x128xf32> -> vector<24x128xf32>
    %460 = arith.addf %457, %459 : vector<24x128xf32>
    %461 = arith.addf %452, %460 : vector<24x128xf32>
    %462 = arith.addf %453, %460 : vector<24x128xf32>
    %463 = math.tanh %461 : vector<24x128xf32>
    %464 = math.tanh %462 : vector<24x128xf32>
    %465 = vector.extract_strided_slice %463 {offsets = [0, 0], sizes = [8, 128], strides = [1, 1]} : vector<24x128xf32> to vector<8x128xf32>
    %c1_621 = arith.constant 1 : index
    %c1_622 = arith.constant 1 : index
    %c3_623 = arith.constant 3 : index
    %c0_624 = arith.constant 0 : index
    %c0_625 = arith.constant 0 : index
    %c0_626 = arith.constant 0 : index
    %466 = vector.load %arg5[%c1_621, %c1_622, %c3_623, %c0_624, %c0_625, %c0_626] : memref<2x4x4x2x8x128xf32, #tpu.memory_space<vmem>>, vector<1x1x1x1x8x128xf32>
    %467 = vector.shape_cast %466 : vector<1x1x1x1x8x128xf32> to vector<8x128xf32>
    %468 = vector.shape_cast %465 : vector<8x128xf32> to vector<1x1x1x1x8x128xf32>
    tpu.vector_store %arg5[%c1_621, %c1_622, %c3_623, %c0_624, %c0_625, %c0_626], %468 {strides = array<i32>} : memref<2x4x4x2x8x128xf32, #tpu.memory_space<vmem>>, vector<1x1x1x1x8x128xf32>,
    %469 = vector.extract_strided_slice %464 {offsets = [0, 0], sizes = [8, 128], strides = [1, 1]} : vector<24x128xf32> to vector<8x128xf32>
    %c1_627 = arith.constant 1 : index
    %c1_628 = arith.constant 1 : index
    %c3_629 = arith.constant 3 : index
    %c1_630 = arith.constant 1 : index
    %c0_631 = arith.constant 0 : index
    %c0_632 = arith.constant 0 : index
    %470 = vector.load %arg5[%c1_627, %c1_628, %c3_629, %c1_630, %c0_631, %c0_632] : memref<2x4x4x2x8x128xf32, #tpu.memory_space<vmem>>, vector<1x1x1x1x8x128xf32>
    %471 = vector.shape_cast %470 : vector<1x1x1x1x8x128xf32> to vector<8x128xf32>
    %472 = vector.shape_cast %469 : vector<8x128xf32> to vector<1x1x1x1x8x128xf32>
    tpu.vector_store %arg5[%c1_627, %c1_628, %c3_629, %c1_630, %c0_631, %c0_632], %472 {strides = array<i32>} : memref<2x4x4x2x8x128xf32, #tpu.memory_space<vmem>>, vector<1x1x1x1x8x128xf32>,
    %473 = vector.extract_strided_slice %463 {offsets = [8, 0], sizes = [8, 128], strides = [1, 1]} : vector<24x128xf32> to vector<8x128xf32>
    %c1_633 = arith.constant 1 : index
    %c2_634 = arith.constant 2 : index
    %c2_635 = arith.constant 2 : index
    %c0_636 = arith.constant 0 : index
    %c0_637 = arith.constant 0 : index
    %c0_638 = arith.constant 0 : index
    %474 = vector.load %arg5[%c1_633, %c2_634, %c2_635, %c0_636, %c0_637, %c0_638] : memref<2x4x4x2x8x128xf32, #tpu.memory_space<vmem>>, vector<1x1x1x1x8x128xf32>
    %475 = vector.shape_cast %474 : vector<1x1x1x1x8x128xf32> to vector<8x128xf32>
    %476 = vector.shape_cast %473 : vector<8x128xf32> to vector<1x1x1x1x8x128xf32>
    tpu.vector_store %arg5[%c1_633, %c2_634, %c2_635, %c0_636, %c0_637, %c0_638], %476 {strides = array<i32>} : memref<2x4x4x2x8x128xf32, #tpu.memory_space<vmem>>, vector<1x1x1x1x8x128xf32>,
    %477 = vector.extract_strided_slice %464 {offsets = [8, 0], sizes = [8, 128], strides = [1, 1]} : vector<24x128xf32> to vector<8x128xf32>
    %c1_639 = arith.constant 1 : index
    %c2_640 = arith.constant 2 : index
    %c2_641 = arith.constant 2 : index
    %c1_642 = arith.constant 1 : index
    %c0_643 = arith.constant 0 : index
    %c0_644 = arith.constant 0 : index
    %478 = vector.load %arg5[%c1_639, %c2_640, %c2_641, %c1_642, %c0_643, %c0_644] : memref<2x4x4x2x8x128xf32, #tpu.memory_space<vmem>>, vector<1x1x1x1x8x128xf32>
    %479 = vector.shape_cast %478 : vector<1x1x1x1x8x128xf32> to vector<8x128xf32>
    %480 = vector.shape_cast %477 : vector<8x128xf32> to vector<1x1x1x1x8x128xf32>
    tpu.vector_store %arg5[%c1_639, %c2_640, %c2_641, %c1_642, %c0_643, %c0_644], %480 {strides = array<i32>} : memref<2x4x4x2x8x128xf32, #tpu.memory_space<vmem>>, vector<1x1x1x1x8x128xf32>,
    %481 = vector.extract_strided_slice %463 {offsets = [16, 0], sizes = [8, 128], strides = [1, 1]} : vector<24x128xf32> to vector<8x128xf32>
    %c1_645 = arith.constant 1 : index
    %c3_646 = arith.constant 3 : index
    %c1_647 = arith.constant 1 : index
    %c0_648 = arith.constant 0 : index
    %c0_649 = arith.constant 0 : index
    %c0_650 = arith.constant 0 : index
    %482 = vector.load %arg5[%c1_645, %c3_646, %c1_647, %c0_648, %c0_649, %c0_650] : memref<2x4x4x2x8x128xf32, #tpu.memory_space<vmem>>, vector<1x1x1x1x8x128xf32>
    %483 = vector.shape_cast %482 : vector<1x1x1x1x8x128xf32> to vector<8x128xf32>
    %484 = vector.shape_cast %481 : vector<8x128xf32> to vector<1x1x1x1x8x128xf32>
    tpu.vector_store %arg5[%c1_645, %c3_646, %c1_647, %c0_648, %c0_649, %c0_650], %484 {strides = array<i32>} : memref<2x4x4x2x8x128xf32, #tpu.memory_space<vmem>>, vector<1x1x1x1x8x128xf32>,
    %485 = vector.extract_strided_slice %464 {offsets = [16, 0], sizes = [8, 128], strides = [1, 1]} : vector<24x128xf32> to vector<8x128xf32>
    %c1_651 = arith.constant 1 : index
    %c3_652 = arith.constant 3 : index
    %c1_653 = arith.constant 1 : index
    %c1_654 = arith.constant 1 : index
    %c0_655 = arith.constant 0 : index
    %c0_656 = arith.constant 0 : index
    %486 = vector.load %arg5[%c1_651, %c3_652, %c1_653, %c1_654, %c0_655, %c0_656] : memref<2x4x4x2x8x128xf32, #tpu.memory_space<vmem>>, vector<1x1x1x1x8x128xf32>
    %487 = vector.shape_cast %486 : vector<1x1x1x1x8x128xf32> to vector<8x128xf32>
    %488 = vector.shape_cast %485 : vector<8x128xf32> to vector<1x1x1x1x8x128xf32>
    tpu.vector_store %arg5[%c1_651, %c3_652, %c1_653, %c1_654, %c0_655, %c0_656], %488 {strides = array<i32>} : memref<2x4x4x2x8x128xf32, #tpu.memory_space<vmem>>, vector<1x1x1x1x8x128xf32>,
    %c104 = arith.constant 104 : index
    %c0_657 = arith.constant 0 : index
    %489 = vector.load %arg6[%c104, %c0_657] : memref<256x128xf32, #tpu.memory_space<vmem>>, vector<16x128xf32>
    %c232 = arith.constant 232 : index
    %c0_658 = arith.constant 0 : index
    %490 = vector.load %arg6[%c232, %c0_658] : memref<256x128xf32, #tpu.memory_space<vmem>>, vector<16x128xf32>
    %491 = vector.extract_strided_slice %463 {offsets = [0, 0], sizes = [16, 128], strides = [1, 1]} : vector<24x128xf32> to vector<16x128xf32>
    %492 = vector.extract_strided_slice %463 {offsets = [8, 0], sizes = [16, 128], strides = [1, 1]} : vector<24x128xf32> to vector<16x128xf32>
    %493 = arith.truncf %491 : vector<16x128xf32> to vector<16x128xbf16>
    %cst_659 = arith.constant dense<0.000000e+00> : vector<16x128xf32>
    %494 = tpu.matmul %493, %255, %cst_659 {dimension_numbers = #tpu.dot_dimension_numbers<[1], [0], [0], [1], [0, 0, 1, 1], [], []>} : vector<16x128xbf16>, vector<128x128xbf16>, vector<16x128xf32> -> vector<16x128xf32>
    %495 = arith.truncf %492 : vector<16x128xf32> to vector<16x128xbf16>
    %cst_660 = arith.constant dense<0.000000e+00> : vector<16x128xf32>
    %496 = tpu.matmul %495, %256, %cst_660 {dimension_numbers = #tpu.dot_dimension_numbers<[1], [0], [0], [1], [0, 0, 1, 1], [], []>} : vector<16x128xbf16>, vector<128x128xbf16>, vector<16x128xf32> -> vector<16x128xf32>
    %497 = arith.addf %494, %496 : vector<16x128xf32>
    %498 = arith.addf %489, %497 : vector<16x128xf32>
    %499 = arith.addf %490, %497 : vector<16x128xf32>
    %500 = math.tanh %498 : vector<16x128xf32>
    %501 = math.tanh %499 : vector<16x128xf32>
    %502 = vector.extract_strided_slice %500 {offsets = [0, 0], sizes = [8, 128], strides = [1, 1]} : vector<16x128xf32> to vector<8x128xf32>
    %c1_661 = arith.constant 1 : index
    %c2_662 = arith.constant 2 : index
    %c3_663 = arith.constant 3 : index
    %c0_664 = arith.constant 0 : index
    %c0_665 = arith.constant 0 : index
    %c0_666 = arith.constant 0 : index
    %503 = vector.load %arg5[%c1_661, %c2_662, %c3_663, %c0_664, %c0_665, %c0_666] : memref<2x4x4x2x8x128xf32, #tpu.memory_space<vmem>>, vector<1x1x1x1x8x128xf32>
    %504 = vector.shape_cast %503 : vector<1x1x1x1x8x128xf32> to vector<8x128xf32>
    %505 = vector.shape_cast %502 : vector<8x128xf32> to vector<1x1x1x1x8x128xf32>
    tpu.vector_store %arg5[%c1_661, %c2_662, %c3_663, %c0_664, %c0_665, %c0_666], %505 {strides = array<i32>} : memref<2x4x4x2x8x128xf32, #tpu.memory_space<vmem>>, vector<1x1x1x1x8x128xf32>,
    %506 = vector.extract_strided_slice %501 {offsets = [0, 0], sizes = [8, 128], strides = [1, 1]} : vector<16x128xf32> to vector<8x128xf32>
    %c1_667 = arith.constant 1 : index
    %c2_668 = arith.constant 2 : index
    %c3_669 = arith.constant 3 : index
    %c1_670 = arith.constant 1 : index
    %c0_671 = arith.constant 0 : index
    %c0_672 = arith.constant 0 : index
    %507 = vector.load %arg5[%c1_667, %c2_668, %c3_669, %c1_670, %c0_671, %c0_672] : memref<2x4x4x2x8x128xf32, #tpu.memory_space<vmem>>, vector<1x1x1x1x8x128xf32>
    %508 = vector.shape_cast %507 : vector<1x1x1x1x8x128xf32> to vector<8x128xf32>
    %509 = vector.shape_cast %506 : vector<8x128xf32> to vector<1x1x1x1x8x128xf32>
    tpu.vector_store %arg5[%c1_667, %c2_668, %c3_669, %c1_670, %c0_671, %c0_672], %509 {strides = array<i32>} : memref<2x4x4x2x8x128xf32, #tpu.memory_space<vmem>>, vector<1x1x1x1x8x128xf32>,
    %510 = vector.extract_strided_slice %500 {offsets = [8, 0], sizes = [8, 128], strides = [1, 1]} : vector<16x128xf32> to vector<8x128xf32>
    %c1_673 = arith.constant 1 : index
    %c3_674 = arith.constant 3 : index
    %c2_675 = arith.constant 2 : index
    %c0_676 = arith.constant 0 : index
    %c0_677 = arith.constant 0 : index
    %c0_678 = arith.constant 0 : index
    %511 = vector.load %arg5[%c1_673, %c3_674, %c2_675, %c0_676, %c0_677, %c0_678] : memref<2x4x4x2x8x128xf32, #tpu.memory_space<vmem>>, vector<1x1x1x1x8x128xf32>
    %512 = vector.shape_cast %511 : vector<1x1x1x1x8x128xf32> to vector<8x128xf32>
    %513 = vector.shape_cast %510 : vector<8x128xf32> to vector<1x1x1x1x8x128xf32>
    tpu.vector_store %arg5[%c1_673, %c3_674, %c2_675, %c0_676, %c0_677, %c0_678], %513 {strides = array<i32>} : memref<2x4x4x2x8x128xf32, #tpu.memory_space<vmem>>, vector<1x1x1x1x8x128xf32>,
    %514 = vector.extract_strided_slice %501 {offsets = [8, 0], sizes = [8, 128], strides = [1, 1]} : vector<16x128xf32> to vector<8x128xf32>
    %c1_679 = arith.constant 1 : index
    %c3_680 = arith.constant 3 : index
    %c2_681 = arith.constant 2 : index
    %c1_682 = arith.constant 1 : index
    %c0_683 = arith.constant 0 : index
    %c0_684 = arith.constant 0 : index
    %515 = vector.load %arg5[%c1_679, %c3_680, %c2_681, %c1_682, %c0_683, %c0_684] : memref<2x4x4x2x8x128xf32, #tpu.memory_space<vmem>>, vector<1x1x1x1x8x128xf32>
    %516 = vector.shape_cast %515 : vector<1x1x1x1x8x128xf32> to vector<8x128xf32>
    %517 = vector.shape_cast %514 : vector<8x128xf32> to vector<1x1x1x1x8x128xf32>
    tpu.vector_store %arg5[%c1_679, %c3_680, %c2_681, %c1_682, %c0_683, %c0_684], %517 {strides = array<i32>} : memref<2x4x4x2x8x128xf32, #tpu.memory_space<vmem>>, vector<1x1x1x1x8x128xf32>,
    %c120 = arith.constant 120 : index
    %c0_685 = arith.constant 0 : index
    %518 = vector.load %arg6[%c120, %c0_685] : memref<256x128xf32, #tpu.memory_space<vmem>>, vector<8x128xf32>
    %c248 = arith.constant 248 : index
    %c0_686 = arith.constant 0 : index
    %519 = vector.load %arg6[%c248, %c0_686] : memref<256x128xf32, #tpu.memory_space<vmem>>, vector<8x128xf32>
    %520 = vector.extract_strided_slice %500 {offsets = [0, 0], sizes = [8, 128], strides = [1, 1]} : vector<16x128xf32> to vector<8x128xf32>
    %521 = vector.extract_strided_slice %500 {offsets = [8, 0], sizes = [8, 128], strides = [1, 1]} : vector<16x128xf32> to vector<8x128xf32>
    %522 = arith.truncf %520 : vector<8x128xf32> to vector<8x128xbf16>
    %cst_687 = arith.constant dense<0.000000e+00> : vector<8x128xf32>
    %523 = tpu.matmul %522, %255, %cst_687 {dimension_numbers = #tpu.dot_dimension_numbers<[1], [0], [0], [1], [0, 0, 1, 1], [], []>} : vector<8x128xbf16>, vector<128x128xbf16>, vector<8x128xf32> -> vector<8x128xf32>
    %524 = arith.truncf %521 : vector<8x128xf32> to vector<8x128xbf16>
    %cst_688 = arith.constant dense<0.000000e+00> : vector<8x128xf32>
    %525 = tpu.matmul %524, %256, %cst_688 {dimension_numbers = #tpu.dot_dimension_numbers<[1], [0], [0], [1], [0, 0, 1, 1], [], []>} : vector<8x128xbf16>, vector<128x128xbf16>, vector<8x128xf32> -> vector<8x128xf32>
    %526 = arith.addf %523, %525 : vector<8x128xf32>
    %527 = arith.addf %518, %526 : vector<8x128xf32>
    %528 = arith.addf %519, %526 : vector<8x128xf32>
    %529 = math.tanh %527 : vector<8x128xf32>
    %530 = math.tanh %528 : vector<8x128xf32>
    %c1_689 = arith.constant 1 : index
    %c3_690 = arith.constant 3 : index
    %c3_691 = arith.constant 3 : index
    %c0_692 = arith.constant 0 : index
    %c0_693 = arith.constant 0 : index
    %c0_694 = arith.constant 0 : index
    %531 = vector.load %arg5[%c1_689, %c3_690, %c3_691, %c0_692, %c0_693, %c0_694] : memref<2x4x4x2x8x128xf32, #tpu.memory_space<vmem>>, vector<1x1x1x1x8x128xf32>
    %532 = vector.shape_cast %531 : vector<1x1x1x1x8x128xf32> to vector<8x128xf32>
    %533 = vector.shape_cast %529 : vector<8x128xf32> to vector<1x1x1x1x8x128xf32>
    tpu.vector_store %arg5[%c1_689, %c3_690, %c3_691, %c0_692, %c0_693, %c0_694], %533 {strides = array<i32>} : memref<2x4x4x2x8x128xf32, #tpu.memory_space<vmem>>, vector<1x1x1x1x8x128xf32>,
    %c1_695 = arith.constant 1 : index
    %c3_696 = arith.constant 3 : index
    %c3_697 = arith.constant 3 : index
    %c1_698 = arith.constant 1 : index
    %c0_699 = arith.constant 0 : index
    %c0_700 = arith.constant 0 : index
    %534 = vector.load %arg5[%c1_695, %c3_696, %c3_697, %c1_698, %c0_699, %c0_700] : memref<2x4x4x2x8x128xf32, #tpu.memory_space<vmem>>, vector<1x1x1x1x8x128xf32>
    %535 = vector.shape_cast %534 : vector<1x1x1x1x8x128xf32> to vector<8x128xf32>
    %536 = vector.shape_cast %530 : vector<8x128xf32> to vector<1x1x1x1x8x128xf32>
    tpu.vector_store %arg5[%c1_695, %c3_696, %c3_697, %c1_698, %c0_699, %c0_700], %536 {strides = array<i32>} : memref<2x4x4x2x8x128xf32, #tpu.memory_space<vmem>>, vector<1x1x1x1x8x128xf32>,
    return
  }
}

</mosaic_0001>

<llo_original>
// kernel: tpu_custom_call.1
$region0: #{tpu_custom_call.1}
  #allocation0 [shape = 'u32[]', space=smem, size = 0x4, offset = 0x4, fixed_abs, tag = 'smem constant byte address 0x4 - core index']
  #allocation1 [shape = 'u32[144,128]{1,0:T(1,128)}', space=vmem, size = 0x12000, scoped, tag = 'internal scratch']
  #allocation2 [shape = 'f32[256,128]{1,0:T(8,128)}', space=vmem, size = 0x20000, scoped, tag = 'scratch operand']
  %s0 = inlined_call_operand.hbm [shape: f32[4,8,128], index: 0, kind: input, shape index: {}]
  %s1 = inlined_call_operand.hbm [shape: f32[4,8,128], index: 1, kind: input, shape index: {}]
  %s2 = inlined_call_operand.hbm [shape: bf16[2,128,128], index: 2, kind: input, shape index: {}]
  %s3 = inlined_call_operand.hbm [shape: bf16[2,256,128], index: 3, kind: input, shape index: {}]
  %s4 = inlined_call_operand.vmem [shape: f32[2,1,128], index: 4, kind: input, shape index: {}]
  %s5 = inlined_call_operand.hbm [shape: f32[2,4,4,2,8,128], index: 5, kind: output, shape index: {}]
  %s6 = sld [smem:[#allocation0]]
  $region46: #{tpu_custom_call.1} parent=0
    _
  %s8 = ssub.s32 1, %s6
  %s9 = scalar_select 0, %s8, %s6
  $region1: #{tpu_custom_call.1} parent=0
    #allocation3 [shape = 'u8[16384]{0}', space=vmem, size = 0x4000, scoped, tag = 'input window, operand 0, single buffered']
    #allocation4 [shape = 's32[1]{0}', space=sflag, size = 0x4, scoped, tag = 'scoped memory for tpu_custom_call.1']
    #allocation5 [shape = 's32[1]{0}', space=sflag, size = 0x4, scoped, tag = 'scoped memory for tpu_custom_call.1']
    #allocation6 [shape = 'u8[16384]{0}', space=vmem, size = 0x4000, scoped, tag = 'input window, operand 1, single buffered']
    #allocation7 [shape = 's32[1]{0}', space=sflag, size = 0x4, scoped, tag = 'scoped memory for tpu_custom_call.1']
    #allocation8 [shape = 'u8[65536]{0}', space=vmem, size = 0x10000, scoped, tag = 'input window, operand 2, single buffered']
    #allocation9 [shape = 'u8[131072]{0}', space=vmem, size = 0x20000, scoped, tag = 'input window, operand 3, single buffered']
    #allocation10 [shape = 's32[1]{0}', space=sflag, size = 0x4, scoped, tag = 'scoped memory for tpu_custom_call.1']
    #allocation11 [shape = 'u8[262144]{0}', space=vmem, size = 0x40000, scoped, tag = 'output window, operand 0, single buffered']
    %10 = vsyncpa [#allocation4], 0
    %11 = vsyncpa [#allocation7], 0
    %12 = vsyncpa [#allocation10], 0
    %13 = vsyncpa [#allocation5], 0
    // Predicated region
    $region2: #{tpu_custom_call.1} parent=1 // pred_check
      _
    $region3: #{tpu_custom_call.1} parent=1 // pred_check_branch
      %15 = sbr.rel (0) target = $region5
    $region4: #{tpu_custom_call.1} parent=1 // pred_region
      %s17 = ssub.s32 512, 512
      %18 = vsyncadd [#allocation4], %s17
      %s19 = sshll.u32 [#allocation3], 4
      %s20 = int_to_ptr.vmem [resolvable:$true] %s19
      %25 = dma.hbm_to_vmem [thread:$0]  %s0, 512, %s20, [#allocation4], 128, 128, 8
    $region5: #{tpu_custom_call.1} parent=1 // pred_fallthru
      _
    // Predicated region
    $region6: #{tpu_custom_call.1} parent=1 // pred_check
      _
    $region7: #{tpu_custom_call.1} parent=1 // pred_check_branch
      %27 = sbr.rel (0) target = $region9
    $region8: #{tpu_custom_call.1} parent=1 // pred_region
      %s29 = ssub.s32 512, 512
      %30 = vsyncadd [#allocation7], %s29
      %s31 = sshll.u32 [#allocation6], 4
      %s32 = int_to_ptr.vmem [resolvable:$true] %s31
      %37 = dma.hbm_to_vmem [thread:$0]  %s1, 512, %s32, [#allocation7], 128, 128, 8
    $region9: #{tpu_custom_call.1} parent=1 // pred_fallthru
      _
    // Predicated region
    $region10: #{tpu_custom_call.1} parent=1 // pred_check
      _
    $region11: #{tpu_custom_call.1} parent=1 // pred_check_branch
      %39 = sbr.rel (0) target = $region13
    $region12: #{tpu_custom_call.1} parent=1 // pred_region
      %s41 = ssub.s32 2048, 2048
      %42 = vsyncadd [#allocation7], %s41
      %s43 = sshll.u32 [#allocation8], 4
      %s44 = int_to_ptr.vmem [resolvable:$true] %s43
      %49 = dma.hbm_to_vmem [thread:$0]  %s2, 2048, %s44, [#allocation7], 64, 64, 4
    $region13: #{tpu_custom_call.1} parent=1 // pred_fallthru
      _
    // Predicated region
    $region14: #{tpu_custom_call.1} parent=1 // pred_check
      _
    $region15: #{tpu_custom_call.1} parent=1 // pred_check_branch
      %51 = sbr.rel (0) target = $region17
    $region16: #{tpu_custom_call.1} parent=1 // pred_region
      %s53 = ssub.s32 4096, 4096
      %54 = vsyncadd [#allocation10], %s53
      %s55 = sshll.u32 [#allocation9], 4
      %s56 = int_to_ptr.vmem [resolvable:$true] %s55
      %61 = dma.hbm_to_vmem [thread:$0]  %s3, 4096, %s56, [#allocation10], 64, 64, 4
    $region17: #{tpu_custom_call.1} parent=1 // pred_fallthru
      _
    // Predicated region
    $region18: #{tpu_custom_call.1} parent=1 // pred_check
      _
    $region19: #{tpu_custom_call.1} parent=1 // pred_check_branch
      %63 = sbr.rel (0) target = $region21
    $region20: #{tpu_custom_call.1} parent=1 // pred_region
      _
    $region21: #{tpu_custom_call.1} parent=1 // pred_fallthru
      _
    // Predicated region
    $region22: #{tpu_custom_call.1} parent=1 // pred_check
      _
    $region23: #{tpu_custom_call.1} parent=1 // pred_check_branch
      %65 = sbr.rel (0) target = $region25
    $region24: #{tpu_custom_call.1} parent=1 // pred_region
      %66 = dma.done [#allocation4], 512
    $region25: #{tpu_custom_call.1} parent=1 // pred_fallthru
      _
    // Predicated region
    $region26: #{tpu_custom_call.1} parent=1 // pred_check
      _
    $region27: #{tpu_custom_call.1} parent=1 // pred_check_branch
      %68 = sbr.rel (0) target = $region29
    $region28: #{tpu_custom_call.1} parent=1 // pred_region
      %69 = dma.done [#allocation7], 512
    $region29: #{tpu_custom_call.1} parent=1 // pred_fallthru
      _
    // Predicated region
    $region30: #{tpu_custom_call.1} parent=1 // pred_check
      _
    $region31: #{tpu_custom_call.1} parent=1 // pred_check_branch
      %71 = sbr.rel (0) target = $region33
    $region32: #{tpu_custom_call.1} parent=1 // pred_region
      %72 = dma.done [#allocation7], 2048
    $region33: #{tpu_custom_call.1} parent=1 // pred_fallthru
      _
    // Predicated region
    $region34: #{tpu_custom_call.1} parent=1 // pred_check
      _
    $region35: #{tpu_custom_call.1} parent=1 // pred_check_branch
      %74 = sbr.rel (0) target = $region37
    $region36: #{tpu_custom_call.1} parent=1 // pred_region
      %75 = dma.done [#allocation10], 4096
    $region37: #{tpu_custom_call.1} parent=1 // pred_fallthru
      _
    %v77 = vld [vmem:[#allocation8] sm:$0xf]
    %v78 = vld [vmem:[#allocation8 + $0x4] sm:$0xf]
    %v79 = vld [vmem:[#allocation8 + $0x8] sm:$0xf]
    %v80 = vld [vmem:[#allocation8 + $0xc] sm:$0xf]
    %v81 = vld [vmem:[#allocation8 + $0x10] sm:$0xf]
    %v82 = vld [vmem:[#allocation8 + $0x14] sm:$0xf]
    %v83 = vld [vmem:[#allocation8 + $0x18] sm:$0xf]
    %v84 = vld [vmem:[#allocation8 + $0x1c] sm:$0xf]
    %v85 = vld [vmem:[#allocation8 + $0x20] sm:$0xf]
    %v86 = vld [vmem:[#allocation8 + $0x24] sm:$0xf]
    %v87 = vld [vmem:[#allocation8 + $0x28] sm:$0xf]
    %v88 = vld [vmem:[#allocation8 + $0x2c] sm:$0xf]
    %v89 = vld [vmem:[#allocation8 + $0x30] sm:$0xf]
    %v90 = vld [vmem:[#allocation8 + $0x34] sm:$0xf]
    %v91 = vld [vmem:[#allocation8 + $0x38] sm:$0xf]
    %v92 = vld [vmem:[#allocation8 + $0x3c] sm:$0xf]
    %v93 = vld [vmem:[#allocation9] sm:$0xf]
    %v94 = vld [vmem:[#allocation9 + $0x4] sm:$0xf]
    %v95 = vld [vmem:[#allocation9 + $0x8] sm:$0xf]
    %v96 = vld [vmem:[#allocation9 + $0xc] sm:$0xf]
    %v97 = vld [vmem:[#allocation9 + $0x10] sm:$0xf]
    %v98 = vld [vmem:[#allocation9 + $0x14] sm:$0xf]
    %v99 = vld [vmem:[#allocation9 + $0x18] sm:$0xf]
    %v100 = vld [vmem:[#allocation9 + $0x1c] sm:$0xf]
    %v101 = vld [vmem:[#allocation9 + $0x20] sm:$0xf]
    %v102 = vld [vmem:[#allocation9 + $0x24] sm:$0xf]
    %v103 = vld [vmem:[#allocation9 + $0x28] sm:$0xf]
    %v104 = vld [vmem:[#allocation9 + $0x2c] sm:$0xf]
    %v105 = vld [vmem:[#allocation9 + $0x30] sm:$0xf]
    %v106 = vld [vmem:[#allocation9 + $0x34] sm:$0xf]
    %v107 = vld [vmem:[#allocation9 + $0x38] sm:$0xf]
    %v108 = vld [vmem:[#allocation9 + $0x3c] sm:$0xf]
    %v109 = vld [vmem:[#allocation9 + $0x40] sm:$0xf]
    %v110 = vld [vmem:[#allocation9 + $0x44] sm:$0xf]
    %v111 = vld [vmem:[#allocation9 + $0x48] sm:$0xf]
    %v112 = vld [vmem:[#allocation9 + $0x4c] sm:$0xf]
    %v113 = vld [vmem:[#allocation9 + $0x50] sm:$0xf]
    %v114 = vld [vmem:[#allocation9 + $0x54] sm:$0xf]
    %v115 = vld [vmem:[#allocation9 + $0x58] sm:$0xf]
    %v116 = vld [vmem:[#allocation9 + $0x5c] sm:$0xf]
    %v117 = vld [vmem:[#allocation9 + $0x60] sm:$0xf]
    %v118 = vld [vmem:[#allocation9 + $0x64] sm:$0xf]
    %v119 = vld [vmem:[#allocation9 + $0x68] sm:$0xf]
    %v120 = vld [vmem:[#allocation9 + $0x6c] sm:$0xf]
    %v121 = vld [vmem:[#allocation9 + $0x70] sm:$0xf]
    %v122 = vld [vmem:[#allocation9 + $0x74] sm:$0xf]
    %v123 = vld [vmem:[#allocation9 + $0x78] sm:$0xf]
    %v124 = vld [vmem:[#allocation9 + $0x7c] sm:$0xf]
    %v125 = vld [vmem:[%s4] sm:$0x1]
    %v126 = vld [vmem:[#allocation3] sm:$0xff]
    %s127 = scalar_lea.vmem [#allocation3], 8
    %v128 = vld [vmem:[%s127] sm:$0xff]
    %s129 = scalar_lea.vmem [#allocation3], 16
    %v130 = vld [vmem:[%s129] sm:$0xff]
    %s131 = scalar_lea.vmem [#allocation3], 24
    %v132 = vld [vmem:[%s131] sm:$0xff]
    %v133 = vld [vmem:[#allocation6] sm:$0xff]
    %s134 = scalar_lea.vmem [#allocation6], 8
    %v135 = vld [vmem:[%s134] sm:$0xff]
    %s136 = scalar_lea.vmem [#allocation6], 16
    %v137 = vld [vmem:[%s136] sm:$0xff]
    %s138 = scalar_lea.vmem [#allocation6], 24
    %v139 = vld [vmem:[%s138] sm:$0xff]
    %v140 = vpack.c.bf16 %v128, %v126
    %v141 = vpack.c.bf16 %v132, %v130
    %v142 = vpack.c.bf16 %v135, %v133
    %v143 = vpack.c.bf16 %v139, %v137
    %v145 = vlaneseq
    %v146 = vshrl.u32 %v145, 7
    %v147 = vsub.s32 0, %v146
    %v148 = vrot.slane %v125, %v147
    %v166 = vunpack.c.l.b16 %v77
    %v167 = vunpack.c.l.b16 %v78
    %v168 = vunpack.c.l.b16 %v79
    %v169 = vunpack.c.l.b16 %v80
    %v170 = vunpack.c.l.b16 %v81
    %v171 = vunpack.c.l.b16 %v82
    %v172 = vunpack.c.l.b16 %v83
    %v173 = vunpack.c.l.b16 %v84
    %v174 = vunpack.c.l.b16 %v85
    %v175 = vunpack.c.l.b16 %v86
    %v176 = vunpack.c.l.b16 %v87
    %v177 = vunpack.c.l.b16 %v88
    %v178 = vunpack.c.l.b16 %v89
    %v179 = vunpack.c.l.b16 %v90
    %v180 = vunpack.c.l.b16 %v91
    %v181 = vunpack.c.l.b16 %v92
    %v182 = vpack.c.b16 %v167, %v166
    %v183 = vpack.c.b16 %v169, %v168
    %v184 = vpack.c.b16 %v171, %v170
    %v185 = vpack.c.b16 %v173, %v172
    %v186 = vpack.c.b16 %v175, %v174
    %v187 = vpack.c.b16 %v177, %v176
    %v188 = vpack.c.b16 %v179, %v178
    %v189 = vpack.c.b16 %v181, %v180
    %198 = vmatprep.subr.bf16.mxu0 0
    %199 = vmatpush1.bf16.msra.mxu0 %v182
    %200 = vmatprep.subr.bf16.mxu0 0
    %201 = vmatpush1.bf16.msra.mxu0 %v183
    %202 = vmatprep.subr.bf16.mxu0 0
    %203 = vmatpush1.bf16.msra.mxu0 %v184
    %204 = vmatprep.subr.bf16.mxu0 0
    %205 = vmatpush1.bf16.msra.mxu0 %v185
    %206 = vmatprep.subr.bf16.mxu0 0
    %207 = vmatpush1.bf16.msra.mxu0 %v186
    %208 = vmatprep.subr.bf16.mxu0 0
    %209 = vmatpush1.bf16.msra.mxu0 %v187
    %210 = vmatprep.subr.bf16.mxu0 0
    %211 = vmatpush1.bf16.msra.mxu0 %v188
    %212 = vmatprep.subr.bf16.mxu0 0
    %213 = vmatpush1.bf16.msra.mxu0 %v189
    %214 = vmatprep.subr.bf16.mxu0 0
    %215 = vmatpush1.bf16.msra.mxu0 0
    %216 = vmatprep.subr.bf16.mxu0 0
    %217 = vmatpush1.bf16.msra.mxu0 0
    %218 = vmatprep.subr.bf16.mxu0 0
    %219 = vmatpush1.bf16.msra.mxu0 0
    %220 = vmatprep.subr.bf16.mxu0 0
    %221 = vmatpush1.bf16.msra.mxu0 0
    %222 = vmatprep.subr.bf16.mxu0 0
    %223 = vmatpush1.bf16.msra.mxu0 0
    %224 = vmatprep.subr.bf16.mxu0 0
    %225 = vmatpush1.bf16.msra.mxu0 0
    %226 = vmatprep.subr.bf16.mxu0 0
    %227 = vmatpush1.bf16.msra.mxu0 0
    %228 = vmatprep.subr.bf16.mxu0 0
    %229 = vmatpush1.bf16.msra.mxu0 0
    %230 = vmatprep.mubr.bf16.mxu0 0
    %231 = vmatmul.mubr.bf16.gmra.mrb[0].mxu0 %v140
    %v232 = vpop.f32.mrb[0].mxu0
    %v233 = vadd.f32 %v148, %v232
    %v234 = vpop.f32.mrb[0].mxu0
    %v235 = vpop.f32.mrb[0].mxu0
    %v236 = vadd.f32 %v148, %v235
    %v237 = vpop.f32.mrb[0].mxu0
    %238 = vmatprep.mubr.bf16.mxu0 0
    %239 = vmatmul.mubr.bf16.gmra.mrb[0].mxu0 %v141
    %v240 = vpop.f32.mrb[0].mxu0
    %v241 = vadd.f32 %v148, %v240
    %v242 = vpop.f32.mrb[0].mxu0
    %v243 = vpop.f32.mrb[0].mxu0
    %v244 = vadd.f32 %v148, %v243
    %v245 = vpop.f32.mrb[0].mxu0
    %246 = vmatprep.mubr.bf16.mxu0 0
    %247 = vmatmul.mubr.bf16.gmra.mrb[0].mxu0 %v142
    %v248 = vpop.f32.mrb[0].mxu0
    %v249 = vadd.f32 %v148, %v248
    %v250 = vpop.f32.mrb[0].mxu0
    %v251 = vpop.f32.mrb[0].mxu0
    %v252 = vadd.f32 %v148, %v251
    %v253 = vpop.f32.mrb[0].mxu0
    %254 = vmatprep.mubr.bf16.mxu0 0
    %255 = vmatmul.mubr.bf16.gmra.mrb[0].mxu0 %v143
    %v256 = vpop.f32.mrb[0].mxu0
    %v257 = vadd.f32 %v148, %v256
    %v258 = vpop.f32.mrb[0].mxu0
    %v259 = vpop.f32.mrb[0].mxu0
    %v260 = vadd.f32 %v148, %v259
    %v261 = vpop.f32.mrb[0].mxu0
    %262 = vdwg.mxu0
    %263 = vst [vmem:[#allocation2] sm:$0xff] %v233
    %264 = vst [vmem:[#allocation2 + $0x8] sm:$0xff] %v236
    %265 = vst [vmem:[#allocation2 + $0x10] sm:$0xff] %v241
    %266 = vst [vmem:[#allocation2 + $0x18] sm:$0xff] %v244
    %267 = vst [vmem:[#allocation2 + $0x20] sm:$0xff] %v249
    %268 = vst [vmem:[#allocation2 + $0x28] sm:$0xff] %v252
    %269 = vst [vmem:[#allocation2 + $0x30] sm:$0xff] %v257
    %270 = vst [vmem:[#allocation2 + $0x38] sm:$0xff] %v260
    %v271 = vld [vmem:[#allocation2] sm:$0xff]
    %v272 = vld [vmem:[#allocation2 + $0x20] sm:$0xff]
    %v273 = vtanh.pop %v271
    %v274 = vtanh.pop %v272
    %275 = vst [vmem:[#allocation11] sm:$0xff] %v273
    %s276 = scalar_lea.vmem [#allocation11], 8
    %277 = vst [vmem:[%s276] sm:$0xff] %v274
    %v278 = vld [vmem:[#allocation2] sm:$0xff]
    %v279 = vld [vmem:[#allocation2 + $0x8] sm:$0xff]
    %v280 = vld [vmem:[#allocation2 + $0x28] sm:$0xff]
    %v281 = vld [vmem:[#allocation2 + $0x20] sm:$0xff]
    %v282 = vpack.c.bf16 %v273, 0.0
    %v283 = vpack.c.bf16 0.0, %v273
    %v300 = vunpack.c.l.b16 %v109
    %v301 = vunpack.c.l.b16 %v110
    %v302 = vunpack.c.l.b16 %v111
    %v303 = vunpack.c.l.b16 %v112
    %v304 = vunpack.c.l.b16 %v113
    %v305 = vunpack.c.l.b16 %v114
    %v306 = vunpack.c.l.b16 %v115
    %v307 = vunpack.c.l.b16 %v116
    %v308 = vunpack.c.l.b16 %v117
    %v309 = vunpack.c.l.b16 %v118
    %v310 = vunpack.c.l.b16 %v119
    %v311 = vunpack.c.l.b16 %v120
    %v312 = vunpack.c.l.b16 %v121
    %v313 = vunpack.c.l.b16 %v122
    %v314 = vunpack.c.l.b16 %v123
    %v315 = vunpack.c.l.b16 %v124
    %v316 = vpack.c.b16 %v301, %v300
    %v317 = vpack.c.b16 %v303, %v302
    %v318 = vpack.c.b16 %v305, %v304
    %v319 = vpack.c.b16 %v307, %v306
    %v320 = vpack.c.b16 %v309, %v308
    %v321 = vpack.c.b16 %v311, %v310
    %v322 = vpack.c.b16 %v313, %v312
    %v323 = vpack.c.b16 %v315, %v314
    %332 = vmatprep.subr.bf16.mxu0 0
    %333 = vmatpush1.bf16.msra.mxu0 %v316
    %334 = vmatprep.subr.bf16.mxu0 0
    %335 = vmatpush1.bf16.msra.mxu0 %v317
    %336 = vmatprep.subr.bf16.mxu0 0
    %337 = vmatpush1.bf16.msra.mxu0 %v318
    %338 = vmatprep.subr.bf16.mxu0 0
    %339 = vmatpush1.bf16.msra.mxu0 %v319
    %340 = vmatprep.subr.bf16.mxu0 0
    %341 = vmatpush1.bf16.msra.mxu0 %v320
    %342 = vmatprep.subr.bf16.mxu0 0
    %343 = vmatpush1.bf16.msra.mxu0 %v321
    %344 = vmatprep.subr.bf16.mxu0 0
    %345 = vmatpush1.bf16.msra.mxu0 %v322
    %346 = vmatprep.subr.bf16.mxu0 0
    %347 = vmatpush1.bf16.msra.mxu0 %v323
    %348 = vmatprep.subr.bf16.mxu0 0
    %349 = vmatpush1.bf16.msra.mxu0 0
    %350 = vmatprep.subr.bf16.mxu0 0
    %351 = vmatpush1.bf16.msra.mxu0 0
    %352 = vmatprep.subr.bf16.mxu0 0
    %353 = vmatpush1.bf16.msra.mxu0 0
    %354 = vmatprep.subr.bf16.mxu0 0
    %355 = vmatpush1.bf16.msra.mxu0 0
    %356 = vmatprep.subr.bf16.mxu0 0
    %357 = vmatpush1.bf16.msra.mxu0 0
    %358 = vmatprep.subr.bf16.mxu0 0
    %359 = vmatpush1.bf16.msra.mxu0 0
    %360 = vmatprep.subr.bf16.mxu0 0
    %361 = vmatpush1.bf16.msra.mxu0 0
    %362 = vmatprep.subr.bf16.mxu0 0
    %363 = vmatpush1.bf16.msra.mxu0 0
    %364 = vmatprep.mubr.bf16.mxu0 0
    %365 = vmatmul.mubr.bf16.gmra.mrb[0].mxu0 %v283
    %v366 = vpop.f32.mrb[0].mxu0
    %v367 = vadd.f32 0.0, %v366
    %v368 = vpop.f32.mrb[0].mxu0
    %v369 = vpop.f32.mrb[0].mxu0
    %v370 = vadd.f32 0.0, %v369
    %v371 = vpop.f32.mrb[0].mxu0
    %372 = vdwg.mxu0
    %v389 = vunpack.c.l.b16 %v93
    %v390 = vunpack.c.l.b16 %v94
    %v391 = vunpack.c.l.b16 %v95
    %v392 = vunpack.c.l.b16 %v96
    %v393 = vunpack.c.l.b16 %v97
    %v394 = vunpack.c.l.b16 %v98
    %v395 = vunpack.c.l.b16 %v99
    %v396 = vunpack.c.l.b16 %v100
    %v397 = vunpack.c.l.b16 %v101
    %v398 = vunpack.c.l.b16 %v102
    %v399 = vunpack.c.l.b16 %v103
    %v400 = vunpack.c.l.b16 %v104
    %v401 = vunpack.c.l.b16 %v105
    %v402 = vunpack.c.l.b16 %v106
    %v403 = vunpack.c.l.b16 %v107
    %v404 = vunpack.c.l.b16 %v108
    %v405 = vpack.c.b16 %v390, %v389
    %v406 = vpack.c.b16 %v392, %v391
    %v407 = vpack.c.b16 %v394, %v393
    %v408 = vpack.c.b16 %v396, %v395
    %v409 = vpack.c.b16 %v398, %v397
    %v410 = vpack.c.b16 %v400, %v399
    %v411 = vpack.c.b16 %v402, %v401
    %v412 = vpack.c.b16 %v404, %v403
    %421 = vmatprep.subr.bf16.mxu0 0
    %422 = vmatpush1.bf16.msra.mxu0 %v405
    %423 = vmatprep.subr.bf16.mxu0 0
    %424 = vmatpush1.bf16.msra.mxu0 %v406
    %425 = vmatprep.subr.bf16.mxu0 0
    %426 = vmatpush1.bf16.msra.mxu0 %v407
    %427 = vmatprep.subr.bf16.mxu0 0
    %428 = vmatpush1.bf16.msra.mxu0 %v408
    %429 = vmatprep.subr.bf16.mxu0 0
    %430 = vmatpush1.bf16.msra.mxu0 %v409
    %431 = vmatprep.subr.bf16.mxu0 0
    %432 = vmatpush1.bf16.msra.mxu0 %v410
    %433 = vmatprep.subr.bf16.mxu0 0
    %434 = vmatpush1.bf16.msra.mxu0 %v411
    %435 = vmatprep.subr.bf16.mxu0 0
    %436 = vmatpush1.bf16.msra.mxu0 %v412
    %437 = vmatprep.subr.bf16.mxu0 0
    %438 = vmatpush1.bf16.msra.mxu0 0
    %439 = vmatprep.subr.bf16.mxu0 0
    %440 = vmatpush1.bf16.msra.mxu0 0
    %441 = vmatprep.subr.bf16.mxu0 0
    %442 = vmatpush1.bf16.msra.mxu0 0
    %443 = vmatprep.subr.bf16.mxu0 0
    %444 = vmatpush1.bf16.msra.mxu0 0
    %445 = vmatprep.subr.bf16.mxu0 0
    %446 = vmatpush1.bf16.msra.mxu0 0
    %447 = vmatprep.subr.bf16.mxu0 0
    %448 = vmatpush1.bf16.msra.mxu0 0
    %449 = vmatprep.subr.bf16.mxu0 0
    %450 = vmatpush1.bf16.msra.mxu0 0
    %451 = vmatprep.subr.bf16.mxu0 0
    %452 = vmatpush1.bf16.msra.mxu0 0
    %453 = vmatprep.mubr.bf16.mxu0 0
    %454 = vmatmul.mubr.bf16.gmra.mrb[0].mxu0 %v282
    %v455 = vpop.f32.mrb[0].mxu0
    %v456 = vadd.f32 %v367, %v455
    %v457 = vpop.f32.mrb[0].mxu0
    %v458 = vpop.f32.mrb[0].mxu0
    %v459 = vadd.f32 %v370, %v458
    %v460 = vpop.f32.mrb[0].mxu0
    %461 = vdwg.mxu0
    %v462 = vadd.f32 %v278, %v456
    %v463 = vadd.f32 %v279, %v459
    %v464 = vadd.f32 %v280, %v456
    %v465 = vadd.f32 %v281, %v459
    %v466 = vtanh.pop %v462
    %v467 = vtanh.pop %v463
    %v468 = vtanh.pop %v464
    %v469 = vtanh.pop %v465
    %s470 = scalar_lea.vmem [#allocation11], 16
    %471 = vst [vmem:[%s470] sm:$0xff] %v466
    %s472 = scalar_lea.vmem [#allocation11], 24
    %473 = vst [vmem:[%s472] sm:$0xff] %v468
    %s474 = scalar_lea.vmem [#allocation11], 64
    %475 = vst [vmem:[%s474] sm:$0xff] %v467
    %s476 = scalar_lea.vmem [#allocation11], 72
    %477 = vst [vmem:[%s476] sm:$0xff] %v469
    %v478 = vld [vmem:[#allocation2] sm:$0xff]
    %v479 = vld [vmem:[#allocation2 + $0x8] sm:$0xff]
    %v480 = vld [vmem:[#allocation2 + $0x10] sm:$0xff]
    %v481 = vld [vmem:[#allocation2 + $0x30] sm:$0xff]
    %v482 = vld [vmem:[#allocation2 + $0x28] sm:$0xff]
    %v483 = vld [vmem:[#allocation2 + $0x20] sm:$0xff]
    %v484 = vpack.c.bf16 %v466, 0.0
    %v485 = vpack.c.bf16 %v467, %v467
    %v486 = vpack.c.bf16 %v467, %v466
    %v487 = vpack.c.bf16 0.0, 0.0
    %488 = vmatprep.subr.bf16.mxu0 0
    %489 = vmatpush1.bf16.msra.mxu0 %v316
    %490 = vmatprep.subr.bf16.mxu0 0
    %491 = vmatpush1.bf16.msra.mxu0 %v317
    %492 = vmatprep.subr.bf16.mxu0 0
    %493 = vmatpush1.bf16.msra.mxu0 %v318
    %494 = vmatprep.subr.bf16.mxu0 0
    %495 = vmatpush1.bf16.msra.mxu0 %v319
    %496 = vmatprep.subr.bf16.mxu0 0
    %497 = vmatpush1.bf16.msra.mxu0 %v320
    %498 = vmatprep.subr.bf16.mxu0 0
    %499 = vmatpush1.bf16.msra.mxu0 %v321
    %500 = vmatprep.subr.bf16.mxu0 0
    %501 = vmatpush1.bf16.msra.mxu0 %v322
    %502 = vmatprep.subr.bf16.mxu0 0
    %503 = vmatpush1.bf16.msra.mxu0 %v323
    %504 = vmatprep.subr.bf16.mxu0 0
    %505 = vmatpush1.bf16.msra.mxu0 0
    %506 = vmatprep.subr.bf16.mxu0 0
    %507 = vmatpush1.bf16.msra.mxu0 0
    %508 = vmatprep.subr.bf16.mxu0 0
    %509 = vmatpush1.bf16.msra.mxu0 0
    %510 = vmatprep.subr.bf16.mxu0 0
    %511 = vmatpush1.bf16.msra.mxu0 0
    %512 = vmatprep.subr.bf16.mxu0 0
    %513 = vmatpush1.bf16.msra.mxu0 0
    %514 = vmatprep.subr.bf16.mxu0 0
    %515 = vmatpush1.bf16.msra.mxu0 0
    %516 = vmatprep.subr.bf16.mxu0 0
    %517 = vmatpush1.bf16.msra.mxu0 0
    %518 = vmatprep.subr.bf16.mxu0 0
    %519 = vmatpush1.bf16.msra.mxu0 0
    %520 = vmatprep.mubr.bf16.mxu0 0
    %521 = vmatmul.mubr.bf16.gmra.mrb[0].mxu0 %v486
    %v522 = vpop.f32.mrb[0].mxu0
    %v523 = vadd.f32 0.0, %v522
    %v524 = vpop.f32.mrb[0].mxu0
    %v525 = vpop.f32.mrb[0].mxu0
    %v526 = vadd.f32 0.0, %v525
    %v527 = vpop.f32.mrb[0].mxu0
    %528 = vmatprep.mubr.bf16.mxu0 0
    %529 = vmatmul.mubr.bf16.gmra.mrb[0].mxu0 %v487
    %v530 = vpop.f32.mrb[0].mxu0
    %v531 = vadd.f32 0.0, %v530
    %v532 = vpop.f32.mrb[0].mxu0
    %v533 = vpop.f32.mrb[0].mxu0
    %v534 = vpop.f32.mrb[0].mxu0
    %535 = vdwg.mxu0
    %536 = vmatprep.subr.bf16.mxu0 0
    %537 = vmatpush1.bf16.msra.mxu0 %v405
    %538 = vmatprep.subr.bf16.mxu0 0
    %539 = vmatpush1.bf16.msra.mxu0 %v406
    %540 = vmatprep.subr.bf16.mxu0 0
    %541 = vmatpush1.bf16.msra.mxu0 %v407
    %542 = vmatprep.subr.bf16.mxu0 0
    %543 = vmatpush1.bf16.msra.mxu0 %v408
    %544 = vmatprep.subr.bf16.mxu0 0
    %545 = vmatpush1.bf16.msra.mxu0 %v409
    %546 = vmatprep.subr.bf16.mxu0 0
    %547 = vmatpush1.bf16.msra.mxu0 %v410
    %548 = vmatprep.subr.bf16.mxu0 0
    %549 = vmatpush1.bf16.msra.mxu0 %v411
    %550 = vmatprep.subr.bf16.mxu0 0
    %551 = vmatpush1.bf16.msra.mxu0 %v412
    %552 = vmatprep.subr.bf16.mxu0 0
    %553 = vmatpush1.bf16.msra.mxu0 0
    %554 = vmatprep.subr.bf16.mxu0 0
    %555 = vmatpush1.bf16.msra.mxu0 0
    %556 = vmatprep.subr.bf16.mxu0 0
    %557 = vmatpush1.bf16.msra.mxu0 0
    %558 = vmatprep.subr.bf16.mxu0 0
    %559 = vmatpush1.bf16.msra.mxu0 0
    %560 = vmatprep.subr.bf16.mxu0 0
    %561 = vmatpush1.bf16.msra.mxu0 0
    %562 = vmatprep.subr.bf16.mxu0 0
    %563 = vmatpush1.bf16.msra.mxu0 0
    %564 = vmatprep.subr.bf16.mxu0 0
    %565 = vmatpush1.bf16.msra.mxu0 0
    %566 = vmatprep.subr.bf16.mxu0 0
    %567 = vmatpush1.bf16.msra.mxu0 0
    %568 = vmatprep.mubr.bf16.mxu0 0
    %569 = vmatmul.mubr.bf16.gmra.mrb[0].mxu0 %v484
    %v570 = vpop.f32.mrb[0].mxu0
    %v571 = vadd.f32 %v523, %v570
    %v572 = vpop.f32.mrb[0].mxu0
    %v573 = vpop.f32.mrb[0].mxu0
    %v574 = vadd.f32 %v526, %v573
    %v575 = vpop.f32.mrb[0].mxu0
    %576 = vmatprep.mubr.bf16.mxu0 0
    %577 = vmatmul.mubr.bf16.gmra.mrb[0].mxu0 %v485
    %v578 = vpop.f32.mrb[0].mxu0
    %v579 = vadd.f32 %v531, %v578
    %v580 = vpop.f32.mrb[0].mxu0
    %v581 = vpop.f32.mrb[0].mxu0
    %v582 = vpop.f32.mrb[0].mxu0
    %583 = vdwg.mxu0
    %v584 = vadd.f32 %v478, %v571
    %v585 = vadd.f32 %v479, %v574
    %v586 = vadd.f32 %v480, %v579
    %v587 = vadd.f32 %v481, %v571
    %v588 = vadd.f32 %v482, %v574
    %v589 = vadd.f32 %v483, %v579
    %v590 = vtanh.pop %v584
    %v591 = vtanh.pop %v585
    %v592 = vtanh.pop %v586
    %v593 = vtanh.pop %v587
    %v594 = vtanh.pop %v588
    %v595 = vtanh.pop %v589
    %s596 = scalar_lea.vmem [#allocation11], 32
    %597 = vst [vmem:[%s596] sm:$0xff] %v590
    %s598 = scalar_lea.vmem [#allocation11], 40
    %599 = vst [vmem:[%s598] sm:$0xff] %v593
    %s600 = scalar_lea.vmem [#allocation11], 80
    %601 = vst [vmem:[%s600] sm:$0xff] %v591
    %s602 = scalar_lea.vmem [#allocation11], 88
    %603 = vst [vmem:[%s602] sm:$0xff] %v594
    %s604 = scalar_lea.vmem [#allocation11], 128
    %605 = vst [vmem:[%s604] sm:$0xff] %v592
    %s606 = scalar_lea.vmem [#allocation11], 136
    %607 = vst [vmem:[%s606] sm:$0xff] %v595
    %v608 = vld [vmem:[#allocation2] sm:$0xff]
    %v609 = vld [vmem:[#allocation2 + $0x8] sm:$0xff]
    %v610 = vld [vmem:[#allocation2 + $0x10] sm:$0xff]
    %v611 = vld [vmem:[#allocation2 + $0x18] sm:$0xff]
    %v612 = vld [vmem:[#allocation2 + $0x38] sm:$0xff]
    %v613 = vld [vmem:[#allocation2 + $0x30] sm:$0xff]
    %v614 = vld [vmem:[#allocation2 + $0x28] sm:$0xff]
    %v615 = vld [vmem:[#allocation2 + $0x20] sm:$0xff]
    %v616 = vpack.c.bf16 %v590, 0.0
    %v617 = vpack.c.bf16 %v592, %v591
    %v618 = vpack.c.bf16 %v591, %v590
    %v619 = vpack.c.bf16 0.0, %v592
    %620 = vmatprep.subr.bf16.mxu0 0
    %621 = vmatpush1.bf16.msra.mxu0 %v316
    %622 = vmatprep.subr.bf16.mxu0 0
    %623 = vmatpush1.bf16.msra.mxu0 %v317
    %624 = vmatprep.subr.bf16.mxu0 0
    %625 = vmatpush1.bf16.msra.mxu0 %v318
    %626 = vmatprep.subr.bf16.mxu0 0
    %627 = vmatpush1.bf16.msra.mxu0 %v319
    %628 = vmatprep.subr.bf16.mxu0 0
    %629 = vmatpush1.bf16.msra.mxu0 %v320
    %630 = vmatprep.subr.bf16.mxu0 0
    %631 = vmatpush1.bf16.msra.mxu0 %v321
    %632 = vmatprep.subr.bf16.mxu0 0
    %633 = vmatpush1.bf16.msra.mxu0 %v322
    %634 = vmatprep.subr.bf16.mxu0 0
    %635 = vmatpush1.bf16.msra.mxu0 %v323
    %636 = vmatprep.subr.bf16.mxu0 0
    %637 = vmatpush1.bf16.msra.mxu0 0
    %638 = vmatprep.subr.bf16.mxu0 0
    %639 = vmatpush1.bf16.msra.mxu0 0
    %640 = vmatprep.subr.bf16.mxu0 0
    %641 = vmatpush1.bf16.msra.mxu0 0
    %642 = vmatprep.subr.bf16.mxu0 0
    %643 = vmatpush1.bf16.msra.mxu0 0
    %644 = vmatprep.subr.bf16.mxu0 0
    %645 = vmatpush1.bf16.msra.mxu0 0
    %646 = vmatprep.subr.bf16.mxu0 0
    %647 = vmatpush1.bf16.msra.mxu0 0
    %648 = vmatprep.subr.bf16.mxu0 0
    %649 = vmatpush1.bf16.msra.mxu0 0
    %650 = vmatprep.subr.bf16.mxu0 0
    %651 = vmatpush1.bf16.msra.mxu0 0
    %652 = vmatprep.mubr.bf16.mxu0 0
    %653 = vmatmul.mubr.bf16.gmra.mrb[0].mxu0 %v618
    %v654 = vpop.f32.mrb[0].mxu0
    %v655 = vadd.f32 0.0, %v654
    %v656 = vpop.f32.mrb[0].mxu0
    %v657 = vpop.f32.mrb[0].mxu0
    %v658 = vadd.f32 0.0, %v657
    %v659 = vpop.f32.mrb[0].mxu0
    %660 = vmatprep.mubr.bf16.mxu0 0
    %661 = vmatmul.mubr.bf16.gmra.mrb[0].mxu0 %v619
    %v662 = vpop.f32.mrb[0].mxu0
    %v663 = vadd.f32 0.0, %v662
    %v664 = vpop.f32.mrb[0].mxu0
    %v665 = vpop.f32.mrb[0].mxu0
    %v666 = vadd.f32 0.0, %v665
    %v667 = vpop.f32.mrb[0].mxu0
    %668 = vdwg.mxu0
    %669 = vmatprep.subr.bf16.mxu0 0
    %670 = vmatpush1.bf16.msra.mxu0 %v405
    %671 = vmatprep.subr.bf16.mxu0 0
    %672 = vmatpush1.bf16.msra.mxu0 %v406
    %673 = vmatprep.subr.bf16.mxu0 0
    %674 = vmatpush1.bf16.msra.mxu0 %v407
    %675 = vmatprep.subr.bf16.mxu0 0
    %676 = vmatpush1.bf16.msra.mxu0 %v408
    %677 = vmatprep.subr.bf16.mxu0 0
    %678 = vmatpush1.bf16.msra.mxu0 %v409
    %679 = vmatprep.subr.bf16.mxu0 0
    %680 = vmatpush1.bf16.msra.mxu0 %v410
    %681 = vmatprep.subr.bf16.mxu0 0
    %682 = vmatpush1.bf16.msra.mxu0 %v411
    %683 = vmatprep.subr.bf16.mxu0 0
    %684 = vmatpush1.bf16.msra.mxu0 %v412
    %685 = vmatprep.subr.bf16.mxu0 0
    %686 = vmatpush1.bf16.msra.mxu0 0
    %687 = vmatprep.subr.bf16.mxu0 0
    %688 = vmatpush1.bf16.msra.mxu0 0
    %689 = vmatprep.subr.bf16.mxu0 0
    %690 = vmatpush1.bf16.msra.mxu0 0
    %691 = vmatprep.subr.bf16.mxu0 0
    %692 = vmatpush1.bf16.msra.mxu0 0
    %693 = vmatprep.subr.bf16.mxu0 0
    %694 = vmatpush1.bf16.msra.mxu0 0
    %695 = vmatprep.subr.bf16.mxu0 0
    %696 = vmatpush1.bf16.msra.mxu0 0
    %697 = vmatprep.subr.bf16.mxu0 0
    %698 = vmatpush1.bf16.msra.mxu0 0
    %699 = vmatprep.subr.bf16.mxu0 0
    %700 = vmatpush1.bf16.msra.mxu0 0
    %701 = vmatprep.mubr.bf16.mxu0 0
    %702 = vmatmul.mubr.bf16.gmra.mrb[0].mxu0 %v616
    %v703 = vpop.f32.mrb[0].mxu0
    %v704 = vadd.f32 %v655, %v703
    %v705 = vpop.f32.mrb[0].mxu0
    %v706 = vpop.f32.mrb[0].mxu0
    %v707 = vadd.f32 %v658, %v706
    %v708 = vpop.f32.mrb[0].mxu0
    %709 = vmatprep.mubr.bf16.mxu0 0
    %710 = vmatmul.mubr.bf16.gmra.mrb[0].mxu0 %v617
    %v711 = vpop.f32.mrb[0].mxu0
    %v712 = vadd.f32 %v663, %v711
    %v713 = vpop.f32.mrb[0].mxu0
    %v714 = vpop.f32.mrb[0].mxu0
    %v715 = vadd.f32 %v666, %v714
    %v716 = vpop.f32.mrb[0].mxu0
    %717 = vdwg.mxu0
    %v718 = vadd.f32 %v608, %v704
    %v719 = vadd.f32 %v609, %v707
    %v720 = vadd.f32 %v610, %v712
    %v721 = vadd.f32 %v611, %v715
    %v722 = vadd.f32 %v612, %v704
    %v723 = vadd.f32 %v613, %v707
    %v724 = vadd.f32 %v614, %v712
    %v725 = vadd.f32 %v615, %v715
    %v726 = vtanh.pop %v718
    %v727 = vtanh.pop %v719
    %v728 = vtanh.pop %v720
    %v729 = vtanh.pop %v721
    %v730 = vtanh.pop %v722
    %v731 = vtanh.pop %v723
    %v732 = vtanh.pop %v724
    %v733 = vtanh.pop %v725
    %s734 = scalar_lea.vmem [#allocation11], 48
    %735 = vst [vmem:[%s734] sm:$0xff] %v726
    %s736 = scalar_lea.vmem [#allocation11], 56
    %737 = vst [vmem:[%s736] sm:$0xff] %v730
    %s738 = scalar_lea.vmem [#allocation11], 96
    %739 = vst [vmem:[%s738] sm:$0xff] %v727
    %s740 = scalar_lea.vmem [#allocation11], 104
    %741 = vst [vmem:[%s740] sm:$0xff] %v731
    %s742 = scalar_lea.vmem [#allocation11], 144
    %743 = vst [vmem:[%s742] sm:$0xff] %v728
    %s744 = scalar_lea.vmem [#allocation11], 152
    %745 = vst [vmem:[%s744] sm:$0xff] %v732
    %s746 = scalar_lea.vmem [#allocation11], 192
    %747 = vst [vmem:[%s746] sm:$0xff] %v729
    %s748 = scalar_lea.vmem [#allocation11], 200
    %749 = vst [vmem:[%s748] sm:$0xff] %v733
    %v750 = vld [vmem:[#allocation2 + $0x8] sm:$0xff]
    %v751 = vld [vmem:[#allocation2 + $0x10] sm:$0xff]
    %v752 = vld [vmem:[#allocation2 + $0x18] sm:$0xff]
    %v753 = vld [vmem:[#allocation2 + $0x38] sm:$0xff]
    %v754 = vld [vmem:[#allocation2 + $0x30] sm:$0xff]
    %v755 = vld [vmem:[#allocation2 + $0x28] sm:$0xff]
    %v756 = vpack.c.bf16 %v727, %v726
    %v757 = vpack.c.bf16 %v728, %v728
    %v758 = vpack.c.bf16 %v728, %v727
    %v759 = vpack.c.bf16 %v729, %v729
    %760 = vmatprep.subr.bf16.mxu0 0
    %761 = vmatpush1.bf16.msra.mxu0 %v316
    %762 = vmatprep.subr.bf16.mxu0 0
    %763 = vmatpush1.bf16.msra.mxu0 %v317
    %764 = vmatprep.subr.bf16.mxu0 0
    %765 = vmatpush1.bf16.msra.mxu0 %v318
    %766 = vmatprep.subr.bf16.mxu0 0
    %767 = vmatpush1.bf16.msra.mxu0 %v319
    %768 = vmatprep.subr.bf16.mxu0 0
    %769 = vmatpush1.bf16.msra.mxu0 %v320
    %770 = vmatprep.subr.bf16.mxu0 0
    %771 = vmatpush1.bf16.msra.mxu0 %v321
    %772 = vmatprep.subr.bf16.mxu0 0
    %773 = vmatpush1.bf16.msra.mxu0 %v322
    %774 = vmatprep.subr.bf16.mxu0 0
    %775 = vmatpush1.bf16.msra.mxu0 %v323
    %776 = vmatprep.subr.bf16.mxu0 0
    %777 = vmatpush1.bf16.msra.mxu0 0
    %778 = vmatprep.subr.bf16.mxu0 0
    %779 = vmatpush1.bf16.msra.mxu0 0
    %780 = vmatprep.subr.bf16.mxu0 0
    %781 = vmatpush1.bf16.msra.mxu0 0
    %782 = vmatprep.subr.bf16.mxu0 0
    %783 = vmatpush1.bf16.msra.mxu0 0
    %784 = vmatprep.subr.bf16.mxu0 0
    %785 = vmatpush1.bf16.msra.mxu0 0
    %786 = vmatprep.subr.bf16.mxu0 0
    %787 = vmatpush1.bf16.msra.mxu0 0
    %788 = vmatprep.subr.bf16.mxu0 0
    %789 = vmatpush1.bf16.msra.mxu0 0
    %790 = vmatprep.subr.bf16.mxu0 0
    %791 = vmatpush1.bf16.msra.mxu0 0
    %792 = vmatprep.mubr.bf16.mxu0 0
    %793 = vmatmul.mubr.bf16.gmra.mrb[0].mxu0 %v758
    %v794 = vpop.f32.mrb[0].mxu0
    %v795 = vadd.f32 0.0, %v794
    %v796 = vpop.f32.mrb[0].mxu0
    %v797 = vpop.f32.mrb[0].mxu0
    %v798 = vadd.f32 0.0, %v797
    %v799 = vpop.f32.mrb[0].mxu0
    %800 = vmatprep.mubr.bf16.mxu0 0
    %801 = vmatmul.mubr.bf16.gmra.mrb[0].mxu0 %v759
    %v802 = vpop.f32.mrb[0].mxu0
    %v803 = vadd.f32 0.0, %v802
    %v804 = vpop.f32.mrb[0].mxu0
    %v805 = vpop.f32.mrb[0].mxu0
    %v806 = vpop.f32.mrb[0].mxu0
    %807 = vdwg.mxu0
    %808 = vmatprep.subr.bf16.mxu0 0
    %809 = vmatpush1.bf16.msra.mxu0 %v405
    %810 = vmatprep.subr.bf16.mxu0 0
    %811 = vmatpush1.bf16.msra.mxu0 %v406
    %812 = vmatprep.subr.bf16.mxu0 0
    %813 = vmatpush1.bf16.msra.mxu0 %v407
    %814 = vmatprep.subr.bf16.mxu0 0
    %815 = vmatpush1.bf16.msra.mxu0 %v408
    %816 = vmatprep.subr.bf16.mxu0 0
    %817 = vmatpush1.bf16.msra.mxu0 %v409
    %818 = vmatprep.subr.bf16.mxu0 0
    %819 = vmatpush1.bf16.msra.mxu0 %v410
    %820 = vmatprep.subr.bf16.mxu0 0
    %821 = vmatpush1.bf16.msra.mxu0 %v411
    %822 = vmatprep.subr.bf16.mxu0 0
    %823 = vmatpush1.bf16.msra.mxu0 %v412
    %824 = vmatprep.subr.bf16.mxu0 0
    %825 = vmatpush1.bf16.msra.mxu0 0
    %826 = vmatprep.subr.bf16.mxu0 0
    %827 = vmatpush1.bf16.msra.mxu0 0
    %828 = vmatprep.subr.bf16.mxu0 0
    %829 = vmatpush1.bf16.msra.mxu0 0
    %830 = vmatprep.subr.bf16.mxu0 0
    %831 = vmatpush1.bf16.msra.mxu0 0
    %832 = vmatprep.subr.bf16.mxu0 0
    %833 = vmatpush1.bf16.msra.mxu0 0
    %834 = vmatprep.subr.bf16.mxu0 0
    %835 = vmatpush1.bf16.msra.mxu0 0
    %836 = vmatprep.subr.bf16.mxu0 0
    %837 = vmatpush1.bf16.msra.mxu0 0
    %838 = vmatprep.subr.bf16.mxu0 0
    %839 = vmatpush1.bf16.msra.mxu0 0
    %840 = vmatprep.mubr.bf16.mxu0 0
    %841 = vmatmul.mubr.bf16.gmra.mrb[0].mxu0 %v756
    %v842 = vpop.f32.mrb[0].mxu0
    %v843 = vadd.f32 %v795, %v842
    %v844 = vpop.f32.mrb[0].mxu0
    %v845 = vpop.f32.mrb[0].mxu0
    %v846 = vadd.f32 %v798, %v845
    %v847 = vpop.f32.mrb[0].mxu0
    %848 = vmatprep.mubr.bf16.mxu0 0
    %849 = vmatmul.mubr.bf16.gmra.mrb[0].mxu0 %v757
    %v850 = vpop.f32.mrb[0].mxu0
    %v851 = vadd.f32 %v803, %v850
    %v852 = vpop.f32.mrb[0].mxu0
    %v853 = vpop.f32.mrb[0].mxu0
    %v854 = vpop.f32.mrb[0].mxu0
    %855 = vdwg.mxu0
    %v856 = vadd.f32 %v750, %v843
    %v857 = vadd.f32 %v751, %v846
    %v858 = vadd.f32 %v752, %v851
    %v859 = vadd.f32 %v753, %v843
    %v860 = vadd.f32 %v754, %v846
    %v861 = vadd.f32 %v755, %v851
    %v862 = vtanh.pop %v856
    %v863 = vtanh.pop %v857
    %v864 = vtanh.pop %v858
    %v865 = vtanh.pop %v859
    %v866 = vtanh.pop %v860
    %v867 = vtanh.pop %v861
    %s868 = scalar_lea.vmem [#allocation11], 112
    %869 = vst [vmem:[%s868] sm:$0xff] %v862
    %s870 = scalar_lea.vmem [#allocation11], 120
    %871 = vst [vmem:[%s870] sm:$0xff] %v865
    %s872 = scalar_lea.vmem [#allocation11], 160
    %873 = vst [vmem:[%s872] sm:$0xff] %v863
    %s874 = scalar_lea.vmem [#allocation11], 168
    %875 = vst [vmem:[%s874] sm:$0xff] %v866
    %s876 = scalar_lea.vmem [#allocation11], 208
    %877 = vst [vmem:[%s876] sm:$0xff] %v864
    %s878 = scalar_lea.vmem [#allocation11], 216
    %879 = vst [vmem:[%s878] sm:$0xff] %v867
    %v880 = vld [vmem:[#allocation2 + $0x10] sm:$0xff]
    %v881 = vld [vmem:[#allocation2 + $0x18] sm:$0xff]
    %v882 = vld [vmem:[#allocation2 + $0x38] sm:$0xff]
    %v883 = vld [vmem:[#allocation2 + $0x30] sm:$0xff]
    %v884 = vpack.c.bf16 %v863, %v862
    %v885 = vpack.c.bf16 %v864, %v863
    %886 = vmatprep.subr.bf16.mxu0 0
    %887 = vmatpush1.bf16.msra.mxu0 %v316
    %888 = vmatprep.subr.bf16.mxu0 0
    %889 = vmatpush1.bf16.msra.mxu0 %v317
    %890 = vmatprep.subr.bf16.mxu0 0
    %891 = vmatpush1.bf16.msra.mxu0 %v318
    %892 = vmatprep.subr.bf16.mxu0 0
    %893 = vmatpush1.bf16.msra.mxu0 %v319
    %894 = vmatprep.subr.bf16.mxu0 0
    %895 = vmatpush1.bf16.msra.mxu0 %v320
    %896 = vmatprep.subr.bf16.mxu0 0
    %897 = vmatpush1.bf16.msra.mxu0 %v321
    %898 = vmatprep.subr.bf16.mxu0 0
    %899 = vmatpush1.bf16.msra.mxu0 %v322
    %900 = vmatprep.subr.bf16.mxu0 0
    %901 = vmatpush1.bf16.msra.mxu0 %v323
    %902 = vmatprep.subr.bf16.mxu0 0
    %903 = vmatpush1.bf16.msra.mxu0 0
    %904 = vmatprep.subr.bf16.mxu0 0
    %905 = vmatpush1.bf16.msra.mxu0 0
    %906 = vmatprep.subr.bf16.mxu0 0
    %907 = vmatpush1.bf16.msra.mxu0 0
    %908 = vmatprep.subr.bf16.mxu0 0
    %909 = vmatpush1.bf16.msra.mxu0 0
    %910 = vmatprep.subr.bf16.mxu0 0
    %911 = vmatpush1.bf16.msra.mxu0 0
    %912 = vmatprep.subr.bf16.mxu0 0
    %913 = vmatpush1.bf16.msra.mxu0 0
    %914 = vmatprep.subr.bf16.mxu0 0
    %915 = vmatpush1.bf16.msra.mxu0 0
    %916 = vmatprep.subr.bf16.mxu0 0
    %917 = vmatpush1.bf16.msra.mxu0 0
    %918 = vmatprep.mubr.bf16.mxu0 0
    %919 = vmatmul.mubr.bf16.gmra.mrb[0].mxu0 %v885
    %v920 = vpop.f32.mrb[0].mxu0
    %v921 = vadd.f32 0.0, %v920
    %v922 = vpop.f32.mrb[0].mxu0
    %v923 = vpop.f32.mrb[0].mxu0
    %v924 = vadd.f32 0.0, %v923
    %v925 = vpop.f32.mrb[0].mxu0
    %926 = vdwg.mxu0
    %927 = vmatprep.subr.bf16.mxu0 0
    %928 = vmatpush1.bf16.msra.mxu0 %v405
    %929 = vmatprep.subr.bf16.mxu0 0
    %930 = vmatpush1.bf16.msra.mxu0 %v406
    %931 = vmatprep.subr.bf16.mxu0 0
    %932 = vmatpush1.bf16.msra.mxu0 %v407
    %933 = vmatprep.subr.bf16.mxu0 0
    %934 = vmatpush1.bf16.msra.mxu0 %v408
    %935 = vmatprep.subr.bf16.mxu0 0
    %936 = vmatpush1.bf16.msra.mxu0 %v409
    %937 = vmatprep.subr.bf16.mxu0 0
    %938 = vmatpush1.bf16.msra.mxu0 %v410
    %939 = vmatprep.subr.bf16.mxu0 0
    %940 = vmatpush1.bf16.msra.mxu0 %v411
    %941 = vmatprep.subr.bf16.mxu0 0
    %942 = vmatpush1.bf16.msra.mxu0 %v412
    %943 = vmatprep.subr.bf16.mxu0 0
    %944 = vmatpush1.bf16.msra.mxu0 0
    %945 = vmatprep.subr.bf16.mxu0 0
    %946 = vmatpush1.bf16.msra.mxu0 0
    %947 = vmatprep.subr.bf16.mxu0 0
    %948 = vmatpush1.bf16.msra.mxu0 0
    %949 = vmatprep.subr.bf16.mxu0 0
    %950 = vmatpush1.bf16.msra.mxu0 0
    %951 = vmatprep.subr.bf16.mxu0 0
    %952 = vmatpush1.bf16.msra.mxu0 0
    %953 = vmatprep.subr.bf16.mxu0 0
    %954 = vmatpush1.bf16.msra.mxu0 0
    %955 = vmatprep.subr.bf16.mxu0 0
    %956 = vmatpush1.bf16.msra.mxu0 0
    %957 = vmatprep.subr.bf16.mxu0 0
    %958 = vmatpush1.bf16.msra.mxu0 0
    %959 = vmatprep.mubr.bf16.mxu0 0
    %960 = vmatmul.mubr.bf16.gmra.mrb[0].mxu0 %v884
    %v961 = vpop.f32.mrb[0].mxu0
    %v962 = vadd.f32 %v921, %v961
    %v963 = vpop.f32.mrb[0].mxu0
    %v964 = vpop.f32.mrb[0].mxu0
    %v965 = vadd.f32 %v924, %v964
    %v966 = vpop.f32.mrb[0].mxu0
    %967 = vdwg.mxu0
    %v968 = vadd.f32 %v880, %v962
    %v969 = vadd.f32 %v881, %v965
    %v970 = vadd.f32 %v882, %v962
    %v971 = vadd.f32 %v883, %v965
    %v972 = vtanh.pop %v968
    %v973 = vtanh.pop %v969
    %v974 = vtanh.pop %v970
    %v975 = vtanh.pop %v971
    %s976 = scalar_lea.vmem [#allocation11], 176
    %977 = vst [vmem:[%s976] sm:$0xff] %v972
    %s978 = scalar_lea.vmem [#allocation11], 184
    %979 = vst [vmem:[%s978] sm:$0xff] %v974
    %s980 = scalar_lea.vmem [#allocation11], 224
    %981 = vst [vmem:[%s980] sm:$0xff] %v973
    %s982 = scalar_lea.vmem [#allocation11], 232
    %983 = vst [vmem:[%s982] sm:$0xff] %v975
    %v984 = vld [vmem:[#allocation2 + $0x18] sm:$0xff]
    %v985 = vld [vmem:[#allocation2 + $0x38] sm:$0xff]
    %v986 = vpack.c.bf16 %v972, %v972
    %v987 = vpack.c.bf16 %v973, %v973
    %988 = vmatprep.subr.bf16.mxu0 0
    %989 = vmatpush1.bf16.msra.mxu0 %v316
    %990 = vmatprep.subr.bf16.mxu0 0
    %991 = vmatpush1.bf16.msra.mxu0 %v317
    %992 = vmatprep.subr.bf16.mxu0 0
    %993 = vmatpush1.bf16.msra.mxu0 %v318
    %994 = vmatprep.subr.bf16.mxu0 0
    %995 = vmatpush1.bf16.msra.mxu0 %v319
    %996 = vmatprep.subr.bf16.mxu0 0
    %997 = vmatpush1.bf16.msra.mxu0 %v320
    %998 = vmatprep.subr.bf16.mxu0 0
    %999 = vmatpush1.bf16.msra.mxu0 %v321
    %1000 = vmatprep.subr.bf16.mxu0 0
    %1001 = vmatpush1.bf16.msra.mxu0 %v322
    %1002 = vmatprep.subr.bf16.mxu0 0
    %1003 = vmatpush1.bf16.msra.mxu0 %v323
    %1004 = vmatprep.subr.bf16.mxu0 0
    %1005 = vmatpush1.bf16.msra.mxu0 0
    %1006 = vmatprep.subr.bf16.mxu0 0
    %1007 = vmatpush1.bf16.msra.mxu0 0
    %1008 = vmatprep.subr.bf16.mxu0 0
    %1009 = vmatpush1.bf16.msra.mxu0 0
    %1010 = vmatprep.subr.bf16.mxu0 0
    %1011 = vmatpush1.bf16.msra.mxu0 0
    %1012 = vmatprep.subr.bf16.mxu0 0
    %1013 = vmatpush1.bf16.msra.mxu0 0
    %1014 = vmatprep.subr.bf16.mxu0 0
    %1015 = vmatpush1.bf16.msra.mxu0 0
    %1016 = vmatprep.subr.bf16.mxu0 0
    %1017 = vmatpush1.bf16.msra.mxu0 0
    %1018 = vmatprep.subr.bf16.mxu0 0
    %1019 = vmatpush1.bf16.msra.mxu0 0
    %1020 = vmatprep.mubr.bf16.mxu0 0
    %1021 = vmatmul.mubr.bf16.gmra.mrb[0].mxu0 %v987
    %v1022 = vpop.f32.mrb[0].mxu0
    %v1023 = vadd.f32 0.0, %v1022
    %v1024 = vpop.f32.mrb[0].mxu0
    %v1025 = vpop.f32.mrb[0].mxu0
    %v1026 = vpop.f32.mrb[0].mxu0
    %1027 = vdwg.mxu0
    %1028 = vmatprep.subr.bf16.mxu0 0
    %1029 = vmatpush1.bf16.msra.mxu0 %v405
    %1030 = vmatprep.subr.bf16.mxu0 0
    %1031 = vmatpush1.bf16.msra.mxu0 %v406
    %1032 = vmatprep.subr.bf16.mxu0 0
    %1033 = vmatpush1.bf16.msra.mxu0 %v407
    %1034 = vmatprep.subr.bf16.mxu0 0
    %1035 = vmatpush1.bf16.msra.mxu0 %v408
    %1036 = vmatprep.subr.bf16.mxu0 0
    %1037 = vmatpush1.bf16.msra.mxu0 %v409
    %1038 = vmatprep.subr.bf16.mxu0 0
    %1039 = vmatpush1.bf16.msra.mxu0 %v410
    %1040 = vmatprep.subr.bf16.mxu0 0
    %1041 = vmatpush1.bf16.msra.mxu0 %v411
    %1042 = vmatprep.subr.bf16.mxu0 0
    %1043 = vmatpush1.bf16.msra.mxu0 %v412
    %1044 = vmatprep.subr.bf16.mxu0 0
    %1045 = vmatpush1.bf16.msra.mxu0 0
    %1046 = vmatprep.subr.bf16.mxu0 0
    %1047 = vmatpush1.bf16.msra.mxu0 0
    %1048 = vmatprep.subr.bf16.mxu0 0
    %1049 = vmatpush1.bf16.msra.mxu0 0
    %1050 = vmatprep.subr.bf16.mxu0 0
    %1051 = vmatpush1.bf16.msra.mxu0 0
    %1052 = vmatprep.subr.bf16.mxu0 0
    %1053 = vmatpush1.bf16.msra.mxu0 0
    %1054 = vmatprep.subr.bf16.mxu0 0
    %1055 = vmatpush1.bf16.msra.mxu0 0
    %1056 = vmatprep.subr.bf16.mxu0 0
    %1057 = vmatpush1.bf16.msra.mxu0 0
    %1058 = vmatprep.subr.bf16.mxu0 0
    %1059 = vmatpush1.bf16.msra.mxu0 0
    %1060 = vmatprep.mubr.bf16.mxu0 0
    %1061 = vmatmul.mubr.bf16.gmra.mrb[0].mxu0 %v986
    %v1062 = vpop.f32.mrb[0].mxu0
    %v1063 = vadd.f32 %v1023, %v1062
    %v1064 = vpop.f32.mrb[0].mxu0
    %v1065 = vpop.f32.mrb[0].mxu0
    %v1066 = vpop.f32.mrb[0].mxu0
    %1067 = vdwg.mxu0
    %v1068 = vadd.f32 %v984, %v1063
    %v1069 = vadd.f32 %v985, %v1063
    %v1070 = vtanh.pop %v1068
    %v1071 = vtanh.pop %v1069
    %s1072 = scalar_lea.vmem [#allocation11], 240
    %1073 = vst [vmem:[%s1072] sm:$0xff] %v1070
    %s1074 = scalar_lea.vmem [#allocation11], 248
    %1075 = vst [vmem:[%s1074] sm:$0xff] %v1071
    %s1076 = scalar_lea.vmem [#allocation8], 64
    %v1077 = vld [vmem:[%s1076] sm:$0xf]
    %v1078 = vld [vmem:[%s1076 + $0x4] sm:$0xf]
    %v1079 = vld [vmem:[%s1076 + $0x8] sm:$0xf]
    %v1080 = vld [vmem:[%s1076 + $0xc] sm:$0xf]
    %v1081 = vld [vmem:[%s1076 + $0x10] sm:$0xf]
    %v1082 = vld [vmem:[%s1076 + $0x14] sm:$0xf]
    %v1083 = vld [vmem:[%s1076 + $0x18] sm:$0xf]
    %v1084 = vld [vmem:[%s1076 + $0x1c] sm:$0xf]
    %v1085 = vld [vmem:[%s1076 + $0x20] sm:$0xf]
    %v1086 = vld [vmem:[%s1076 + $0x24] sm:$0xf]
    %v1087 = vld [vmem:[%s1076 + $0x28] sm:$0xf]
    %v1088 = vld [vmem:[%s1076 + $0x2c] sm:$0xf]
    %v1089 = vld [vmem:[%s1076 + $0x30] sm:$0xf]
    %v1090 = vld [vmem:[%s1076 + $0x34] sm:$0xf]
    %v1091 = vld [vmem:[%s1076 + $0x38] sm:$0xf]
    %v1092 = vld [vmem:[%s1076 + $0x3c] sm:$0xf]
    %s1093 = scalar_lea.vmem [#allocation9], 128
    %v1094 = vld [vmem:[%s1093] sm:$0xf]
    %v1095 = vld [vmem:[%s1093 + $0x4] sm:$0xf]
    %v1096 = vld [vmem:[%s1093 + $0x8] sm:$0xf]
    %v1097 = vld [vmem:[%s1093 + $0xc] sm:$0xf]
    %v1098 = vld [vmem:[%s1093 + $0x10] sm:$0xf]
    %v1099 = vld [vmem:[%s1093 + $0x14] sm:$0xf]
    %v1100 = vld [vmem:[%s1093 + $0x18] sm:$0xf]
    %v1101 = vld [vmem:[%s1093 + $0x1c] sm:$0xf]
    %v1102 = vld [vmem:[%s1093 + $0x20] sm:$0xf]
    %v1103 = vld [vmem:[%s1093 + $0x24] sm:$0xf]
    %v1104 = vld [vmem:[%s1093 + $0x28] sm:$0xf]
    %v1105 = vld [vmem:[%s1093 + $0x2c] sm:$0xf]
    %v1106 = vld [vmem:[%s1093 + $0x30] sm:$0xf]
    %v1107 = vld [vmem:[%s1093 + $0x34] sm:$0xf]
    %v1108 = vld [vmem:[%s1093 + $0x38] sm:$0xf]
    %v1109 = vld [vmem:[%s1093 + $0x3c] sm:$0xf]
    %v1110 = vld [vmem:[%s1093 + $0x40] sm:$0xf]
    %v1111 = vld [vmem:[%s1093 + $0x44] sm:$0xf]
    %v1112 = vld [vmem:[%s1093 + $0x48] sm:$0xf]
    %v1113 = vld [vmem:[%s1093 + $0x4c] sm:$0xf]
    %v1114 = vld [vmem:[%s1093 + $0x50] sm:$0xf]
    %v1115 = vld [vmem:[%s1093 + $0x54] sm:$0xf]
    %v1116 = vld [vmem:[%s1093 + $0x58] sm:$0xf]
    %v1117 = vld [vmem:[%s1093 + $0x5c] sm:$0xf]
    %v1118 = vld [vmem:[%s1093 + $0x60] sm:$0xf]
    %v1119 = vld [vmem:[%s1093 + $0x64] sm:$0xf]
    %v1120 = vld [vmem:[%s1093 + $0x68] sm:$0xf]
    %v1121 = vld [vmem:[%s1093 + $0x6c] sm:$0xf]
    %v1122 = vld [vmem:[%s1093 + $0x70] sm:$0xf]
    %v1123 = vld [vmem:[%s1093 + $0x74] sm:$0xf]
    %v1124 = vld [vmem:[%s1093 + $0x78] sm:$0xf]
    %v1125 = vld [vmem:[%s1093 + $0x7c] sm:$0xf]
    %s1126 = scalar_lea.vmem %s4, 1
    %v1127 = vld [vmem:[%s1126] sm:$0x1]
    %v1128 = vld [vmem:[#allocation11] sm:$0xff]
    %v1129 = vld [vmem:[%s470] sm:$0xff]
    %v1130 = vld [vmem:[%s474] sm:$0xff]
    %v1131 = vld [vmem:[%s596] sm:$0xff]
    %v1132 = vld [vmem:[%s600] sm:$0xff]
    %v1133 = vld [vmem:[%s604] sm:$0xff]
    %v1134 = vld [vmem:[%s734] sm:$0xff]
    %v1135 = vld [vmem:[%s738] sm:$0xff]
    %v1136 = vld [vmem:[%s742] sm:$0xff]
    %v1137 = vld [vmem:[%s746] sm:$0xff]
    %v1138 = vld [vmem:[%s868] sm:$0xff]
    %v1139 = vld [vmem:[%s872] sm:$0xff]
    %v1140 = vld [vmem:[%s876] sm:$0xff]
    %v1141 = vld [vmem:[%s976] sm:$0xff]
    %v1142 = vld [vmem:[%s980] sm:$0xff]
    %v1143 = vld [vmem:[%s1072] sm:$0xff]
    %v1144 = vld [vmem:[%s276] sm:$0xff]
    %v1145 = vld [vmem:[%s472] sm:$0xff]
    %v1146 = vld [vmem:[%s476] sm:$0xff]
    %v1147 = vld [vmem:[%s598] sm:$0xff]
    %v1148 = vld [vmem:[%s602] sm:$0xff]
    %v1149 = vld [vmem:[%s606] sm:$0xff]
    %v1150 = vld [vmem:[%s736] sm:$0xff]
    %v1151 = vld [vmem:[%s740] sm:$0xff]
    %v1152 = vld [vmem:[%s744] sm:$0xff]
    %v1153 = vld [vmem:[%s748] sm:$0xff]
    %v1154 = vld [vmem:[%s870] sm:$0xff]
    %v1155 = vld [vmem:[%s874] sm:$0xff]
    %v1156 = vld [vmem:[%s878] sm:$0xff]
    %v1157 = vld [vmem:[%s978] sm:$0xff]
    %v1158 = vld [vmem:[%s982] sm:$0xff]
    %v1159 = vld [vmem:[%s1074] sm:$0xff]
    %v1160 = vpack.c.bf16 %v1129, %v1128
    %v1161 = vpack.c.bf16 %v1131, %v1130
    %v1162 = vpack.c.bf16 %v1133, %v1132
    %v1163 = vpack.c.bf16 %v1135, %v1134
    %v1164 = vpack.c.bf16 %v1137, %v1136
    %v1165 = vpack.c.bf16 %v1139, %v1138
    %v1166 = vpack.c.bf16 %v1141, %v1140
    %v1167 = vpack.c.bf16 %v1143, %v1142
    %v1168 = vpack.c.bf16 %v1145, %v1144
    %v1169 = vpack.c.bf16 %v1147, %v1146
    %v1170 = vpack.c.bf16 %v1149, %v1148
    %v1171 = vpack.c.bf16 %v1151, %v1150
    %v1172 = vpack.c.bf16 %v1153, %v1152
    %v1173 = vpack.c.bf16 %v1155, %v1154
    %v1174 = vpack.c.bf16 %v1157, %v1156
    %v1175 = vpack.c.bf16 %v1159, %v1158
    %v1177 = vlaneseq
    %v1178 = vshrl.u32 %v1177, 7
    %v1179 = vsub.s32 0, %v1178
    %v1180 = vrot.slane %v1127, %v1179
    %v1198 = vunpack.c.l.b16 %v1077
    %v1199 = vunpack.c.l.b16 %v1078
    %v1200 = vunpack.c.l.b16 %v1079
    %v1201 = vunpack.c.l.b16 %v1080
    %v1202 = vunpack.c.l.b16 %v1081
    %v1203 = vunpack.c.l.b16 %v1082
    %v1204 = vunpack.c.l.b16 %v1083
    %v1205 = vunpack.c.l.b16 %v1084
    %v1206 = vunpack.c.l.b16 %v1085
    %v1207 = vunpack.c.l.b16 %v1086
    %v1208 = vunpack.c.l.b16 %v1087
    %v1209 = vunpack.c.l.b16 %v1088
    %v1210 = vunpack.c.l.b16 %v1089
    %v1211 = vunpack.c.l.b16 %v1090
    %v1212 = vunpack.c.l.b16 %v1091
    %v1213 = vunpack.c.l.b16 %v1092
    %v1214 = vpack.c.b16 %v1199, %v1198
    %v1215 = vpack.c.b16 %v1201, %v1200
    %v1216 = vpack.c.b16 %v1203, %v1202
    %v1217 = vpack.c.b16 %v1205, %v1204
    %v1218 = vpack.c.b16 %v1207, %v1206
    %v1219 = vpack.c.b16 %v1209, %v1208
    %v1220 = vpack.c.b16 %v1211, %v1210
    %v1221 = vpack.c.b16 %v1213, %v1212
    %1230 = vmatprep.subr.bf16.mxu0 0
    %1231 = vmatpush1.bf16.msra.mxu0 %v1214
    %1232 = vmatprep.subr.bf16.mxu0 0
    %1233 = vmatpush1.bf16.msra.mxu0 %v1215
    %1234 = vmatprep.subr.bf16.mxu0 0
    %1235 = vmatpush1.bf16.msra.mxu0 %v1216
    %1236 = vmatprep.subr.bf16.mxu0 0
    %1237 = vmatpush1.bf16.msra.mxu0 %v1217
    %1238 = vmatprep.subr.bf16.mxu0 0
    %1239 = vmatpush1.bf16.msra.mxu0 %v1218
    %1240 = vmatprep.subr.bf16.mxu0 0
    %1241 = vmatpush1.bf16.msra.mxu0 %v1219
    %1242 = vmatprep.subr.bf16.mxu0 0
    %1243 = vmatpush1.bf16.msra.mxu0 %v1220
    %1244 = vmatprep.subr.bf16.mxu0 0
    %1245 = vmatpush1.bf16.msra.mxu0 %v1221
    %1246 = vmatprep.subr.bf16.mxu0 0
    %1247 = vmatpush1.bf16.msra.mxu0 0
    %1248 = vmatprep.subr.bf16.mxu0 0
    %1249 = vmatpush1.bf16.msra.mxu0 0
    %1250 = vmatprep.subr.bf16.mxu0 0
    %1251 = vmatpush1.bf16.msra.mxu0 0
    %1252 = vmatprep.subr.bf16.mxu0 0
    %1253 = vmatpush1.bf16.msra.mxu0 0
    %1254 = vmatprep.subr.bf16.mxu0 0
    %1255 = vmatpush1.bf16.msra.mxu0 0
    %1256 = vmatprep.subr.bf16.mxu0 0
    %1257 = vmatpush1.bf16.msra.mxu0 0
    %1258 = vmatprep.subr.bf16.mxu0 0
    %1259 = vmatpush1.bf16.msra.mxu0 0
    %1260 = vmatprep.subr.bf16.mxu0 0
    %1261 = vmatpush1.bf16.msra.mxu0 0
    %1262 = vmatprep.mubr.bf16.mxu0 0
    %1263 = vmatmul.mubr.bf16.gmra.mrb[0].mxu0 %v1160
    %v1264 = vpop.f32.mrb[0].mxu0
    %v1265 = vadd.f32 %v1180, %v1264
    %v1266 = vpop.f32.mrb[0].mxu0
    %v1267 = vpop.f32.mrb[0].mxu0
    %v1268 = vadd.f32 %v1180, %v1267
    %v1269 = vpop.f32.mrb[0].mxu0
    %1270 = vmatprep.mubr.bf16.mxu0 0
    %1271 = vmatmul.mubr.bf16.gmra.mrb[0].mxu0 %v1161
    %v1272 = vpop.f32.mrb[0].mxu0
    %v1273 = vadd.f32 %v1180, %v1272
    %v1274 = vpop.f32.mrb[0].mxu0
    %v1275 = vpop.f32.mrb[0].mxu0
    %v1276 = vadd.f32 %v1180, %v1275
    %v1277 = vpop.f32.mrb[0].mxu0
    %1278 = vmatprep.mubr.bf16.mxu0 0
    %1279 = vmatmul.mubr.bf16.gmra.mrb[0].mxu0 %v1162
    %v1280 = vpop.f32.mrb[0].mxu0
    %v1281 = vadd.f32 %v1180, %v1280
    %v1282 = vpop.f32.mrb[0].mxu0
    %v1283 = vpop.f32.mrb[0].mxu0
    %v1284 = vadd.f32 %v1180, %v1283
    %v1285 = vpop.f32.mrb[0].mxu0
    %1286 = vmatprep.mubr.bf16.mxu0 0
    %1287 = vmatmul.mubr.bf16.gmra.mrb[0].mxu0 %v1163
    %v1288 = vpop.f32.mrb[0].mxu0
    %v1289 = vadd.f32 %v1180, %v1288
    %v1290 = vpop.f32.mrb[0].mxu0
    %v1291 = vpop.f32.mrb[0].mxu0
    %v1292 = vadd.f32 %v1180, %v1291
    %v1293 = vpop.f32.mrb[0].mxu0
    %1294 = vmatprep.mubr.bf16.mxu0 0
    %1295 = vmatmul.mubr.bf16.gmra.mrb[0].mxu0 %v1164
    %v1296 = vpop.f32.mrb[0].mxu0
    %v1297 = vadd.f32 %v1180, %v1296
    %v1298 = vpop.f32.mrb[0].mxu0
    %v1299 = vpop.f32.mrb[0].mxu0
    %v1300 = vadd.f32 %v1180, %v1299
    %v1301 = vpop.f32.mrb[0].mxu0
    %1302 = vmatprep.mubr.bf16.mxu0 0
    %1303 = vmatmul.mubr.bf16.gmra.mrb[0].mxu0 %v1165
    %v1304 = vpop.f32.mrb[0].mxu0
    %v1305 = vadd.f32 %v1180, %v1304
    %v1306 = vpop.f32.mrb[0].mxu0
    %v1307 = vpop.f32.mrb[0].mxu0
    %v1308 = vadd.f32 %v1180, %v1307
    %v1309 = vpop.f32.mrb[0].mxu0
    %1310 = vmatprep.mubr.bf16.mxu0 0
    %1311 = vmatmul.mubr.bf16.gmra.mrb[0].mxu0 %v1166
    %v1312 = vpop.f32.mrb[0].mxu0
    %v1313 = vadd.f32 %v1180, %v1312
    %v1314 = vpop.f32.mrb[0].mxu0
    %v1315 = vpop.f32.mrb[0].mxu0
    %v1316 = vadd.f32 %v1180, %v1315
    %v1317 = vpop.f32.mrb[0].mxu0
    %1318 = vmatprep.mubr.bf16.mxu0 0
    %1319 = vmatmul.mubr.bf16.gmra.mrb[0].mxu0 %v1167
    %v1320 = vpop.f32.mrb[0].mxu0
    %v1321 = vadd.f32 %v1180, %v1320
    %v1322 = vpop.f32.mrb[0].mxu0
    %v1323 = vpop.f32.mrb[0].mxu0
    %v1324 = vadd.f32 %v1180, %v1323
    %v1325 = vpop.f32.mrb[0].mxu0
    %1326 = vmatprep.mubr.bf16.mxu0 0
    %1327 = vmatmul.mubr.bf16.gmra.mrb[0].mxu0 %v1168
    %v1328 = vpop.f32.mrb[0].mxu0
    %v1329 = vadd.f32 %v1180, %v1328
    %v1330 = vpop.f32.mrb[0].mxu0
    %v1331 = vpop.f32.mrb[0].mxu0
    %v1332 = vadd.f32 %v1180, %v1331
    %v1333 = vpop.f32.mrb[0].mxu0
    %1334 = vmatprep.mubr.bf16.mxu0 0
    %1335 = vmatmul.mubr.bf16.gmra.mrb[0].mxu0 %v1169
    %v1336 = vpop.f32.mrb[0].mxu0
    %v1337 = vadd.f32 %v1180, %v1336
    %v1338 = vpop.f32.mrb[0].mxu0
    %v1339 = vpop.f32.mrb[0].mxu0
    %v1340 = vadd.f32 %v1180, %v1339
    %v1341 = vpop.f32.mrb[0].mxu0
    %1342 = vmatprep.mubr.bf16.mxu0 0
    %1343 = vmatmul.mubr.bf16.gmra.mrb[0].mxu0 %v1170
    %v1344 = vpop.f32.mrb[0].mxu0
    %v1345 = vadd.f32 %v1180, %v1344
    %v1346 = vpop.f32.mrb[0].mxu0
    %v1347 = vpop.f32.mrb[0].mxu0
    %v1348 = vadd.f32 %v1180, %v1347
    %v1349 = vpop.f32.mrb[0].mxu0
    %1350 = vmatprep.mubr.bf16.mxu0 0
    %1351 = vmatmul.mubr.bf16.gmra.mrb[0].mxu0 %v1171
    %v1352 = vpop.f32.mrb[0].mxu0
    %v1353 = vadd.f32 %v1180, %v1352
    %v1354 = vpop.f32.mrb[0].mxu0
    %v1355 = vpop.f32.mrb[0].mxu0
    %v1356 = vadd.f32 %v1180, %v1355
    %v1357 = vpop.f32.mrb[0].mxu0
    %1358 = vmatprep.mubr.bf16.mxu0 0
    %1359 = vmatmul.mubr.bf16.gmra.mrb[0].mxu0 %v1172
    %v1360 = vpop.f32.mrb[0].mxu0
    %v1361 = vadd.f32 %v1180, %v1360
    %v1362 = vpop.f32.mrb[0].mxu0
    %v1363 = vpop.f32.mrb[0].mxu0
    %v1364 = vadd.f32 %v1180, %v1363
    %v1365 = vpop.f32.mrb[0].mxu0
    %1366 = vmatprep.mubr.bf16.mxu0 0
    %1367 = vmatmul.mubr.bf16.gmra.mrb[0].mxu0 %v1173
    %v1368 = vpop.f32.mrb[0].mxu0
    %v1369 = vadd.f32 %v1180, %v1368
    %v1370 = vpop.f32.mrb[0].mxu0
    %v1371 = vpop.f32.mrb[0].mxu0
    %v1372 = vadd.f32 %v1180, %v1371
    %v1373 = vpop.f32.mrb[0].mxu0
    %1374 = vmatprep.mubr.bf16.mxu0 0
    %1375 = vmatmul.mubr.bf16.gmra.mrb[0].mxu0 %v1174
    %v1376 = vpop.f32.mrb[0].mxu0
    %v1377 = vadd.f32 %v1180, %v1376
    %v1378 = vpop.f32.mrb[0].mxu0
    %v1379 = vpop.f32.mrb[0].mxu0
    %v1380 = vadd.f32 %v1180, %v1379
    %v1381 = vpop.f32.mrb[0].mxu0
    %1382 = vmatprep.mubr.bf16.mxu0 0
    %1383 = vmatmul.mubr.bf16.gmra.mrb[0].mxu0 %v1175
    %v1384 = vpop.f32.mrb[0].mxu0
    %v1385 = vadd.f32 %v1180, %v1384
    %v1386 = vpop.f32.mrb[0].mxu0
    %v1387 = vpop.f32.mrb[0].mxu0
    %v1388 = vadd.f32 %v1180, %v1387
    %v1389 = vpop.f32.mrb[0].mxu0
    %1390 = vdwg.mxu0
    %1391 = vst [vmem:[#allocation2] sm:$0xff] %v1265
    %1392 = vst [vmem:[#allocation2 + $0x8] sm:$0xff] %v1268
    %1393 = vst [vmem:[#allocation2 + $0x10] sm:$0xff] %v1273
    %1394 = vst [vmem:[#allocation2 + $0x18] sm:$0xff] %v1276
    %1395 = vst [vmem:[#allocation2 + $0x20] sm:$0xff] %v1281
    %1396 = vst [vmem:[#allocation2 + $0x28] sm:$0xff] %v1284
    %1397 = vst [vmem:[#allocation2 + $0x30] sm:$0xff] %v1289
    %1398 = vst [vmem:[#allocation2 + $0x38] sm:$0xff] %v1292
    %1399 = vst [vmem:[#allocation2 + $0x40] sm:$0xff] %v1297
    %1400 = vst [vmem:[#allocation2 + $0x48] sm:$0xff] %v1300
    %1401 = vst [vmem:[#allocation2 + $0x50] sm:$0xff] %v1305
    %1402 = vst [vmem:[#allocation2 + $0x58] sm:$0xff] %v1308
    %1403 = vst [vmem:[#allocation2 + $0x60] sm:$0xff] %v1313
    %1404 = vst [vmem:[#allocation2 + $0x68] sm:$0xff] %v1316
    %1405 = vst [vmem:[#allocation2 + $0x70] sm:$0xff] %v1321
    %1406 = vst [vmem:[#allocation2 + $0x78] sm:$0xff] %v1324
    %1407 = vst [vmem:[#allocation2 + $0x80] sm:$0xff] %v1329
    %1408 = vst [vmem:[#allocation2 + $0x88] sm:$0xff] %v1332
    %1409 = vst [vmem:[#allocation2 + $0x90] sm:$0xff] %v1337
    %1410 = vst [vmem:[#allocation2 + $0x98] sm:$0xff] %v1340
    %1411 = vst [vmem:[#allocation2 + $0xa0] sm:$0xff] %v1345
    %1412 = vst [vmem:[#allocation2 + $0xa8] sm:$0xff] %v1348
    %1413 = vst [vmem:[#allocation2 + $0xb0] sm:$0xff] %v1353
    %1414 = vst [vmem:[#allocation2 + $0xb8] sm:$0xff] %v1356
    %1415 = vst [vmem:[#allocation2 + $0xc0] sm:$0xff] %v1361
    %1416 = vst [vmem:[#allocation2 + $0xc8] sm:$0xff] %v1364
    %1417 = vst [vmem:[#allocation2 + $0xd0] sm:$0xff] %v1369
    %1418 = vst [vmem:[#allocation2 + $0xd8] sm:$0xff] %v1372
    %1419 = vst [vmem:[#allocation2 + $0xe0] sm:$0xff] %v1377
    %1420 = vst [vmem:[#allocation2 + $0xe8] sm:$0xff] %v1380
    %1421 = vst [vmem:[#allocation2 + $0xf0] sm:$0xff] %v1385
    %1422 = vst [vmem:[#allocation2 + $0xf8] sm:$0xff] %v1388
    %v1423 = vld [vmem:[#allocation2] sm:$0xff]
    %v1424 = vld [vmem:[#allocation2 + $0x80] sm:$0xff]
    %v1425 = vtanh.pop %v1423
    %v1426 = vtanh.pop %v1424
    %s1427 = scalar_lea.vmem [#allocation11], 256
    %1428 = vst [vmem:[%s1427] sm:$0xff] %v1425
    %s1429 = scalar_lea.vmem [#allocation11], 264
    %1430 = vst [vmem:[%s1429] sm:$0xff] %v1426
    %v1431 = vld [vmem:[#allocation2 + $0x8] sm:$0xff]
    %v1432 = vld [vmem:[#allocation2 + $0x10] sm:$0xff]
    %v1433 = vld [vmem:[#allocation2 + $0x88] sm:$0xff]
    %v1434 = vld [vmem:[#allocation2 + $0x90] sm:$0xff]
    %v1435 = vpack.c.bf16 %v1425, 0.0
    %v1436 = vpack.c.bf16 0.0, %v1425
    %v1453 = vunpack.c.l.b16 %v1110
    %v1454 = vunpack.c.l.b16 %v1111
    %v1455 = vunpack.c.l.b16 %v1112
    %v1456 = vunpack.c.l.b16 %v1113
    %v1457 = vunpack.c.l.b16 %v1114
    %v1458 = vunpack.c.l.b16 %v1115
    %v1459 = vunpack.c.l.b16 %v1116
    %v1460 = vunpack.c.l.b16 %v1117
    %v1461 = vunpack.c.l.b16 %v1118
    %v1462 = vunpack.c.l.b16 %v1119
    %v1463 = vunpack.c.l.b16 %v1120
    %v1464 = vunpack.c.l.b16 %v1121
    %v1465 = vunpack.c.l.b16 %v1122
    %v1466 = vunpack.c.l.b16 %v1123
    %v1467 = vunpack.c.l.b16 %v1124
    %v1468 = vunpack.c.l.b16 %v1125
    %v1469 = vpack.c.b16 %v1454, %v1453
    %v1470 = vpack.c.b16 %v1456, %v1455
    %v1471 = vpack.c.b16 %v1458, %v1457
    %v1472 = vpack.c.b16 %v1460, %v1459
    %v1473 = vpack.c.b16 %v1462, %v1461
    %v1474 = vpack.c.b16 %v1464, %v1463
    %v1475 = vpack.c.b16 %v1466, %v1465
    %v1476 = vpack.c.b16 %v1468, %v1467
    %1485 = vmatprep.subr.bf16.mxu0 0
    %1486 = vmatpush1.bf16.msra.mxu0 %v1469
    %1487 = vmatprep.subr.bf16.mxu0 0
    %1488 = vmatpush1.bf16.msra.mxu0 %v1470
    %1489 = vmatprep.subr.bf16.mxu0 0
    %1490 = vmatpush1.bf16.msra.mxu0 %v1471
    %1491 = vmatprep.subr.bf16.mxu0 0
    %1492 = vmatpush1.bf16.msra.mxu0 %v1472
    %1493 = vmatprep.subr.bf16.mxu0 0
    %1494 = vmatpush1.bf16.msra.mxu0 %v1473
    %1495 = vmatprep.subr.bf16.mxu0 0
    %1496 = vmatpush1.bf16.msra.mxu0 %v1474
    %1497 = vmatprep.subr.bf16.mxu0 0
    %1498 = vmatpush1.bf16.msra.mxu0 %v1475
    %1499 = vmatprep.subr.bf16.mxu0 0
    %1500 = vmatpush1.bf16.msra.mxu0 %v1476
    %1501 = vmatprep.subr.bf16.mxu0 0
    %1502 = vmatpush1.bf16.msra.mxu0 0
    %1503 = vmatprep.subr.bf16.mxu0 0
    %1504 = vmatpush1.bf16.msra.mxu0 0
    %1505 = vmatprep.subr.bf16.mxu0 0
    %1506 = vmatpush1.bf16.msra.mxu0 0
    %1507 = vmatprep.subr.bf16.mxu0 0
    %1508 = vmatpush1.bf16.msra.mxu0 0
    %1509 = vmatprep.subr.bf16.mxu0 0
    %1510 = vmatpush1.bf16.msra.mxu0 0
    %1511 = vmatprep.subr.bf16.mxu0 0
    %1512 = vmatpush1.bf16.msra.mxu0 0
    %1513 = vmatprep.subr.bf16.mxu0 0
    %1514 = vmatpush1.bf16.msra.mxu0 0
    %1515 = vmatprep.subr.bf16.mxu0 0
    %1516 = vmatpush1.bf16.msra.mxu0 0
    %1517 = vmatprep.mubr.bf16.mxu0 0
    %1518 = vmatmul.mubr.bf16.gmra.mrb[0].mxu0 %v1436
    %v1519 = vpop.f32.mrb[0].mxu0
    %v1520 = vadd.f32 0.0, %v1519
    %v1521 = vpop.f32.mrb[0].mxu0
    %v1522 = vpop.f32.mrb[0].mxu0
    %v1523 = vadd.f32 0.0, %v1522
    %v1524 = vpop.f32.mrb[0].mxu0
    %1525 = vdwg.mxu0
    %v1542 = vunpack.c.l.b16 %v1094
    %v1543 = vunpack.c.l.b16 %v1095
    %v1544 = vunpack.c.l.b16 %v1096
    %v1545 = vunpack.c.l.b16 %v1097
    %v1546 = vunpack.c.l.b16 %v1098
    %v1547 = vunpack.c.l.b16 %v1099
    %v1548 = vunpack.c.l.b16 %v1100
    %v1549 = vunpack.c.l.b16 %v1101
    %v1550 = vunpack.c.l.b16 %v1102
    %v1551 = vunpack.c.l.b16 %v1103
    %v1552 = vunpack.c.l.b16 %v1104
    %v1553 = vunpack.c.l.b16 %v1105
    %v1554 = vunpack.c.l.b16 %v1106
    %v1555 = vunpack.c.l.b16 %v1107
    %v1556 = vunpack.c.l.b16 %v1108
    %v1557 = vunpack.c.l.b16 %v1109
    %v1558 = vpack.c.b16 %v1543, %v1542
    %v1559 = vpack.c.b16 %v1545, %v1544
    %v1560 = vpack.c.b16 %v1547, %v1546
    %v1561 = vpack.c.b16 %v1549, %v1548
    %v1562 = vpack.c.b16 %v1551, %v1550
    %v1563 = vpack.c.b16 %v1553, %v1552
    %v1564 = vpack.c.b16 %v1555, %v1554
    %v1565 = vpack.c.b16 %v1557, %v1556
    %1574 = vmatprep.subr.bf16.mxu0 0
    %1575 = vmatpush1.bf16.msra.mxu0 %v1558
    %1576 = vmatprep.subr.bf16.mxu0 0
    %1577 = vmatpush1.bf16.msra.mxu0 %v1559
    %1578 = vmatprep.subr.bf16.mxu0 0
    %1579 = vmatpush1.bf16.msra.mxu0 %v1560
    %1580 = vmatprep.subr.bf16.mxu0 0
    %1581 = vmatpush1.bf16.msra.mxu0 %v1561
    %1582 = vmatprep.subr.bf16.mxu0 0
    %1583 = vmatpush1.bf16.msra.mxu0 %v1562
    %1584 = vmatprep.subr.bf16.mxu0 0
    %1585 = vmatpush1.bf16.msra.mxu0 %v1563
    %1586 = vmatprep.subr.bf16.mxu0 0
    %1587 = vmatpush1.bf16.msra.mxu0 %v1564
    %1588 = vmatprep.subr.bf16.mxu0 0
    %1589 = vmatpush1.bf16.msra.mxu0 %v1565
    %1590 = vmatprep.subr.bf16.mxu0 0
    %1591 = vmatpush1.bf16.msra.mxu0 0
    %1592 = vmatprep.subr.bf16.mxu0 0
    %1593 = vmatpush1.bf16.msra.mxu0 0
    %1594 = vmatprep.subr.bf16.mxu0 0
    %1595 = vmatpush1.bf16.msra.mxu0 0
    %1596 = vmatprep.subr.bf16.mxu0 0
    %1597 = vmatpush1.bf16.msra.mxu0 0
    %1598 = vmatprep.subr.bf16.mxu0 0
    %1599 = vmatpush1.bf16.msra.mxu0 0
    %1600 = vmatprep.subr.bf16.mxu0 0
    %1601 = vmatpush1.bf16.msra.mxu0 0
    %1602 = vmatprep.subr.bf16.mxu0 0
    %1603 = vmatpush1.bf16.msra.mxu0 0
    %1604 = vmatprep.subr.bf16.mxu0 0
    %1605 = vmatpush1.bf16.msra.mxu0 0
    %1606 = vmatprep.mubr.bf16.mxu0 0
    %1607 = vmatmul.mubr.bf16.gmra.mrb[0].mxu0 %v1435
    %v1608 = vpop.f32.mrb[0].mxu0
    %v1609 = vadd.f32 %v1520, %v1608
    %v1610 = vpop.f32.mrb[0].mxu0
    %v1611 = vpop.f32.mrb[0].mxu0
    %v1612 = vadd.f32 %v1523, %v1611
    %v1613 = vpop.f32.mrb[0].mxu0
    %1614 = vdwg.mxu0
    %v1615 = vadd.f32 %v1431, %v1609
    %v1616 = vadd.f32 %v1432, %v1612
    %v1617 = vadd.f32 %v1433, %v1609
    %v1618 = vadd.f32 %v1434, %v1612
    %v1619 = vtanh.pop %v1615
    %v1620 = vtanh.pop %v1616
    %v1621 = vtanh.pop %v1617
    %v1622 = vtanh.pop %v1618
    %s1623 = scalar_lea.vmem [#allocation11], 272
    %1624 = vst [vmem:[%s1623] sm:$0xff] %v1619
    %s1625 = scalar_lea.vmem [#allocation11], 280
    %1626 = vst [vmem:[%s1625] sm:$0xff] %v1621
    %s1627 = scalar_lea.vmem [#allocation11], 320
    %1628 = vst [vmem:[%s1627] sm:$0xff] %v1620
    %s1629 = scalar_lea.vmem [#allocation11], 328
    %1630 = vst [vmem:[%s1629] sm:$0xff] %v1622
    %v1631 = vld [vmem:[#allocation2 + $0x18] sm:$0xff]
    %v1632 = vld [vmem:[#allocation2 + $0x20] sm:$0xff]
    %v1633 = vld [vmem:[#allocation2 + $0x28] sm:$0xff]
    %v1634 = vld [vmem:[#allocation2 + $0x98] sm:$0xff]
    %v1635 = vld [vmem:[#allocation2 + $0xa0] sm:$0xff]
    %v1636 = vld [vmem:[#allocation2 + $0xa8] sm:$0xff]
    %v1637 = vpack.c.bf16 %v1619, 0.0
    %v1638 = vpack.c.bf16 %v1620, %v1620
    %v1639 = vpack.c.bf16 %v1620, %v1619
    %1640 = vmatprep.subr.bf16.mxu0 0
    %1641 = vmatpush1.bf16.msra.mxu0 %v1469
    %1642 = vmatprep.subr.bf16.mxu0 0
    %1643 = vmatpush1.bf16.msra.mxu0 %v1470
    %1644 = vmatprep.subr.bf16.mxu0 0
    %1645 = vmatpush1.bf16.msra.mxu0 %v1471
    %1646 = vmatprep.subr.bf16.mxu0 0
    %1647 = vmatpush1.bf16.msra.mxu0 %v1472
    %1648 = vmatprep.subr.bf16.mxu0 0
    %1649 = vmatpush1.bf16.msra.mxu0 %v1473
    %1650 = vmatprep.subr.bf16.mxu0 0
    %1651 = vmatpush1.bf16.msra.mxu0 %v1474
    %1652 = vmatprep.subr.bf16.mxu0 0
    %1653 = vmatpush1.bf16.msra.mxu0 %v1475
    %1654 = vmatprep.subr.bf16.mxu0 0
    %1655 = vmatpush1.bf16.msra.mxu0 %v1476
    %1656 = vmatprep.subr.bf16.mxu0 0
    %1657 = vmatpush1.bf16.msra.mxu0 0
    %1658 = vmatprep.subr.bf16.mxu0 0
    %1659 = vmatpush1.bf16.msra.mxu0 0
    %1660 = vmatprep.subr.bf16.mxu0 0
    %1661 = vmatpush1.bf16.msra.mxu0 0
    %1662 = vmatprep.subr.bf16.mxu0 0
    %1663 = vmatpush1.bf16.msra.mxu0 0
    %1664 = vmatprep.subr.bf16.mxu0 0
    %1665 = vmatpush1.bf16.msra.mxu0 0
    %1666 = vmatprep.subr.bf16.mxu0 0
    %1667 = vmatpush1.bf16.msra.mxu0 0
    %1668 = vmatprep.subr.bf16.mxu0 0
    %1669 = vmatpush1.bf16.msra.mxu0 0
    %1670 = vmatprep.subr.bf16.mxu0 0
    %1671 = vmatpush1.bf16.msra.mxu0 0
    %1672 = vmatprep.mubr.bf16.mxu0 0
    %1673 = vmatmul.mubr.bf16.gmra.mrb[0].mxu0 %v1639
    %v1674 = vpop.f32.mrb[0].mxu0
    %v1675 = vadd.f32 0.0, %v1674
    %v1676 = vpop.f32.mrb[0].mxu0
    %v1677 = vpop.f32.mrb[0].mxu0
    %v1678 = vadd.f32 0.0, %v1677
    %v1679 = vpop.f32.mrb[0].mxu0
    %1680 = vmatprep.mubr.bf16.mxu0 0
    %1681 = vmatmul.mubr.bf16.gmra.mrb[0].mxu0 %v487
    %v1682 = vpop.f32.mrb[0].mxu0
    %v1683 = vadd.f32 0.0, %v1682
    %v1684 = vpop.f32.mrb[0].mxu0
    %v1685 = vpop.f32.mrb[0].mxu0
    %v1686 = vpop.f32.mrb[0].mxu0
    %1687 = vdwg.mxu0
    %1688 = vmatprep.subr.bf16.mxu0 0
    %1689 = vmatpush1.bf16.msra.mxu0 %v1558
    %1690 = vmatprep.subr.bf16.mxu0 0
    %1691 = vmatpush1.bf16.msra.mxu0 %v1559
    %1692 = vmatprep.subr.bf16.mxu0 0
    %1693 = vmatpush1.bf16.msra.mxu0 %v1560
    %1694 = vmatprep.subr.bf16.mxu0 0
    %1695 = vmatpush1.bf16.msra.mxu0 %v1561
    %1696 = vmatprep.subr.bf16.mxu0 0
    %1697 = vmatpush1.bf16.msra.mxu0 %v1562
    %1698 = vmatprep.subr.bf16.mxu0 0
    %1699 = vmatpush1.bf16.msra.mxu0 %v1563
    %1700 = vmatprep.subr.bf16.mxu0 0
    %1701 = vmatpush1.bf16.msra.mxu0 %v1564
    %1702 = vmatprep.subr.bf16.mxu0 0
    %1703 = vmatpush1.bf16.msra.mxu0 %v1565
    %1704 = vmatprep.subr.bf16.mxu0 0
    %1705 = vmatpush1.bf16.msra.mxu0 0
    %1706 = vmatprep.subr.bf16.mxu0 0
    %1707 = vmatpush1.bf16.msra.mxu0 0
    %1708 = vmatprep.subr.bf16.mxu0 0
    %1709 = vmatpush1.bf16.msra.mxu0 0
    %1710 = vmatprep.subr.bf16.mxu0 0
    %1711 = vmatpush1.bf16.msra.mxu0 0
    %1712 = vmatprep.subr.bf16.mxu0 0
    %1713 = vmatpush1.bf16.msra.mxu0 0
    %1714 = vmatprep.subr.bf16.mxu0 0
    %1715 = vmatpush1.bf16.msra.mxu0 0
    %1716 = vmatprep.subr.bf16.mxu0 0
    %1717 = vmatpush1.bf16.msra.mxu0 0
    %1718 = vmatprep.subr.bf16.mxu0 0
    %1719 = vmatpush1.bf16.msra.mxu0 0
    %1720 = vmatprep.mubr.bf16.mxu0 0
    %1721 = vmatmul.mubr.bf16.gmra.mrb[0].mxu0 %v1637
    %v1722 = vpop.f32.mrb[0].mxu0
    %v1723 = vadd.f32 %v1675, %v1722
    %v1724 = vpop.f32.mrb[0].mxu0
    %v1725 = vpop.f32.mrb[0].mxu0
    %v1726 = vadd.f32 %v1678, %v1725
    %v1727 = vpop.f32.mrb[0].mxu0
    %1728 = vmatprep.mubr.bf16.mxu0 0
    %1729 = vmatmul.mubr.bf16.gmra.mrb[0].mxu0 %v1638
    %v1730 = vpop.f32.mrb[0].mxu0
    %v1731 = vadd.f32 %v1683, %v1730
    %v1732 = vpop.f32.mrb[0].mxu0
    %v1733 = vpop.f32.mrb[0].mxu0
    %v1734 = vpop.f32.mrb[0].mxu0
    %1735 = vdwg.mxu0
    %v1736 = vadd.f32 %v1631, %v1723
    %v1737 = vadd.f32 %v1632, %v1726
    %v1738 = vadd.f32 %v1633, %v1731
    %v1739 = vadd.f32 %v1634, %v1723
    %v1740 = vadd.f32 %v1635, %v1726
    %v1741 = vadd.f32 %v1636, %v1731
    %v1742 = vtanh.pop %v1736
    %v1743 = vtanh.pop %v1737
    %v1744 = vtanh.pop %v1738
    %v1745 = vtanh.pop %v1739
    %v1746 = vtanh.pop %v1740
    %v1747 = vtanh.pop %v1741
    %s1748 = scalar_lea.vmem [#allocation11], 288
    %1749 = vst [vmem:[%s1748] sm:$0xff] %v1742
    %s1750 = scalar_lea.vmem [#allocation11], 296
    %1751 = vst [vmem:[%s1750] sm:$0xff] %v1745
    %s1752 = scalar_lea.vmem [#allocation11], 336
    %1753 = vst [vmem:[%s1752] sm:$0xff] %v1743
    %s1754 = scalar_lea.vmem [#allocation11], 344
    %1755 = vst [vmem:[%s1754] sm:$0xff] %v1746
    %s1756 = scalar_lea.vmem [#allocation11], 384
    %1757 = vst [vmem:[%s1756] sm:$0xff] %v1744
    %s1758 = scalar_lea.vmem [#allocation11], 392
    %1759 = vst [vmem:[%s1758] sm:$0xff] %v1747
    %v1760 = vld [vmem:[#allocation2 + $0x30] sm:$0xff]
    %v1761 = vld [vmem:[#allocation2 + $0x38] sm:$0xff]
    %v1762 = vld [vmem:[#allocation2 + $0x40] sm:$0xff]
    %v1763 = vld [vmem:[#allocation2 + $0x48] sm:$0xff]
    %v1764 = vld [vmem:[#allocation2 + $0xb0] sm:$0xff]
    %v1765 = vld [vmem:[#allocation2 + $0xb8] sm:$0xff]
    %v1766 = vld [vmem:[#allocation2 + $0xc0] sm:$0xff]
    %v1767 = vld [vmem:[#allocation2 + $0xc8] sm:$0xff]
    %v1768 = vpack.c.bf16 %v1742, 0.0
    %v1769 = vpack.c.bf16 %v1744, %v1743
    %v1770 = vpack.c.bf16 %v1743, %v1742
    %v1771 = vpack.c.bf16 0.0, %v1744
    %1772 = vmatprep.subr.bf16.mxu0 0
    %1773 = vmatpush1.bf16.msra.mxu0 %v1469
    %1774 = vmatprep.subr.bf16.mxu0 0
    %1775 = vmatpush1.bf16.msra.mxu0 %v1470
    %1776 = vmatprep.subr.bf16.mxu0 0
    %1777 = vmatpush1.bf16.msra.mxu0 %v1471
    %1778 = vmatprep.subr.bf16.mxu0 0
    %1779 = vmatpush1.bf16.msra.mxu0 %v1472
    %1780 = vmatprep.subr.bf16.mxu0 0
    %1781 = vmatpush1.bf16.msra.mxu0 %v1473
    %1782 = vmatprep.subr.bf16.mxu0 0
    %1783 = vmatpush1.bf16.msra.mxu0 %v1474
    %1784 = vmatprep.subr.bf16.mxu0 0
    %1785 = vmatpush1.bf16.msra.mxu0 %v1475
    %1786 = vmatprep.subr.bf16.mxu0 0
    %1787 = vmatpush1.bf16.msra.mxu0 %v1476
    %1788 = vmatprep.subr.bf16.mxu0 0
    %1789 = vmatpush1.bf16.msra.mxu0 0
    %1790 = vmatprep.subr.bf16.mxu0 0
    %1791 = vmatpush1.bf16.msra.mxu0 0
    %1792 = vmatprep.subr.bf16.mxu0 0
    %1793 = vmatpush1.bf16.msra.mxu0 0
    %1794 = vmatprep.subr.bf16.mxu0 0
    %1795 = vmatpush1.bf16.msra.mxu0 0
    %1796 = vmatprep.subr.bf16.mxu0 0
    %1797 = vmatpush1.bf16.msra.mxu0 0
    %1798 = vmatprep.subr.bf16.mxu0 0
    %1799 = vmatpush1.bf16.msra.mxu0 0
    %1800 = vmatprep.subr.bf16.mxu0 0
    %1801 = vmatpush1.bf16.msra.mxu0 0
    %1802 = vmatprep.subr.bf16.mxu0 0
    %1803 = vmatpush1.bf16.msra.mxu0 0
    %1804 = vmatprep.mubr.bf16.mxu0 0
    %1805 = vmatmul.mubr.bf16.gmra.mrb[0].mxu0 %v1770
    %v1806 = vpop.f32.mrb[0].mxu0
    %v1807 = vadd.f32 0.0, %v1806
    %v1808 = vpop.f32.mrb[0].mxu0
    %v1809 = vpop.f32.mrb[0].mxu0
    %v1810 = vadd.f32 0.0, %v1809
    %v1811 = vpop.f32.mrb[0].mxu0
    %1812 = vmatprep.mubr.bf16.mxu0 0
    %1813 = vmatmul.mubr.bf16.gmra.mrb[0].mxu0 %v1771
    %v1814 = vpop.f32.mrb[0].mxu0
    %v1815 = vadd.f32 0.0, %v1814
    %v1816 = vpop.f32.mrb[0].mxu0
    %v1817 = vpop.f32.mrb[0].mxu0
    %v1818 = vadd.f32 0.0, %v1817
    %v1819 = vpop.f32.mrb[0].mxu0
    %1820 = vdwg.mxu0
    %1821 = vmatprep.subr.bf16.mxu0 0
    %1822 = vmatpush1.bf16.msra.mxu0 %v1558
    %1823 = vmatprep.subr.bf16.mxu0 0
    %1824 = vmatpush1.bf16.msra.mxu0 %v1559
    %1825 = vmatprep.subr.bf16.mxu0 0
    %1826 = vmatpush1.bf16.msra.mxu0 %v1560
    %1827 = vmatprep.subr.bf16.mxu0 0
    %1828 = vmatpush1.bf16.msra.mxu0 %v1561
    %1829 = vmatprep.subr.bf16.mxu0 0
    %1830 = vmatpush1.bf16.msra.mxu0 %v1562
    %1831 = vmatprep.subr.bf16.mxu0 0
    %1832 = vmatpush1.bf16.msra.mxu0 %v1563
    %1833 = vmatprep.subr.bf16.mxu0 0
    %1834 = vmatpush1.bf16.msra.mxu0 %v1564
    %1835 = vmatprep.subr.bf16.mxu0 0
    %1836 = vmatpush1.bf16.msra.mxu0 %v1565
    %1837 = vmatprep.subr.bf16.mxu0 0
    %1838 = vmatpush1.bf16.msra.mxu0 0
    %1839 = vmatprep.subr.bf16.mxu0 0
    %1840 = vmatpush1.bf16.msra.mxu0 0
    %1841 = vmatprep.subr.bf16.mxu0 0
    %1842 = vmatpush1.bf16.msra.mxu0 0
    %1843 = vmatprep.subr.bf16.mxu0 0
    %1844 = vmatpush1.bf16.msra.mxu0 0
    %1845 = vmatprep.subr.bf16.mxu0 0
    %1846 = vmatpush1.bf16.msra.mxu0 0
    %1847 = vmatprep.subr.bf16.mxu0 0
    %1848 = vmatpush1.bf16.msra.mxu0 0
    %1849 = vmatprep.subr.bf16.mxu0 0
    %1850 = vmatpush1.bf16.msra.mxu0 0
    %1851 = vmatprep.subr.bf16.mxu0 0
    %1852 = vmatpush1.bf16.msra.mxu0 0
    %1853 = vmatprep.mubr.bf16.mxu0 0
    %1854 = vmatmul.mubr.bf16.gmra.mrb[0].mxu0 %v1768
    %v1855 = vpop.f32.mrb[0].mxu0
    %v1856 = vadd.f32 %v1807, %v1855
    %v1857 = vpop.f32.mrb[0].mxu0
    %v1858 = vpop.f32.mrb[0].mxu0
    %v1859 = vadd.f32 %v1810, %v1858
    %v1860 = vpop.f32.mrb[0].mxu0
    %1861 = vmatprep.mubr.bf16.mxu0 0
    %1862 = vmatmul.mubr.bf16.gmra.mrb[0].mxu0 %v1769
    %v1863 = vpop.f32.mrb[0].mxu0
    %v1864 = vadd.f32 %v1815, %v1863
    %v1865 = vpop.f32.mrb[0].mxu0
    %v1866 = vpop.f32.mrb[0].mxu0
    %v1867 = vadd.f32 %v1818, %v1866
    %v1868 = vpop.f32.mrb[0].mxu0
    %1869 = vdwg.mxu0
    %v1870 = vadd.f32 %v1760, %v1856
    %v1871 = vadd.f32 %v1761, %v1859
    %v1872 = vadd.f32 %v1762, %v1864
    %v1873 = vadd.f32 %v1763, %v1867
    %v1874 = vadd.f32 %v1764, %v1856
    %v1875 = vadd.f32 %v1765, %v1859
    %v1876 = vadd.f32 %v1766, %v1864
    %v1877 = vadd.f32 %v1767, %v1867
    %v1878 = vtanh.pop %v1870
    %v1879 = vtanh.pop %v1871
    %v1880 = vtanh.pop %v1872
    %v1881 = vtanh.pop %v1873
    %v1882 = vtanh.pop %v1874
    %v1883 = vtanh.pop %v1875
    %v1884 = vtanh.pop %v1876
    %v1885 = vtanh.pop %v1877
    %s1886 = scalar_lea.vmem [#allocation11], 304
    %1887 = vst [vmem:[%s1886] sm:$0xff] %v1878
    %s1888 = scalar_lea.vmem [#allocation11], 312
    %1889 = vst [vmem:[%s1888] sm:$0xff] %v1882
    %s1890 = scalar_lea.vmem [#allocation11], 352
    %1891 = vst [vmem:[%s1890] sm:$0xff] %v1879
    %s1892 = scalar_lea.vmem [#allocation11], 360
    %1893 = vst [vmem:[%s1892] sm:$0xff] %v1883
    %s1894 = scalar_lea.vmem [#allocation11], 400
    %1895 = vst [vmem:[%s1894] sm:$0xff] %v1880
    %s1896 = scalar_lea.vmem [#allocation11], 408
    %1897 = vst [vmem:[%s1896] sm:$0xff] %v1884
    %s1898 = scalar_lea.vmem [#allocation11], 448
    %1899 = vst [vmem:[%s1898] sm:$0xff] %v1881
    %s1900 = scalar_lea.vmem [#allocation11], 456
    %1901 = vst [vmem:[%s1900] sm:$0xff] %v1885
    %v1902 = vld [vmem:[#allocation2 + $0x50] sm:$0xff]
    %v1903 = vld [vmem:[#allocation2 + $0x58] sm:$0xff]
    %v1904 = vld [vmem:[#allocation2 + $0x60] sm:$0xff]
    %v1905 = vld [vmem:[#allocation2 + $0xd0] sm:$0xff]
    %v1906 = vld [vmem:[#allocation2 + $0xd8] sm:$0xff]
    %v1907 = vld [vmem:[#allocation2 + $0xe0] sm:$0xff]
    %v1908 = vpack.c.bf16 %v1879, %v1878
    %v1909 = vpack.c.bf16 %v1880, %v1880
    %v1910 = vpack.c.bf16 %v1880, %v1879
    %v1911 = vpack.c.bf16 %v1881, %v1881
    %1912 = vmatprep.subr.bf16.mxu0 0
    %1913 = vmatpush1.bf16.msra.mxu0 %v1469
    %1914 = vmatprep.subr.bf16.mxu0 0
    %1915 = vmatpush1.bf16.msra.mxu0 %v1470
    %1916 = vmatprep.subr.bf16.mxu0 0
    %1917 = vmatpush1.bf16.msra.mxu0 %v1471
    %1918 = vmatprep.subr.bf16.mxu0 0
    %1919 = vmatpush1.bf16.msra.mxu0 %v1472
    %1920 = vmatprep.subr.bf16.mxu0 0
    %1921 = vmatpush1.bf16.msra.mxu0 %v1473
    %1922 = vmatprep.subr.bf16.mxu0 0
    %1923 = vmatpush1.bf16.msra.mxu0 %v1474
    %1924 = vmatprep.subr.bf16.mxu0 0
    %1925 = vmatpush1.bf16.msra.mxu0 %v1475
    %1926 = vmatprep.subr.bf16.mxu0 0
    %1927 = vmatpush1.bf16.msra.mxu0 %v1476
    %1928 = vmatprep.subr.bf16.mxu0 0
    %1929 = vmatpush1.bf16.msra.mxu0 0
    %1930 = vmatprep.subr.bf16.mxu0 0
    %1931 = vmatpush1.bf16.msra.mxu0 0
    %1932 = vmatprep.subr.bf16.mxu0 0
    %1933 = vmatpush1.bf16.msra.mxu0 0
    %1934 = vmatprep.subr.bf16.mxu0 0
    %1935 = vmatpush1.bf16.msra.mxu0 0
    %1936 = vmatprep.subr.bf16.mxu0 0
    %1937 = vmatpush1.bf16.msra.mxu0 0
    %1938 = vmatprep.subr.bf16.mxu0 0
    %1939 = vmatpush1.bf16.msra.mxu0 0
    %1940 = vmatprep.subr.bf16.mxu0 0
    %1941 = vmatpush1.bf16.msra.mxu0 0
    %1942 = vmatprep.subr.bf16.mxu0 0
    %1943 = vmatpush1.bf16.msra.mxu0 0
    %1944 = vmatprep.mubr.bf16.mxu0 0
    %1945 = vmatmul.mubr.bf16.gmra.mrb[0].mxu0 %v1910
    %v1946 = vpop.f32.mrb[0].mxu0
    %v1947 = vadd.f32 0.0, %v1946
    %v1948 = vpop.f32.mrb[0].mxu0
    %v1949 = vpop.f32.mrb[0].mxu0
    %v1950 = vadd.f32 0.0, %v1949
    %v1951 = vpop.f32.mrb[0].mxu0
    %1952 = vmatprep.mubr.bf16.mxu0 0
    %1953 = vmatmul.mubr.bf16.gmra.mrb[0].mxu0 %v1911
    %v1954 = vpop.f32.mrb[0].mxu0
    %v1955 = vadd.f32 0.0, %v1954
    %v1956 = vpop.f32.mrb[0].mxu0
    %v1957 = vpop.f32.mrb[0].mxu0
    %v1958 = vpop.f32.mrb[0].mxu0
    %1959 = vdwg.mxu0
    %1960 = vmatprep.subr.bf16.mxu0 0
    %1961 = vmatpush1.bf16.msra.mxu0 %v1558
    %1962 = vmatprep.subr.bf16.mxu0 0
    %1963 = vmatpush1.bf16.msra.mxu0 %v1559
    %1964 = vmatprep.subr.bf16.mxu0 0
    %1965 = vmatpush1.bf16.msra.mxu0 %v1560
    %1966 = vmatprep.subr.bf16.mxu0 0
    %1967 = vmatpush1.bf16.msra.mxu0 %v1561
    %1968 = vmatprep.subr.bf16.mxu0 0
    %1969 = vmatpush1.bf16.msra.mxu0 %v1562
    %1970 = vmatprep.subr.bf16.mxu0 0
    %1971 = vmatpush1.bf16.msra.mxu0 %v1563
    %1972 = vmatprep.subr.bf16.mxu0 0
    %1973 = vmatpush1.bf16.msra.mxu0 %v1564
    %1974 = vmatprep.subr.bf16.mxu0 0
    %1975 = vmatpush1.bf16.msra.mxu0 %v1565
    %1976 = vmatprep.subr.bf16.mxu0 0
    %1977 = vmatpush1.bf16.msra.mxu0 0
    %1978 = vmatprep.subr.bf16.mxu0 0
    %1979 = vmatpush1.bf16.msra.mxu0 0
    %1980 = vmatprep.subr.bf16.mxu0 0
    %1981 = vmatpush1.bf16.msra.mxu0 0
    %1982 = vmatprep.subr.bf16.mxu0 0
    %1983 = vmatpush1.bf16.msra.mxu0 0
    %1984 = vmatprep.subr.bf16.mxu0 0
    %1985 = vmatpush1.bf16.msra.mxu0 0
    %1986 = vmatprep.subr.bf16.mxu0 0
    %1987 = vmatpush1.bf16.msra.mxu0 0
    %1988 = vmatprep.subr.bf16.mxu0 0
    %1989 = vmatpush1.bf16.msra.mxu0 0
    %1990 = vmatprep.subr.bf16.mxu0 0
    %1991 = vmatpush1.bf16.msra.mxu0 0
    %1992 = vmatprep.mubr.bf16.mxu0 0
    %1993 = vmatmul.mubr.bf16.gmra.mrb[0].mxu0 %v1908
    %v1994 = vpop.f32.mrb[0].mxu0
    %v1995 = vadd.f32 %v1947, %v1994
    %v1996 = vpop.f32.mrb[0].mxu0
    %v1997 = vpop.f32.mrb[0].mxu0
    %v1998 = vadd.f32 %v1950, %v1997
    %v1999 = vpop.f32.mrb[0].mxu0
    %2000 = vmatprep.mubr.bf16.mxu0 0
    %2001 = vmatmul.mubr.bf16.gmra.mrb[0].mxu0 %v1909
    %v2002 = vpop.f32.mrb[0].mxu0
    %v2003 = vadd.f32 %v1955, %v2002
    %v2004 = vpop.f32.mrb[0].mxu0
    %v2005 = vpop.f32.mrb[0].mxu0
    %v2006 = vpop.f32.mrb[0].mxu0
    %2007 = vdwg.mxu0
    %v2008 = vadd.f32 %v1902, %v1995
    %v2009 = vadd.f32 %v1903, %v1998
    %v2010 = vadd.f32 %v1904, %v2003
    %v2011 = vadd.f32 %v1905, %v1995
    %v2012 = vadd.f32 %v1906, %v1998
    %v2013 = vadd.f32 %v1907, %v2003
    %v2014 = vtanh.pop %v2008
    %v2015 = vtanh.pop %v2009
    %v2016 = vtanh.pop %v2010
    %v2017 = vtanh.pop %v2011
    %v2018 = vtanh.pop %v2012
    %v2019 = vtanh.pop %v2013
    %s2020 = scalar_lea.vmem [#allocation11], 368
    %2021 = vst [vmem:[%s2020] sm:$0xff] %v2014
    %s2022 = scalar_lea.vmem [#allocation11], 376
    %2023 = vst [vmem:[%s2022] sm:$0xff] %v2017
    %s2024 = scalar_lea.vmem [#allocation11], 416
    %2025 = vst [vmem:[%s2024] sm:$0xff] %v2015
    %s2026 = scalar_lea.vmem [#allocation11], 424
    %2027 = vst [vmem:[%s2026] sm:$0xff] %v2018
    %s2028 = scalar_lea.vmem [#allocation11], 464
    %2029 = vst [vmem:[%s2028] sm:$0xff] %v2016
    %s2030 = scalar_lea.vmem [#allocation11], 472
    %2031 = vst [vmem:[%s2030] sm:$0xff] %v2019
    %v2032 = vld [vmem:[#allocation2 + $0x68] sm:$0xff]
    %v2033 = vld [vmem:[#allocation2 + $0x70] sm:$0xff]
    %v2034 = vld [vmem:[#allocation2 + $0xe8] sm:$0xff]
    %v2035 = vld [vmem:[#allocation2 + $0xf0] sm:$0xff]
    %v2036 = vpack.c.bf16 %v2015, %v2014
    %v2037 = vpack.c.bf16 %v2016, %v2015
    %2038 = vmatprep.subr.bf16.mxu0 0
    %2039 = vmatpush1.bf16.msra.mxu0 %v1469
    %2040 = vmatprep.subr.bf16.mxu0 0
    %2041 = vmatpush1.bf16.msra.mxu0 %v1470
    %2042 = vmatprep.subr.bf16.mxu0 0
    %2043 = vmatpush1.bf16.msra.mxu0 %v1471
    %2044 = vmatprep.subr.bf16.mxu0 0
    %2045 = vmatpush1.bf16.msra.mxu0 %v1472
    %2046 = vmatprep.subr.bf16.mxu0 0
    %2047 = vmatpush1.bf16.msra.mxu0 %v1473
    %2048 = vmatprep.subr.bf16.mxu0 0
    %2049 = vmatpush1.bf16.msra.mxu0 %v1474
    %2050 = vmatprep.subr.bf16.mxu0 0
    %2051 = vmatpush1.bf16.msra.mxu0 %v1475
    %2052 = vmatprep.subr.bf16.mxu0 0
    %2053 = vmatpush1.bf16.msra.mxu0 %v1476
    %2054 = vmatprep.subr.bf16.mxu0 0
    %2055 = vmatpush1.bf16.msra.mxu0 0
    %2056 = vmatprep.subr.bf16.mxu0 0
    %2057 = vmatpush1.bf16.msra.mxu0 0
    %2058 = vmatprep.subr.bf16.mxu0 0
    %2059 = vmatpush1.bf16.msra.mxu0 0
    %2060 = vmatprep.subr.bf16.mxu0 0
    %2061 = vmatpush1.bf16.msra.mxu0 0
    %2062 = vmatprep.subr.bf16.mxu0 0
    %2063 = vmatpush1.bf16.msra.mxu0 0
    %2064 = vmatprep.subr.bf16.mxu0 0
    %2065 = vmatpush1.bf16.msra.mxu0 0
    %2066 = vmatprep.subr.bf16.mxu0 0
    %2067 = vmatpush1.bf16.msra.mxu0 0
    %2068 = vmatprep.subr.bf16.mxu0 0
    %2069 = vmatpush1.bf16.msra.mxu0 0
    %2070 = vmatprep.mubr.bf16.mxu0 0
    %2071 = vmatmul.mubr.bf16.gmra.mrb[0].mxu0 %v2037
    %v2072 = vpop.f32.mrb[0].mxu0
    %v2073 = vadd.f32 0.0, %v2072
    %v2074 = vpop.f32.mrb[0].mxu0
    %v2075 = vpop.f32.mrb[0].mxu0
    %v2076 = vadd.f32 0.0, %v2075
    %v2077 = vpop.f32.mrb[0].mxu0
    %2078 = vdwg.mxu0
    %2079 = vmatprep.subr.bf16.mxu0 0
    %2080 = vmatpush1.bf16.msra.mxu0 %v1558
    %2081 = vmatprep.subr.bf16.mxu0 0
    %2082 = vmatpush1.bf16.msra.mxu0 %v1559
    %2083 = vmatprep.subr.bf16.mxu0 0
    %2084 = vmatpush1.bf16.msra.mxu0 %v1560
    %2085 = vmatprep.subr.bf16.mxu0 0
    %2086 = vmatpush1.bf16.msra.mxu0 %v1561
    %2087 = vmatprep.subr.bf16.mxu0 0
    %2088 = vmatpush1.bf16.msra.mxu0 %v1562
    %2089 = vmatprep.subr.bf16.mxu0 0
    %2090 = vmatpush1.bf16.msra.mxu0 %v1563
    %2091 = vmatprep.subr.bf16.mxu0 0
    %2092 = vmatpush1.bf16.msra.mxu0 %v1564
    %2093 = vmatprep.subr.bf16.mxu0 0
    %2094 = vmatpush1.bf16.msra.mxu0 %v1565
    %2095 = vmatprep.subr.bf16.mxu0 0
    %2096 = vmatpush1.bf16.msra.mxu0 0
    %2097 = vmatprep.subr.bf16.mxu0 0
    %2098 = vmatpush1.bf16.msra.mxu0 0
    %2099 = vmatprep.subr.bf16.mxu0 0
    %2100 = vmatpush1.bf16.msra.mxu0 0
    %2101 = vmatprep.subr.bf16.mxu0 0
    %2102 = vmatpush1.bf16.msra.mxu0 0
    %2103 = vmatprep.subr.bf16.mxu0 0
    %2104 = vmatpush1.bf16.msra.mxu0 0
    %2105 = vmatprep.subr.bf16.mxu0 0
    %2106 = vmatpush1.bf16.msra.mxu0 0
    %2107 = vmatprep.subr.bf16.mxu0 0
    %2108 = vmatpush1.bf16.msra.mxu0 0
    %2109 = vmatprep.subr.bf16.mxu0 0
    %2110 = vmatpush1.bf16.msra.mxu0 0
    %2111 = vmatprep.mubr.bf16.mxu0 0
    %2112 = vmatmul.mubr.bf16.gmra.mrb[0].mxu0 %v2036
    %v2113 = vpop.f32.mrb[0].mxu0
    %v2114 = vadd.f32 %v2073, %v2113
    %v2115 = vpop.f32.mrb[0].mxu0
    %v2116 = vpop.f32.mrb[0].mxu0
    %v2117 = vadd.f32 %v2076, %v2116
    %v2118 = vpop.f32.mrb[0].mxu0
    %2119 = vdwg.mxu0
    %v2120 = vadd.f32 %v2032, %v2114
    %v2121 = vadd.f32 %v2033, %v2117
    %v2122 = vadd.f32 %v2034, %v2114
    %v2123 = vadd.f32 %v2035, %v2117
    %v2124 = vtanh.pop %v2120
    %v2125 = vtanh.pop %v2121
    %v2126 = vtanh.pop %v2122
    %v2127 = vtanh.pop %v2123
    %s2128 = scalar_lea.vmem [#allocation11], 432
    %2129 = vst [vmem:[%s2128] sm:$0xff] %v2124
    %s2130 = scalar_lea.vmem [#allocation11], 440
    %2131 = vst [vmem:[%s2130] sm:$0xff] %v2126
    %s2132 = scalar_lea.vmem [#allocation11], 480
    %2133 = vst [vmem:[%s2132] sm:$0xff] %v2125
    %s2134 = scalar_lea.vmem [#allocation11], 488
    %2135 = vst [vmem:[%s2134] sm:$0xff] %v2127
    %v2136 = vld [vmem:[#allocation2 + $0x78] sm:$0xff]
    %v2137 = vld [vmem:[#allocation2 + $0xf8] sm:$0xff]
    %v2138 = vpack.c.bf16 %v2124, %v2124
    %v2139 = vpack.c.bf16 %v2125, %v2125
    %2140 = vmatprep.subr.bf16.mxu0 0
    %2141 = vmatpush1.bf16.msra.mxu0 %v1469
    %2142 = vmatprep.subr.bf16.mxu0 0
    %2143 = vmatpush1.bf16.msra.mxu0 %v1470
    %2144 = vmatprep.subr.bf16.mxu0 0
    %2145 = vmatpush1.bf16.msra.mxu0 %v1471
    %2146 = vmatprep.subr.bf16.mxu0 0
    %2147 = vmatpush1.bf16.msra.mxu0 %v1472
    %2148 = vmatprep.subr.bf16.mxu0 0
    %2149 = vmatpush1.bf16.msra.mxu0 %v1473
    %2150 = vmatprep.subr.bf16.mxu0 0
    %2151 = vmatpush1.bf16.msra.mxu0 %v1474
    %2152 = vmatprep.subr.bf16.mxu0 0
    %2153 = vmatpush1.bf16.msra.mxu0 %v1475
    %2154 = vmatprep.subr.bf16.mxu0 0
    %2155 = vmatpush1.bf16.msra.mxu0 %v1476
    %2156 = vmatprep.subr.bf16.mxu0 0
    %2157 = vmatpush1.bf16.msra.mxu0 0
    %2158 = vmatprep.subr.bf16.mxu0 0
    %2159 = vmatpush1.bf16.msra.mxu0 0
    %2160 = vmatprep.subr.bf16.mxu0 0
    %2161 = vmatpush1.bf16.msra.mxu0 0
    %2162 = vmatprep.subr.bf16.mxu0 0
    %2163 = vmatpush1.bf16.msra.mxu0 0
    %2164 = vmatprep.subr.bf16.mxu0 0
    %2165 = vmatpush1.bf16.msra.mxu0 0
    %2166 = vmatprep.subr.bf16.mxu0 0
    %2167 = vmatpush1.bf16.msra.mxu0 0
    %2168 = vmatprep.subr.bf16.mxu0 0
    %2169 = vmatpush1.bf16.msra.mxu0 0
    %2170 = vmatprep.subr.bf16.mxu0 0
    %2171 = vmatpush1.bf16.msra.mxu0 0
    %2172 = vmatprep.mubr.bf16.mxu0 0
    %2173 = vmatmul.mubr.bf16.gmra.mrb[0].mxu0 %v2139
    %v2174 = vpop.f32.mrb[0].mxu0
    %v2175 = vadd.f32 0.0, %v2174
    %v2176 = vpop.f32.mrb[0].mxu0
    %v2177 = vpop.f32.mrb[0].mxu0
    %v2178 = vpop.f32.mrb[0].mxu0
    %2179 = vdwg.mxu0
    %2180 = vmatprep.subr.bf16.mxu0 0
    %2181 = vmatpush1.bf16.msra.mxu0 %v1558
    %2182 = vmatprep.subr.bf16.mxu0 0
    %2183 = vmatpush1.bf16.msra.mxu0 %v1559
    %2184 = vmatprep.subr.bf16.mxu0 0
    %2185 = vmatpush1.bf16.msra.mxu0 %v1560
    %2186 = vmatprep.subr.bf16.mxu0 0
    %2187 = vmatpush1.bf16.msra.mxu0 %v1561
    %2188 = vmatprep.subr.bf16.mxu0 0
    %2189 = vmatpush1.bf16.msra.mxu0 %v1562
    %2190 = vmatprep.subr.bf16.mxu0 0
    %2191 = vmatpush1.bf16.msra.mxu0 %v1563
    %2192 = vmatprep.subr.bf16.mxu0 0
    %2193 = vmatpush1.bf16.msra.mxu0 %v1564
    %2194 = vmatprep.subr.bf16.mxu0 0
    %2195 = vmatpush1.bf16.msra.mxu0 %v1565
    %2196 = vmatprep.subr.bf16.mxu0 0
    %2197 = vmatpush1.bf16.msra.mxu0 0
    %2198 = vmatprep.subr.bf16.mxu0 0
    %2199 = vmatpush1.bf16.msra.mxu0 0
    %2200 = vmatprep.subr.bf16.mxu0 0
    %2201 = vmatpush1.bf16.msra.mxu0 0
    %2202 = vmatprep.subr.bf16.mxu0 0
    %2203 = vmatpush1.bf16.msra.mxu0 0
    %2204 = vmatprep.subr.bf16.mxu0 0
    %2205 = vmatpush1.bf16.msra.mxu0 0
    %2206 = vmatprep.subr.bf16.mxu0 0
    %2207 = vmatpush1.bf16.msra.mxu0 0
    %2208 = vmatprep.subr.bf16.mxu0 0
    %2209 = vmatpush1.bf16.msra.mxu0 0
    %2210 = vmatprep.subr.bf16.mxu0 0
    %2211 = vmatpush1.bf16.msra.mxu0 0
    %2212 = vmatprep.mubr.bf16.mxu0 0
    %2213 = vmatmul.mubr.bf16.gmra.mrb[0].mxu0 %v2138
    %v2214 = vpop.f32.mrb[0].mxu0
    %v2215 = vadd.f32 %v2175, %v2214
    %v2216 = vpop.f32.mrb[0].mxu0
    %v2217 = vpop.f32.mrb[0].mxu0
    %v2218 = vpop.f32.mrb[0].mxu0
    %2219 = vdwg.mxu0
    %v2220 = vadd.f32 %v2136, %v2215
    %v2221 = vadd.f32 %v2137, %v2215
    %v2222 = vtanh.pop %v2220
    %v2223 = vtanh.pop %v2221
    %s2224 = scalar_lea.vmem [#allocation11], 496
    %2225 = vst [vmem:[%s2224] sm:$0xff] %v2222
    %s2226 = scalar_lea.vmem [#allocation11], 504
    %2227 = vst [vmem:[%s2226] sm:$0xff] %v2223
    // Predicated region
    $region38: #{tpu_custom_call.1} parent=1 // pred_check
      _
    $region39: #{tpu_custom_call.1} parent=1 // pred_check_branch
      %2229 = sbr.rel (0) target = $region41
    $region40: #{tpu_custom_call.1} parent=1 // pred_region
      %s2231 = ssub.s32 8192, 8192
      %2232 = vsyncadd [#allocation5], %s2231
      %s2233 = sshll.u32 [#allocation11], 4
      %s2234 = int_to_ptr.vmem [resolvable:$true] %s2233
      %2239 = dma.vmem_to_hbm [thread:$0]  %s2234, 8192, %s5, [#allocation5], 128, 128, 8
    $region41: #{tpu_custom_call.1} parent=1 // pred_fallthru
      _
    // Predicated region
    $region42: #{tpu_custom_call.1} parent=1 // pred_check
      _
    $region43: #{tpu_custom_call.1} parent=1 // pred_check_branch
      %2241 = sbr.rel (0) target = $region45
    $region44: #{tpu_custom_call.1} parent=1 // pred_region
      %2242 = dma.done [#allocation5], 8192
    $region45: #{tpu_custom_call.1} parent=1 // pred_fallthru
      _
    %2243 = vsyncpa [#allocation4], 1
    %2244 = vsyncpa [#allocation7], 1
    %2245 = vsyncpa [#allocation10], 1
    %2246 = vsyncpa [#allocation5], 1

</llo_original>
